<compile_context>
chip_gen: v6e
topology: v6e:2x2x1
jax: 0.10.0
libtpu: 0.0.40
codegen_flags: <defaults>
</compile_context>

<pallas_src>
import functools

import jax
import jax.numpy as jnp
from jax.experimental import pallas as pl
from jax.experimental.pallas import tpu as pltpu


def _round_up(x, m):
    return ((x + m - 1) // m) * m


# --------------------------------------------------------------------------
# Fused Pallas GEMM:  out = act((A @ B) * scale + shift)
# --------------------------------------------------------------------------
def _fused_gemm_kernel(a_ref, b_ref, s_ref, t_ref, o_ref, acc_ref, *, act):
    @pl.when(pl.program_id(1) == 0)
    def _():
        acc_ref[...] = jnp.zeros_like(acc_ref)

    acc_ref[...] += jnp.dot(a_ref[...], b_ref[...],
                            preferred_element_type=jnp.float32)

    @pl.when(pl.program_id(1) == pl.num_programs(1) - 1)
    def _():
        y = acc_ref[...] * s_ref[...] + t_ref[...]
        if act == "leaky_relu":
            y = jnp.where(y > 0, y, 0.2 * y)
        o_ref[...] = y


def fused_gemm(a, b, scale, shift, *, act="none"):
    """a: (M, K) f32, b: (K, N) f32, scale/shift: (N,) per output channel.

    Returns act((a @ b) * scale + shift) as (M, N) f32.
    """
    m, k = a.shape
    _, n = b.shape

    n_pad = _round_up(n, 128)                 # lane-dense stores, full MXU cols
    tile_m = min(256, _round_up(m, 8))        # adapt tile to actual M
    mp = _round_up(m, tile_m)
    k_pad = _round_up(k, 128)
    tile_k = min(k_pad, 1024)                 # K-tiling bounds VMEM per step
    kp = _round_up(k_pad, tile_k)

    a_p = jnp.pad(a, ((0, mp - m), (0, kp - k))).astype(jnp.bfloat16)
    b_p = jnp.pad(b, ((0, kp - k), (0, n_pad - n))).astype(jnp.bfloat16)
    s_p = jnp.pad(scale.astype(jnp.float32), (0, n_pad - n)).reshape(1, n_pad)
    t_p = jnp.pad(shift.astype(jnp.float32), (0, n_pad - n)).reshape(1, n_pad)

    out = pl.pallas_call(
        functools.partial(_fused_gemm_kernel, act=act),
        out_shape=jax.ShapeDtypeStruct((mp, n_pad), jnp.float32),
        grid=(mp // tile_m, kp // tile_k),
        in_specs=[
            pl.BlockSpec((tile_m, tile_k), lambda i, kk: (i, kk)),
            pl.BlockSpec((tile_k, n_pad), lambda i, kk: (kk, 0)),
            pl.BlockSpec((1, n_pad), lambda i, kk: (0, 0)),
            pl.BlockSpec((1, n_pad), lambda i, kk: (0, 0)),
        ],
        out_specs=pl.BlockSpec((tile_m, n_pad), lambda i, kk: (i, 0)),
        scratch_shapes=[pltpu.VMEM((tile_m, n_pad), jnp.float32)],
        compiler_params=pltpu.CompilerParams(
            dimension_semantics=("parallel", "arbitrary")),
    )(a_p, b_p, s_p, t_p)

    if mp != m or n_pad != n:
        out = out[:m, :n]
    return out


# --------------------------------------------------------------------------
# Conv2d(k=4, p=1, stride in {1,2}) + (bias | BN) + LeakyReLU, fused
# --------------------------------------------------------------------------
def conv4x4(x, w, scale, shift, *, stride, act):
    """x: (N, H, W, Cin) f32, w: (Cout, Cin, 4, 4) f32 (PyTorch layout)."""
    n, h, wd, cin = x.shape
    cout = w.shape[0]
    ho = (h + 2 - 4) // stride + 1
    wo = (wd + 2 - 4) // stride + 1
    xp = jnp.pad(x, ((0, 0), (1, 1), (1, 1), (0, 0)))
    # im2col (XLA data-movement glue; the fused GEMM below is the Pallas hot path)
    cols = [xp[:, di:di + stride * (ho - 1) + 1:stride,
               dj:dj + stride * (wo - 1) + 1:stride, :]
            for di in range(4) for dj in range(4)]
    patches = jnp.stack(cols, axis=3)                      # (n, ho, wo, 16, cin)
    a = patches.reshape(n * ho * wo, 16 * cin)
    b = jnp.transpose(w, (2, 3, 1, 0)).reshape(16 * cin, cout)
    y = fused_gemm(a, b, scale, shift, act=act)
    return y.reshape(n, ho, wo, cout)


# --------------------------------------------------------------------------
# Parameter construction (mirrors PatchDiscriminator.__init__ / get_layers)
# --------------------------------------------------------------------------
def _make_layer(key, ni, nf, *, k=4, s=2, norm=True, act=True):
    keys = jax.random.split(key, 6)
    p = dict(stride=s, act="leaky_relu" if act else "none", norm=norm)
    p["w"] = 0.02 * jax.random.normal(keys[0], (nf, ni, k, k), jnp.float32)
    if norm:
        p["gamma"] = 1.0 + 0.1 * jax.random.normal(keys[1], (nf,), jnp.float32)
        p["beta"] = 0.1 * jax.random.normal(keys[2], (nf,), jnp.float32)
        p["mean"] = 0.1 * jax.random.normal(keys[3], (nf,), jnp.float32)
        p["var"] = jnp.abs(1.0 + 0.1 * jax.random.normal(keys[4], (nf,), jnp.float32))
        p["eps"] = 1e-5
    else:
        p["bias"] = 0.02 * jax.random.normal(keys[5], (nf,), jnp.float32)
    return p


def build_patch_discriminator_params(key, input_c, num_filters=64, n_down=3):
    keys = jax.random.split(key, n_down + 2)
    layers = [_make_layer(keys[0], input_c, num_filters, norm=False)]          # no norm
    for i in range(n_down):
        layers.append(_make_layer(keys[i + 1],
                                  num_filters * 2 ** i, num_filters * 2 ** (i + 1),
                                  s=1 if i == n_down - 1 else 2))
    layers.append(_make_layer(keys[n_down + 1], num_filters * 2 ** n_down, 1,
                              s=1, norm=False, act=False))                     # logits
    return layers


# --------------------------------------------------------------------------
# Forward pass (mirrors nn.Sequential of PatchDiscriminator.forward)
# --------------------------------------------------------------------------
def patch_discriminator_forward(params, x_nchw):
    """x_nchw: (N, C, H, W) like the PyTorch module; returns (N, 1, Ho, Wo)."""
    x = jnp.transpose(x_nchw, (0, 2, 3, 1)).astype(jnp.float32)     # NCHW -> NHWC
    for p in params:
        cout = p["w"].shape[0]
        if p["norm"]:
            inv_std = 1.0 / jnp.sqrt(p["var"] + p["eps"])
            scale = p["gamma"] * inv_std
            shift = p["beta"] - p["mean"] * scale
        else:
            scale = jnp.ones((cout,), jnp.float32)
            shift = p["bias"]
        x = conv4x4(x, p["w"], scale, shift, stride=p["stride"], act=p["act"])
    return jnp.transpose(x, (0, 3, 1, 2))                            # NHWC -> NCHW


# --------------------------------------------------------------------------
if __name__ == "__main__":
    key = jax.random.PRNGKey(0)
    k_param, k_input = jax.random.split(key)

    # Small config: input_c=3, 16 base filters, n_down=3, batch 2, 32x32 input.
    INPUT_C, NUM_FILTERS, N_DOWN = 3, 16, 3
    B, H, W = 2, 32, 32

    params = build_patch_discriminator_params(k_param, INPUT_C,
                                              num_filters=NUM_FILTERS,
                                              n_down=N_DOWN)
    x = jax.random.normal(k_input, (B, INPUT_C, H, W), jnp.float32)

    fwd = jax.jit(functools.partial(patch_discriminator_forward, params))
    y = jax.block_until_ready(fwd(x))

    # spatial: 32 -> 16 -> 8 -> 4 -> 3 (s=1) -> 2 (s=1); single-channel patch logits
    assert y.shape == (B, 1, 2, 2), y.shape
    assert bool(jnp.all(jnp.isfinite(y)))
    print("KERNEL_OK")
</pallas_src>

<mosaic_0001>
module attributes {stable_mosaic.version = 11 : i64} {
  func.func @_fused_gemm_kernel(%arg0: i32, %arg1: i32, %arg2: memref<256x128xbf16, #tpu.memory_space<vmem>>, %arg3: memref<128x128xbf16, #tpu.memory_space<vmem>>, %arg4: memref<1x128xf32, #tpu.memory_space<vmem>>, %arg5: memref<1x128xf32, #tpu.memory_space<vmem>>, %arg6: memref<256x128xf32, #tpu.memory_space<vmem>>, %arg7: memref<256x128xf32, #tpu.memory_space<vmem>>) attributes {dimension_semantics = [#tpu.dimension_semantics<parallel>, #tpu.dimension_semantics<arbitrary>], iteration_bounds = array<i64: 2, 1>, scalar_prefetch = 0 : i64, scratch_operands = 1 : i64, tpu.core_type = #tpu.core_type<tc>, window_params = [{transform_indices = @transform_0, window_bounds = array<i64: 256, 128>}, {transform_indices = @transform_1, window_bounds = array<i64: 128, 128>}, {pipeline_mode = #tpu.pipeline_mode<synchronous>, transform_indices = @transform_2, window_bounds = array<i64: 1, 128>}, {pipeline_mode = #tpu.pipeline_mode<synchronous>, transform_indices = @transform_3, window_bounds = array<i64: 1, 128>}, {transform_indices = @transform_4, window_bounds = array<i64: 256, 128>}]} {
    %c0_i32 = arith.constant 0 : i32
    %0 = arith.cmpi eq, %arg1, %c0_i32 : i32
    %1 = arith.extui %0 : i1 to i32
    %c0_i32_0 = arith.constant 0 : i32
    %2 = arith.cmpi ne, %1, %c0_i32_0 : i32
    scf.if %2 {
      %cst_10 = arith.constant 0.000000e+00 : f32
      %12 = vector.broadcast %cst_10 : f32 to vector<256x128xf32>
      %c0_11 = arith.constant 0 : index
      %c0_12 = arith.constant 0 : index
      %13 = vector.load %arg7[%c0_11, %c0_12] : memref<256x128xf32, #tpu.memory_space<vmem>>, vector<256x128xf32>
      tpu.vector_store %arg7[%c0_11, %c0_12], %12 {strides = array<i32>} : memref<256x128xf32, #tpu.memory_space<vmem>>, vector<256x128xf32>,
    } else {
    }
    %c0 = arith.constant 0 : index
    %c0_1 = arith.constant 0 : index
    %3 = vector.load %arg7[%c0, %c0_1] : memref<256x128xf32, #tpu.memory_space<vmem>>, vector<256x128xf32>
    %c0_2 = arith.constant 0 : index
    %c0_3 = arith.constant 0 : index
    %4 = vector.load %arg2[%c0_2, %c0_3] : memref<256x128xbf16, #tpu.memory_space<vmem>>, vector<256x128xbf16>
    %c0_4 = arith.constant 0 : index
    %c0_5 = arith.constant 0 : index
    %5 = vector.load %arg3[%c0_4, %c0_5] : memref<128x128xbf16, #tpu.memory_space<vmem>>, vector<128x128xbf16>
    %cst = arith.constant dense<0.000000e+00> : vector<256x128xf32>
    %6 = tpu.matmul %4, %5, %cst {dimension_numbers = #tpu.dot_dimension_numbers<[1], [0], [0], [1], [0, 0, 1, 1], [], []>} : vector<256x128xbf16>, vector<128x128xbf16>, vector<256x128xf32> -> vector<256x128xf32>
    %7 = arith.addf %3, %6 : vector<256x128xf32>
    %c0_6 = arith.constant 0 : index
    %c0_7 = arith.constant 0 : index
    %8 = vector.load %arg7[%c0_6, %c0_7] : memref<256x128xf32, #tpu.memory_space<vmem>>, vector<256x128xf32>
    tpu.vector_store %arg7[%c0_6, %c0_7], %7 {strides = array<i32>} : memref<256x128xf32, #tpu.memory_space<vmem>>, vector<256x128xf32>,
    %c0_i32_8 = arith.constant 0 : i32
    %9 = arith.cmpi eq, %arg1, %c0_i32_8 : i32
    %10 = arith.extui %9 : i1 to i32
    %c0_i32_9 = arith.constant 0 : i32
    %11 = arith.cmpi ne, %10, %c0_i32_9 : i32
    scf.if %11 {
      %c0_10 = arith.constant 0 : index
      %c0_11 = arith.constant 0 : index
      %12 = vector.load %arg7[%c0_10, %c0_11] : memref<256x128xf32, #tpu.memory_space<vmem>>, vector<256x128xf32>
      %c0_12 = arith.constant 0 : index
      %c0_13 = arith.constant 0 : index
      %13 = vector.load %arg4[%c0_12, %c0_13] : memref<1x128xf32, #tpu.memory_space<vmem>>, vector<1x128xf32>
      %14 = vector.broadcast %13 : vector<1x128xf32> to vector<256x128xf32>
      %15 = arith.mulf %12, %14 : vector<256x128xf32>
      %c0_14 = arith.constant 0 : index
      %c0_15 = arith.constant 0 : index
      %16 = vector.load %arg5[%c0_14, %c0_15] : memref<1x128xf32, #tpu.memory_space<vmem>>, vector<1x128xf32>
      %17 = vector.broadcast %16 : vector<1x128xf32> to vector<256x128xf32>
      %18 = arith.addf %15, %17 : vector<256x128xf32>
      %cst_16 = arith.constant 0.000000e+00 : f32
      %19 = vector.broadcast %cst_16 : f32 to vector<256x128xf32>
      %20 = arith.cmpf ogt, %18, %19 : vector<256x128xf32>
      %cst_17 = arith.constant 2.000000e-01 : f32
      %21 = vector.broadcast %cst_17 : f32 to vector<256x128xf32>
      %22 = arith.mulf %21, %18 : vector<256x128xf32>
      %23 = arith.select %20, %18, %22 : vector<256x128xi1>, vector<256x128xf32>
      %c0_18 = arith.constant 0 : index
      %c0_19 = arith.constant 0 : index
      %24 = vector.load %arg6[%c0_18, %c0_19] : memref<256x128xf32, #tpu.memory_space<vmem>>, vector<256x128xf32>
      tpu.vector_store %arg6[%c0_18, %c0_19], %23 {strides = array<i32>} : memref<256x128xf32, #tpu.memory_space<vmem>>, vector<256x128xf32>,
    } else {
    }
    return
  }
  func.func @transform_0(%arg0: i32, %arg1: i32) -> (i32, i32) {
    %c0_i32 = arith.constant 0 : i32
    return %arg0, %arg1 : i32, i32
  }
  func.func @transform_1(%arg0: i32, %arg1: i32) -> (i32, i32) {
    %c0_i32 = arith.constant 0 : i32
    %c0_i32_0 = arith.constant 0 : i32
    return %arg1, %c0_i32 : i32, i32
  }
  func.func @transform_2(%arg0: i32, %arg1: i32) -> (i32, i32) {
    %c0_i32 = arith.constant 0 : i32
    %c0_i32_0 = arith.constant 0 : i32
    %c0_i32_1 = arith.constant 0 : i32
    return %c0_i32, %c0_i32_0 : i32, i32
  }
  func.func @transform_3(%arg0: i32, %arg1: i32) -> (i32, i32) {
    %c0_i32 = arith.constant 0 : i32
    %c0_i32_0 = arith.constant 0 : i32
    %c0_i32_1 = arith.constant 0 : i32
    return %c0_i32, %c0_i32_0 : i32, i32
  }
  func.func @transform_4(%arg0: i32, %arg1: i32) -> (i32, i32) {
    %c0_i32 = arith.constant 0 : i32
    %c0_i32_0 = arith.constant 0 : i32
    return %arg0, %c0_i32 : i32, i32
  }
}

module attributes {stable_mosaic.version = 11 : i64} {
  func.func @_fused_gemm_kernel(%arg0: i32, %arg1: i32, %arg2: memref<128x256xbf16, #tpu.memory_space<vmem>>, %arg3: memref<256x128xbf16, #tpu.memory_space<vmem>>, %arg4: memref<1x128xf32, #tpu.memory_space<vmem>>, %arg5: memref<1x128xf32, #tpu.memory_space<vmem>>, %arg6: memref<128x128xf32, #tpu.memory_space<vmem>>, %arg7: memref<128x128xf32, #tpu.memory_space<vmem>>) attributes {dimension_semantics = [#tpu.dimension_semantics<parallel>, #tpu.dimension_semantics<arbitrary>], iteration_bounds = array<i64: 1, 1>, scalar_prefetch = 0 : i64, scratch_operands = 1 : i64, tpu.core_type = #tpu.core_type<tc>, window_params = [{transform_indices = @transform_0, window_bounds = array<i64: 128, 256>}, {transform_indices = @transform_1, window_bounds = array<i64: 256, 128>}, {pipeline_mode = #tpu.pipeline_mode<synchronous>, transform_indices = @transform_2, window_bounds = array<i64: 1, 128>}, {pipeline_mode = #tpu.pipeline_mode<synchronous>, transform_indices = @transform_3, window_bounds = array<i64: 1, 128>}, {transform_indices = @transform_4, window_bounds = array<i64: 128, 128>}]} {
    %c0_i32 = arith.constant 0 : i32
    %0 = arith.cmpi eq, %arg1, %c0_i32 : i32
    %1 = arith.extui %0 : i1 to i32
    %c0_i32_0 = arith.constant 0 : i32
    %2 = arith.cmpi ne, %1, %c0_i32_0 : i32
    scf.if %2 {
      %cst_10 = arith.constant 0.000000e+00 : f32
      %12 = vector.broadcast %cst_10 : f32 to vector<128x128xf32>
      %c0_11 = arith.constant 0 : index
      %c0_12 = arith.constant 0 : index
      %13 = vector.load %arg7[%c0_11, %c0_12] : memref<128x128xf32, #tpu.memory_space<vmem>>, vector<128x128xf32>
      tpu.vector_store %arg7[%c0_11, %c0_12], %12 {strides = array<i32>} : memref<128x128xf32, #tpu.memory_space<vmem>>, vector<128x128xf32>,
    } else {
    }
    %c0 = arith.constant 0 : index
    %c0_1 = arith.constant 0 : index
    %3 = vector.load %arg7[%c0, %c0_1] : memref<128x128xf32, #tpu.memory_space<vmem>>, vector<128x128xf32>
    %c0_2 = arith.constant 0 : index
    %c0_3 = arith.constant 0 : index
    %4 = vector.load %arg2[%c0_2, %c0_3] : memref<128x256xbf16, #tpu.memory_space<vmem>>, vector<128x256xbf16>
    %c0_4 = arith.constant 0 : index
    %c0_5 = arith.constant 0 : index
    %5 = vector.load %arg3[%c0_4, %c0_5] : memref<256x128xbf16, #tpu.memory_space<vmem>>, vector<256x128xbf16>
    %cst = arith.constant dense<0.000000e+00> : vector<128x128xf32>
    %6 = tpu.matmul %4, %5, %cst {dimension_numbers = #tpu.dot_dimension_numbers<[1], [0], [0], [1], [0, 0, 1, 1], [], []>} : vector<128x256xbf16>, vector<256x128xbf16>, vector<128x128xf32> -> vector<128x128xf32>
    %7 = arith.addf %3, %6 : vector<128x128xf32>
    %c0_6 = arith.constant 0 : index
    %c0_7 = arith.constant 0 : index
    %8 = vector.load %arg7[%c0_6, %c0_7] : memref<128x128xf32, #tpu.memory_space<vmem>>, vector<128x128xf32>
    tpu.vector_store %arg7[%c0_6, %c0_7], %7 {strides = array<i32>} : memref<128x128xf32, #tpu.memory_space<vmem>>, vector<128x128xf32>,
    %c0_i32_8 = arith.constant 0 : i32
    %9 = arith.cmpi eq, %arg1, %c0_i32_8 : i32
    %10 = arith.extui %9 : i1 to i32
    %c0_i32_9 = arith.constant 0 : i32
    %11 = arith.cmpi ne, %10, %c0_i32_9 : i32
    scf.if %11 {
      %c0_10 = arith.constant 0 : index
      %c0_11 = arith.constant 0 : index
      %12 = vector.load %arg7[%c0_10, %c0_11] : memref<128x128xf32, #tpu.memory_space<vmem>>, vector<128x128xf32>
      %c0_12 = arith.constant 0 : index
      %c0_13 = arith.constant 0 : index
      %13 = vector.load %arg4[%c0_12, %c0_13] : memref<1x128xf32, #tpu.memory_space<vmem>>, vector<1x128xf32>
      %14 = vector.broadcast %13 : vector<1x128xf32> to vector<128x128xf32>
      %15 = arith.mulf %12, %14 : vector<128x128xf32>
      %c0_14 = arith.constant 0 : index
      %c0_15 = arith.constant 0 : index
      %16 = vector.load %arg5[%c0_14, %c0_15] : memref<1x128xf32, #tpu.memory_space<vmem>>, vector<1x128xf32>
      %17 = vector.broadcast %16 : vector<1x128xf32> to vector<128x128xf32>
      %18 = arith.addf %15, %17 : vector<128x128xf32>
      %cst_16 = arith.constant 0.000000e+00 : f32
      %19 = vector.broadcast %cst_16 : f32 to vector<128x128xf32>
      %20 = arith.cmpf ogt, %18, %19 : vector<128x128xf32>
      %cst_17 = arith.constant 2.000000e-01 : f32
      %21 = vector.broadcast %cst_17 : f32 to vector<128x128xf32>
      %22 = arith.mulf %21, %18 : vector<128x128xf32>
      %23 = arith.select %20, %18, %22 : vector<128x128xi1>, vector<128x128xf32>
      %c0_18 = arith.constant 0 : index
      %c0_19 = arith.constant 0 : index
      %24 = vector.load %arg6[%c0_18, %c0_19] : memref<128x128xf32, #tpu.memory_space<vmem>>, vector<128x128xf32>
      tpu.vector_store %arg6[%c0_18, %c0_19], %23 {strides = array<i32>} : memref<128x128xf32, #tpu.memory_space<vmem>>, vector<128x128xf32>,
    } else {
    }
    return
  }
  func.func @transform_0(%arg0: i32, %arg1: i32) -> (i32, i32) {
    %c0_i32 = arith.constant 0 : i32
    return %arg0, %arg1 : i32, i32
  }
  func.func @transform_1(%arg0: i32, %arg1: i32) -> (i32, i32) {
    %c0_i32 = arith.constant 0 : i32
    %c0_i32_0 = arith.constant 0 : i32
    return %arg1, %c0_i32 : i32, i32
  }
  func.func @transform_2(%arg0: i32, %arg1: i32) -> (i32, i32) {
    %c0_i32 = arith.constant 0 : i32
    %c0_i32_0 = arith.constant 0 : i32
    %c0_i32_1 = arith.constant 0 : i32
    return %c0_i32, %c0_i32_0 : i32, i32
  }
  func.func @transform_3(%arg0: i32, %arg1: i32) -> (i32, i32) {
    %c0_i32 = arith.constant 0 : i32
    %c0_i32_0 = arith.constant 0 : i32
    %c0_i32_1 = arith.constant 0 : i32
    return %c0_i32, %c0_i32_0 : i32, i32
  }
  func.func @transform_4(%arg0: i32, %arg1: i32) -> (i32, i32) {
    %c0_i32 = arith.constant 0 : i32
    %c0_i32_0 = arith.constant 0 : i32
    return %arg0, %c0_i32 : i32, i32
  }
}

module attributes {stable_mosaic.version = 11 : i64} {
  func.func @_fused_gemm_kernel(%arg0: i32, %arg1: i32, %arg2: memref<32x512xbf16, #tpu.memory_space<vmem>>, %arg3: memref<512x128xbf16, #tpu.memory_space<vmem>>, %arg4: memref<1x128xf32, #tpu.memory_space<vmem>>, %arg5: memref<1x128xf32, #tpu.memory_space<vmem>>, %arg6: memref<32x128xf32, #tpu.memory_space<vmem>>, %arg7: memref<32x128xf32, #tpu.memory_space<vmem>>) attributes {dimension_semantics = [#tpu.dimension_semantics<parallel>, #tpu.dimension_semantics<arbitrary>], iteration_bounds = array<i64: 1, 1>, scalar_prefetch = 0 : i64, scratch_operands = 1 : i64, tpu.core_type = #tpu.core_type<tc>, window_params = [{transform_indices = @transform_0, window_bounds = array<i64: 32, 512>}, {transform_indices = @transform_1, window_bounds = array<i64: 512, 128>}, {pipeline_mode = #tpu.pipeline_mode<synchronous>, transform_indices = @transform_2, window_bounds = array<i64: 1, 128>}, {pipeline_mode = #tpu.pipeline_mode<synchronous>, transform_indices = @transform_3, window_bounds = array<i64: 1, 128>}, {transform_indices = @transform_4, window_bounds = array<i64: 32, 128>}]} {
    %c0_i32 = arith.constant 0 : i32
    %0 = arith.cmpi eq, %arg1, %c0_i32 : i32
    %1 = arith.extui %0 : i1 to i32
    %c0_i32_0 = arith.constant 0 : i32
    %2 = arith.cmpi ne, %1, %c0_i32_0 : i32
    scf.if %2 {
      %cst_10 = arith.constant 0.000000e+00 : f32
      %12 = vector.broadcast %cst_10 : f32 to vector<32x128xf32>
      %c0_11 = arith.constant 0 : index
      %c0_12 = arith.constant 0 : index
      %13 = vector.load %arg7[%c0_11, %c0_12] : memref<32x128xf32, #tpu.memory_space<vmem>>, vector<32x128xf32>
      tpu.vector_store %arg7[%c0_11, %c0_12], %12 {strides = array<i32>} : memref<32x128xf32, #tpu.memory_space<vmem>>, vector<32x128xf32>,
    } else {
    }
    %c0 = arith.constant 0 : index
    %c0_1 = arith.constant 0 : index
    %3 = vector.load %arg7[%c0, %c0_1] : memref<32x128xf32, #tpu.memory_space<vmem>>, vector<32x128xf32>
    %c0_2 = arith.constant 0 : index
    %c0_3 = arith.constant 0 : index
    %4 = vector.load %arg2[%c0_2, %c0_3] : memref<32x512xbf16, #tpu.memory_space<vmem>>, vector<32x512xbf16>
    %c0_4 = arith.constant 0 : index
    %c0_5 = arith.constant 0 : index
    %5 = vector.load %arg3[%c0_4, %c0_5] : memref<512x128xbf16, #tpu.memory_space<vmem>>, vector<512x128xbf16>
    %cst = arith.constant dense<0.000000e+00> : vector<32x128xf32>
    %6 = tpu.matmul %4, %5, %cst {dimension_numbers = #tpu.dot_dimension_numbers<[1], [0], [0], [1], [0, 0, 1, 1], [], []>} : vector<32x512xbf16>, vector<512x128xbf16>, vector<32x128xf32> -> vector<32x128xf32>
    %7 = arith.addf %3, %6 : vector<32x128xf32>
    %c0_6 = arith.constant 0 : index
    %c0_7 = arith.constant 0 : index
    %8 = vector.load %arg7[%c0_6, %c0_7] : memref<32x128xf32, #tpu.memory_space<vmem>>, vector<32x128xf32>
    tpu.vector_store %arg7[%c0_6, %c0_7], %7 {strides = array<i32>} : memref<32x128xf32, #tpu.memory_space<vmem>>, vector<32x128xf32>,
    %c0_i32_8 = arith.constant 0 : i32
    %9 = arith.cmpi eq, %arg1, %c0_i32_8 : i32
    %10 = arith.extui %9 : i1 to i32
    %c0_i32_9 = arith.constant 0 : i32
    %11 = arith.cmpi ne, %10, %c0_i32_9 : i32
    scf.if %11 {
      %c0_10 = arith.constant 0 : index
      %c0_11 = arith.constant 0 : index
      %12 = vector.load %arg7[%c0_10, %c0_11] : memref<32x128xf32, #tpu.memory_space<vmem>>, vector<32x128xf32>
      %c0_12 = arith.constant 0 : index
      %c0_13 = arith.constant 0 : index
      %13 = vector.load %arg4[%c0_12, %c0_13] : memref<1x128xf32, #tpu.memory_space<vmem>>, vector<1x128xf32>
      %14 = vector.broadcast %13 : vector<1x128xf32> to vector<32x128xf32>
      %15 = arith.mulf %12, %14 : vector<32x128xf32>
      %c0_14 = arith.constant 0 : index
      %c0_15 = arith.constant 0 : index
      %16 = vector.load %arg5[%c0_14, %c0_15] : memref<1x128xf32, #tpu.memory_space<vmem>>, vector<1x128xf32>
      %17 = vector.broadcast %16 : vector<1x128xf32> to vector<32x128xf32>
      %18 = arith.addf %15, %17 : vector<32x128xf32>
      %cst_16 = arith.constant 0.000000e+00 : f32
      %19 = vector.broadcast %cst_16 : f32 to vector<32x128xf32>
      %20 = arith.cmpf ogt, %18, %19 : vector<32x128xf32>
      %cst_17 = arith.constant 2.000000e-01 : f32
      %21 = vector.broadcast %cst_17 : f32 to vector<32x128xf32>
      %22 = arith.mulf %21, %18 : vector<32x128xf32>
      %23 = arith.select %20, %18, %22 : vector<32x128xi1>, vector<32x128xf32>
      %c0_18 = arith.constant 0 : index
      %c0_19 = arith.constant 0 : index
      %24 = vector.load %arg6[%c0_18, %c0_19] : memref<32x128xf32, #tpu.memory_space<vmem>>, vector<32x128xf32>
      tpu.vector_store %arg6[%c0_18, %c0_19], %23 {strides = array<i32>} : memref<32x128xf32, #tpu.memory_space<vmem>>, vector<32x128xf32>,
    } else {
    }
    return
  }
  func.func @transform_0(%arg0: i32, %arg1: i32) -> (i32, i32) {
    %c0_i32 = arith.constant 0 : i32
    return %arg0, %arg1 : i32, i32
  }
  func.func @transform_1(%arg0: i32, %arg1: i32) -> (i32, i32) {
    %c0_i32 = arith.constant 0 : i32
    %c0_i32_0 = arith.constant 0 : i32
    return %arg1, %c0_i32 : i32, i32
  }
  func.func @transform_2(%arg0: i32, %arg1: i32) -> (i32, i32) {
    %c0_i32 = arith.constant 0 : i32
    %c0_i32_0 = arith.constant 0 : i32
    %c0_i32_1 = arith.constant 0 : i32
    return %c0_i32, %c0_i32_0 : i32, i32
  }
  func.func @transform_3(%arg0: i32, %arg1: i32) -> (i32, i32) {
    %c0_i32 = arith.constant 0 : i32
    %c0_i32_0 = arith.constant 0 : i32
    %c0_i32_1 = arith.constant 0 : i32
    return %c0_i32, %c0_i32_0 : i32, i32
  }
  func.func @transform_4(%arg0: i32, %arg1: i32) -> (i32, i32) {
    %c0_i32 = arith.constant 0 : i32
    %c0_i32_0 = arith.constant 0 : i32
    return %arg0, %c0_i32 : i32, i32
  }
}

module attributes {stable_mosaic.version = 11 : i64} {
  func.func @_fused_gemm_kernel(%arg0: i32, %arg1: i32, %arg2: memref<8x1024xbf16, #tpu.memory_space<vmem>>, %arg3: memref<1024x128xbf16, #tpu.memory_space<vmem>>, %arg4: memref<1x128xf32, #tpu.memory_space<vmem>>, %arg5: memref<1x128xf32, #tpu.memory_space<vmem>>, %arg6: memref<8x128xf32, #tpu.memory_space<vmem>>, %arg7: memref<8x128xf32, #tpu.memory_space<vmem>>) attributes {dimension_semantics = [#tpu.dimension_semantics<parallel>, #tpu.dimension_semantics<arbitrary>], iteration_bounds = array<i64: 1, 2>, scalar_prefetch = 0 : i64, scratch_operands = 1 : i64, tpu.core_type = #tpu.core_type<tc>, window_params = [{transform_indices = @transform_0, window_bounds = array<i64: 8, 1024>}, {transform_indices = @transform_1, window_bounds = array<i64: 1024, 128>}, {pipeline_mode = #tpu.pipeline_mode<synchronous>, transform_indices = @transform_2, window_bounds = array<i64: 1, 128>}, {pipeline_mode = #tpu.pipeline_mode<synchronous>, transform_indices = @transform_3, window_bounds = array<i64: 1, 128>}, {transform_indices = @transform_4, window_bounds = array<i64: 8, 128>}]} {
    %c0_i32 = arith.constant 0 : i32
    %0 = arith.cmpi eq, %arg1, %c0_i32 : i32
    %1 = arith.extui %0 : i1 to i32
    %c0_i32_0 = arith.constant 0 : i32
    %2 = arith.cmpi ne, %1, %c0_i32_0 : i32
    scf.if %2 {
      %cst_9 = arith.constant 0.000000e+00 : f32
      %12 = vector.broadcast %cst_9 : f32 to vector<8x128xf32>
      %c0_10 = arith.constant 0 : index
      %c0_11 = arith.constant 0 : index
      %13 = vector.load %arg7[%c0_10, %c0_11] : memref<8x128xf32, #tpu.memory_space<vmem>>, vector<8x128xf32>
      tpu.vector_store %arg7[%c0_10, %c0_11], %12 {strides = array<i32>} : memref<8x128xf32, #tpu.memory_space<vmem>>, vector<8x128xf32>,
    } else {
    }
    %c0 = arith.constant 0 : index
    %c0_1 = arith.constant 0 : index
    %3 = vector.load %arg7[%c0, %c0_1] : memref<8x128xf32, #tpu.memory_space<vmem>>, vector<8x128xf32>
    %c0_2 = arith.constant 0 : index
    %c0_3 = arith.constant 0 : index
    %4 = vector.load %arg2[%c0_2, %c0_3] : memref<8x1024xbf16, #tpu.memory_space<vmem>>, vector<8x1024xbf16>
    %c0_4 = arith.constant 0 : index
    %c0_5 = arith.constant 0 : index
    %5 = vector.load %arg3[%c0_4, %c0_5] : memref<1024x128xbf16, #tpu.memory_space<vmem>>, vector<1024x128xbf16>
    %cst = arith.constant dense<0.000000e+00> : vector<8x128xf32>
    %6 = tpu.matmul %4, %5, %cst {dimension_numbers = #tpu.dot_dimension_numbers<[1], [0], [0], [1], [0, 0, 1, 1], [], []>} : vector<8x1024xbf16>, vector<1024x128xbf16>, vector<8x128xf32> -> vector<8x128xf32>
    %7 = arith.addf %3, %6 : vector<8x128xf32>
    %c0_6 = arith.constant 0 : index
    %c0_7 = arith.constant 0 : index
    %8 = vector.load %arg7[%c0_6, %c0_7] : memref<8x128xf32, #tpu.memory_space<vmem>>, vector<8x128xf32>
    tpu.vector_store %arg7[%c0_6, %c0_7], %7 {strides = array<i32>} : memref<8x128xf32, #tpu.memory_space<vmem>>, vector<8x128xf32>,
    %c1_i32 = arith.constant 1 : i32
    %9 = arith.cmpi eq, %arg1, %c1_i32 : i32
    %10 = arith.extui %9 : i1 to i32
    %c0_i32_8 = arith.constant 0 : i32
    %11 = arith.cmpi ne, %10, %c0_i32_8 : i32
    scf.if %11 {
      %c0_9 = arith.constant 0 : index
      %c0_10 = arith.constant 0 : index
      %12 = vector.load %arg7[%c0_9, %c0_10] : memref<8x128xf32, #tpu.memory_space<vmem>>, vector<8x128xf32>
      %c0_11 = arith.constant 0 : index
      %c0_12 = arith.constant 0 : index
      %13 = vector.load %arg4[%c0_11, %c0_12] : memref<1x128xf32, #tpu.memory_space<vmem>>, vector<1x128xf32>
      %14 = vector.broadcast %13 : vector<1x128xf32> to vector<8x128xf32>
      %15 = arith.mulf %12, %14 : vector<8x128xf32>
      %c0_13 = arith.constant 0 : index
      %c0_14 = arith.constant 0 : index
      %16 = vector.load %arg5[%c0_13, %c0_14] : memref<1x128xf32, #tpu.memory_space<vmem>>, vector<1x128xf32>
      %17 = vector.broadcast %16 : vector<1x128xf32> to vector<8x128xf32>
      %18 = arith.addf %15, %17 : vector<8x128xf32>
      %c0_15 = arith.constant 0 : index
      %c0_16 = arith.constant 0 : index
      %19 = vector.load %arg6[%c0_15, %c0_16] : memref<8x128xf32, #tpu.memory_space<vmem>>, vector<8x128xf32>
      tpu.vector_store %arg6[%c0_15, %c0_16], %18 {strides = array<i32>} : memref<8x128xf32, #tpu.memory_space<vmem>>, vector<8x128xf32>,
    } else {
    }
    return
  }
  func.func @transform_0(%arg0: i32, %arg1: i32) -> (i32, i32) {
    %c0_i32 = arith.constant 0 : i32
    return %arg0, %arg1 : i32, i32
  }
  func.func @transform_1(%arg0: i32, %arg1: i32) -> (i32, i32) {
    %c0_i32 = arith.constant 0 : i32
    %c0_i32_0 = arith.constant 0 : i32
    return %arg1, %c0_i32 : i32, i32
  }
  func.func @transform_2(%arg0: i32, %arg1: i32) -> (i32, i32) {
    %c0_i32 = arith.constant 0 : i32
    %c0_i32_0 = arith.constant 0 : i32
    %c0_i32_1 = arith.constant 0 : i32
    return %c0_i32, %c0_i32_0 : i32, i32
  }
  func.func @transform_3(%arg0: i32, %arg1: i32) -> (i32, i32) {
    %c0_i32 = arith.constant 0 : i32
    %c0_i32_0 = arith.constant 0 : i32
    %c0_i32_1 = arith.constant 0 : i32
    return %c0_i32, %c0_i32_0 : i32, i32
  }
  func.func @transform_4(%arg0: i32, %arg1: i32) -> (i32, i32) {
    %c0_i32 = arith.constant 0 : i32
    %c0_i32_0 = arith.constant 0 : i32
    return %arg0, %c0_i32 : i32, i32
  }
}

module attributes {stable_mosaic.version = 11 : i64} {
  func.func @_fused_gemm_kernel(%arg0: i32, %arg1: i32, %arg2: memref<24x1024xbf16, #tpu.memory_space<vmem>>, %arg3: memref<1024x128xbf16, #tpu.memory_space<vmem>>, %arg4: memref<1x128xf32, #tpu.memory_space<vmem>>, %arg5: memref<1x128xf32, #tpu.memory_space<vmem>>, %arg6: memref<24x128xf32, #tpu.memory_space<vmem>>, %arg7: memref<24x128xf32, #tpu.memory_space<vmem>>) attributes {dimension_semantics = [#tpu.dimension_semantics<parallel>, #tpu.dimension_semantics<arbitrary>], iteration_bounds = array<i64: 1, 1>, scalar_prefetch = 0 : i64, scratch_operands = 1 : i64, tpu.core_type = #tpu.core_type<tc>, window_params = [{transform_indices = @transform_0, window_bounds = array<i64: 24, 1024>}, {transform_indices = @transform_1, window_bounds = array<i64: 1024, 128>}, {pipeline_mode = #tpu.pipeline_mode<synchronous>, transform_indices = @transform_2, window_bounds = array<i64: 1, 128>}, {pipeline_mode = #tpu.pipeline_mode<synchronous>, transform_indices = @transform_3, window_bounds = array<i64: 1, 128>}, {transform_indices = @transform_4, window_bounds = array<i64: 24, 128>}]} {
    %c0_i32 = arith.constant 0 : i32
    %0 = arith.cmpi eq, %arg1, %c0_i32 : i32
    %1 = arith.extui %0 : i1 to i32
    %c0_i32_0 = arith.constant 0 : i32
    %2 = arith.cmpi ne, %1, %c0_i32_0 : i32
    scf.if %2 {
      %cst_10 = arith.constant 0.000000e+00 : f32
      %12 = vector.broadcast %cst_10 : f32 to vector<24x128xf32>
      %c0_11 = arith.constant 0 : index
      %c0_12 = arith.constant 0 : index
      %13 = vector.load %arg7[%c0_11, %c0_12] : memref<24x128xf32, #tpu.memory_space<vmem>>, vector<24x128xf32>
      tpu.vector_store %arg7[%c0_11, %c0_12], %12 {strides = array<i32>} : memref<24x128xf32, #tpu.memory_space<vmem>>, vector<24x128xf32>,
    } else {
    }
    %c0 = arith.constant 0 : index
    %c0_1 = arith.constant 0 : index
    %3 = vector.load %arg7[%c0, %c0_1] : memref<24x128xf32, #tpu.memory_space<vmem>>, vector<24x128xf32>
    %c0_2 = arith.constant 0 : index
    %c0_3 = arith.constant 0 : index
    %4 = vector.load %arg2[%c0_2, %c0_3] : memref<24x1024xbf16, #tpu.memory_space<vmem>>, vector<24x1024xbf16>
    %c0_4 = arith.constant 0 : index
    %c0_5 = arith.constant 0 : index
    %5 = vector.load %arg3[%c0_4, %c0_5] : memref<1024x128xbf16, #tpu.memory_space<vmem>>, vector<1024x128xbf16>
    %cst = arith.constant dense<0.000000e+00> : vector<24x128xf32>
    %6 = tpu.matmul %4, %5, %cst {dimension_numbers = #tpu.dot_dimension_numbers<[1], [0], [0], [1], [0, 0, 1, 1], [], []>} : vector<24x1024xbf16>, vector<1024x128xbf16>, vector<24x128xf32> -> vector<24x128xf32>
    %7 = arith.addf %3, %6 : vector<24x128xf32>
    %c0_6 = arith.constant 0 : index
    %c0_7 = arith.constant 0 : index
    %8 = vector.load %arg7[%c0_6, %c0_7] : memref<24x128xf32, #tpu.memory_space<vmem>>, vector<24x128xf32>
    tpu.vector_store %arg7[%c0_6, %c0_7], %7 {strides = array<i32>} : memref<24x128xf32, #tpu.memory_space<vmem>>, vector<24x128xf32>,
    %c0_i32_8 = arith.constant 0 : i32
    %9 = arith.cmpi eq, %arg1, %c0_i32_8 : i32
    %10 = arith.extui %9 : i1 to i32
    %c0_i32_9 = arith.constant 0 : i32
    %11 = arith.cmpi ne, %10, %c0_i32_9 : i32
    scf.if %11 {
      %c0_10 = arith.constant 0 : index
      %c0_11 = arith.constant 0 : index
      %12 = vector.load %arg7[%c0_10, %c0_11] : memref<24x128xf32, #tpu.memory_space<vmem>>, vector<24x128xf32>
      %c0_12 = arith.constant 0 : index
      %c0_13 = arith.constant 0 : index
      %13 = vector.load %arg4[%c0_12, %c0_13] : memref<1x128xf32, #tpu.memory_space<vmem>>, vector<1x128xf32>
      %14 = vector.broadcast %13 : vector<1x128xf32> to vector<24x128xf32>
      %15 = arith.mulf %12, %14 : vector<24x128xf32>
      %c0_14 = arith.constant 0 : index
      %c0_15 = arith.constant 0 : index
      %16 = vector.load %arg5[%c0_14, %c0_15] : memref<1x128xf32, #tpu.memory_space<vmem>>, vector<1x128xf32>
      %17 = vector.broadcast %16 : vector<1x128xf32> to vector<24x128xf32>
      %18 = arith.addf %15, %17 : vector<24x128xf32>
      %cst_16 = arith.constant 0.000000e+00 : f32
      %19 = vector.broadcast %cst_16 : f32 to vector<24x128xf32>
      %20 = arith.cmpf ogt, %18, %19 : vector<24x128xf32>
      %cst_17 = arith.constant 2.000000e-01 : f32
      %21 = vector.broadcast %cst_17 : f32 to vector<24x128xf32>
      %22 = arith.mulf %21, %18 : vector<24x128xf32>
      %23 = arith.select %20, %18, %22 : vector<24x128xi1>, vector<24x128xf32>
      %c0_18 = arith.constant 0 : index
      %c0_19 = arith.constant 0 : index
      %24 = vector.load %arg6[%c0_18, %c0_19] : memref<24x128xf32, #tpu.memory_space<vmem>>, vector<24x128xf32>
      tpu.vector_store %arg6[%c0_18, %c0_19], %23 {strides = array<i32>} : memref<24x128xf32, #tpu.memory_space<vmem>>, vector<24x128xf32>,
    } else {
    }
    return
  }
  func.func @transform_0(%arg0: i32, %arg1: i32) -> (i32, i32) {
    %c0_i32 = arith.constant 0 : i32
    return %arg0, %arg1 : i32, i32
  }
  func.func @transform_1(%arg0: i32, %arg1: i32) -> (i32, i32) {
    %c0_i32 = arith.constant 0 : i32
    %c0_i32_0 = arith.constant 0 : i32
    return %arg1, %c0_i32 : i32, i32
  }
  func.func @transform_2(%arg0: i32, %arg1: i32) -> (i32, i32) {
    %c0_i32 = arith.constant 0 : i32
    %c0_i32_0 = arith.constant 0 : i32
    %c0_i32_1 = arith.constant 0 : i32
    return %c0_i32, %c0_i32_0 : i32, i32
  }
  func.func @transform_3(%arg0: i32, %arg1: i32) -> (i32, i32) {
    %c0_i32 = arith.constant 0 : i32
    %c0_i32_0 = arith.constant 0 : i32
    %c0_i32_1 = arith.constant 0 : i32
    return %c0_i32, %c0_i32_0 : i32, i32
  }
  func.func @transform_4(%arg0: i32, %arg1: i32) -> (i32, i32) {
    %c0_i32 = arith.constant 0 : i32
    %c0_i32_0 = arith.constant 0 : i32
    return %arg0, %c0_i32 : i32, i32
  }
}

</mosaic_0001>

<llo_original>
// kernel: patch_discriminator_forward.5
$region0: #{patch_discriminator_forward.5}
  #allocation0 [shape = 'u32[]', space=smem, size = 0x4, offset = 0x4, fixed_abs, tag = 'smem constant byte address 0x4 - core index']
  #allocation1 [shape = 'u32[144,128]{1,0:T(1,128)}', space=vmem, size = 0x12000, scoped, tag = 'internal scratch']
  #allocation2 [shape = 'f32[256,128]{1,0:T(8,128)}', space=vmem, size = 0x20000, scoped, tag = 'scratch operand']
  %s0 = inlined_call_operand.vmem [shape: bf16[512,128], index: 0, kind: input, shape index: {}]
  %s1 = inlined_call_operand.vmem [shape: bf16[128,128], index: 1, kind: input, shape index: {}]
  %s2 = inlined_call_operand.vmem [shape: f32[1,128], index: 2, kind: input, shape index: {}]
  %s3 = inlined_call_operand.vmem [shape: f32[1,128], index: 3, kind: input, shape index: {}]
  %s4 = inlined_call_operand.vmem [shape: f32[512,128], index: 4, kind: output, shape index: {}]
  %s5 = sld [smem:[#allocation0]]
  $region57: #{patch_discriminator_forward.5} parent=0
    _
  %s7 = ssub.s32 1, %s5
  %s8 = scalar_select 0, %s7, %s5
  loop: start=0, step=1, limit=4
  $region2: #{patch_discriminator_forward.5} parent=0 // loop_pre_header
    _
  $region3: #{patch_discriminator_forward.5} parent=0 // loop_header
    %s10 = sphi 0, %s14
    %p11 = scmp.ge.s32.totalorder %s10, 4
    %s17 = sphi 0, %s29
    %s18 = sphi 0, %s25
    %s19 = sphi 0, %s17
    %s20 = sphi 0, %s18
    %s21 = sphi 0, %s19
    %s22 = sphi 0, %s20
    %s34 = sphi 0, %s36
    %s37 = sphi 0, %s34
    %s38 = sphi 0, %s37
    %s54 = sphi 0, %s38
    %s60 = sphi 0, %s62
    %s63 = sphi 0, %s60
    %s64 = sphi 0, %s63
    %s80 = sphi 0, %s64
    %s84 = sphi 0, %s84
    %s86 = sphi 0, %s84
    %s87 = sphi 0, %s86
    %s101 = sphi 0, %s87
    %s105 = sphi 0, %s105
    %s107 = sphi 0, %s105
    %s108 = sphi 0, %s107
    %s122 = sphi 0, %s108
    %s128 = sphi 0, %s130
    %s131 = sphi 0, %s128
    %s132 = sphi 0, %s131
    %s148 = sphi 0, %s132
  $region4: #{patch_discriminator_forward.5} parent=0 // loop_header_branch
    %13 = sbr.rel (%p11) target = $region8
  $region5: #{patch_discriminator_forward.5} parent=0 // loop_body
    %s15 = ssub.s32 %s10, 1
    %s16 = ssub.s32 %s10, 2
    %s23 = sadd.s32 1, %s18
    %p24 = scmp.ge.s32.totalorder %s23, 1
    %s25 = scalar_select %p24, 0, %s23
    %s26 = sadd.s32 1, %s17
    %s27 = scalar_select %p24, %s26, %s17
    %p28 = scmp.ge.s32.totalorder %s27, 2
    %s29 = scalar_select %p28, 0, %s27
    %s30 = ssub.s32 %s17, %s29
    %s31 = ssub.s32 %s18, %s25
    %s32 = sor.u32 %s30, %s31
    %p33 = scmp.eq.s32.totalorder %s32, 0
    %s35 = sadd.s32 %s34, 1
    %s36 = scalar_select %p33, %s34, %s35
    %p39 = pneg %p33
    %p40 = scmp.eq.s32.totalorder %s10, 1
    %p41 = por %p39, %p40
    %p42 = scmp.ne.s32.totalorder %s34, %s37
    %p43 = scmp.eq.s32.totalorder %s10, 0
    %p44 = por %p42, %p43
    %p45 = scmp.ne.s32.totalorder %s34, %s37
    %p46 = scmp.eq.s32.totalorder %s15, 1
    %p47 = por %p45, %p46
    %p48 = scmp.ne.s32.totalorder %s37, %s38
    %p49 = scmp.eq.s32.totalorder %s15, 0
    %p50 = por %p48, %p49
    %p51 = scmp.ne.s32.totalorder %s37, %s38
    %p52 = scmp.eq.s32.totalorder %s16, 1
    %p53 = por %p51, %p52
    %p55 = scmp.ne.s32.totalorder %s38, %s54
    %p56 = scmp.eq.s32.totalorder %s16, 0
    %p57 = por %p55, %p56
    %s58 = ssub.s32 %s18, %s25
    %p59 = scmp.eq.s32.totalorder %s58, 0
    %s61 = sadd.s32 %s60, 1
    %s62 = scalar_select %p59, %s60, %s61
    %p65 = pneg %p59
    %p66 = scmp.eq.s32.totalorder %s10, 1
    %p67 = por %p65, %p66
    %p68 = scmp.ne.s32.totalorder %s60, %s63
    %p69 = scmp.eq.s32.totalorder %s10, 0
    %p70 = por %p68, %p69
    %p71 = scmp.ne.s32.totalorder %s60, %s63
    %p72 = scmp.eq.s32.totalorder %s15, 1
    %p73 = por %p71, %p72
    %p74 = scmp.ne.s32.totalorder %s63, %s64
    %p75 = scmp.eq.s32.totalorder %s15, 0
    %p76 = por %p74, %p75
    %p77 = scmp.ne.s32.totalorder %s63, %s64
    %p78 = scmp.eq.s32.totalorder %s16, 1
    %p79 = por %p77, %p78
    %p81 = scmp.ne.s32.totalorder %s64, %s80
    %p82 = scmp.eq.s32.totalorder %s16, 0
    %p83 = por %p81, %p82
    %s85 = sadd.s32 %s84, 1
    %p88 = scmp.eq.s32.totalorder %s10, 1
    %p89 = scmp.ne.s32.totalorder %s84, %s86
    %p90 = scmp.eq.s32.totalorder %s10, 0
    %p91 = por %p89, %p90
    %p92 = scmp.ne.s32.totalorder %s84, %s86
    %p93 = scmp.eq.s32.totalorder %s15, 1
    %p94 = por %p92, %p93
    %p95 = scmp.ne.s32.totalorder %s86, %s87
    %p96 = scmp.eq.s32.totalorder %s15, 0
    %p97 = por %p95, %p96
    %p98 = scmp.ne.s32.totalorder %s86, %s87
    %p99 = scmp.eq.s32.totalorder %s16, 1
    %p100 = por %p98, %p99
    %p102 = scmp.ne.s32.totalorder %s87, %s101
    %p103 = scmp.eq.s32.totalorder %s16, 0
    %p104 = por %p102, %p103
    %s106 = sadd.s32 %s105, 1
    %p109 = scmp.eq.s32.totalorder %s10, 1
    %p110 = scmp.ne.s32.totalorder %s105, %s107
    %p111 = scmp.eq.s32.totalorder %s10, 0
    %p112 = por %p110, %p111
    %p113 = scmp.ne.s32.totalorder %s105, %s107
    %p114 = scmp.eq.s32.totalorder %s15, 1
    %p115 = por %p113, %p114
    %p116 = scmp.ne.s32.totalorder %s107, %s108
    %p117 = scmp.eq.s32.totalorder %s15, 0
    %p118 = por %p116, %p117
    %p119 = scmp.ne.s32.totalorder %s107, %s108
    %p120 = scmp.eq.s32.totalorder %s16, 1
    %p121 = por %p119, %p120
    %p123 = scmp.ne.s32.totalorder %s108, %s122
    %p124 = scmp.eq.s32.totalorder %s16, 0
    %p125 = por %p123, %p124
    %s126 = ssub.s32 %s17, %s29
    %p127 = scmp.eq.s32.totalorder %s126, 0
    %s129 = sadd.s32 %s128, 1
    %s130 = scalar_select %p127, %s128, %s129
    %p133 = pneg %p127
    %p134 = scmp.eq.s32.totalorder %s10, 1
    %p135 = por %p133, %p134
    %p136 = scmp.ne.s32.totalorder %s128, %s131
    %p137 = scmp.eq.s32.totalorder %s10, 0
    %p138 = por %p136, %p137
    %p139 = scmp.ne.s32.totalorder %s128, %s131
    %p140 = scmp.eq.s32.totalorder %s15, 1
    %p141 = por %p139, %p140
    %p142 = scmp.ne.s32.totalorder %s131, %s132
    %p143 = scmp.eq.s32.totalorder %s15, 0
    %p144 = por %p142, %p143
    %p145 = scmp.ne.s32.totalorder %s131, %s132
    %p146 = scmp.eq.s32.totalorder %s16, 1
    %p147 = por %p145, %p146
    %p149 = scmp.ne.s32.totalorder %s132, %s148
    %p150 = scmp.eq.s32.totalorder %s16, 0
    %p151 = por %p149, %p150
    %p152 = scmp.le.s32.totalorder 1, %s10
    %p153 = scmp.lt.s32.totalorder %s10, 3
    %p154 = pnand %p152, %p153
    %p155 = pneg %p154
    // Predicated region
    $region9: #{patch_discriminator_forward.5} parent=5 // pred_check
      _
    $region10: #{patch_discriminator_forward.5} parent=5 // pred_check_branch
      %157 = sbr.rel (%p154) target = $region12
    $region11: #{patch_discriminator_forward.5} parent=5 // pred_region
      %s158 = ssub.s32 %s10, 1
      // Predicated region
      $region13: #{patch_discriminator_forward.5} parent=11 // pred_check
        %p159 = pneg %p76
      $region14: #{patch_discriminator_forward.5} parent=11 // pred_check_branch
        %161 = sbr.rel (%p159) target = $region16
      $region15: #{patch_discriminator_forward.5} parent=11 // pred_region
        %s162 = smul.u32 16, %s20
        %p163 = scmp.lt.s32.totalorder %s162, 15
        %s164 = scalar_select %p163, %s162, 15
        %s165 = smul.addr %s164, 4
        %s166 = scalar_lea.vmem %s1, %s165
        %s167 = smul.u32 16, %s20
      $region16: #{patch_discriminator_forward.5} parent=11 // pred_fallthru
        _
      // Predicated region
      $region17: #{patch_discriminator_forward.5} parent=11 // pred_check
        %p168 = pneg %p97
      $region18: #{patch_discriminator_forward.5} parent=11 // pred_check_branch
        %170 = sbr.rel (%p168) target = $region20
      $region19: #{patch_discriminator_forward.5} parent=11 // pred_region
        _
      $region20: #{patch_discriminator_forward.5} parent=11 // pred_fallthru
        _
      // Predicated region
      $region21: #{patch_discriminator_forward.5} parent=11 // pred_check
        %p171 = pneg %p118
      $region22: #{patch_discriminator_forward.5} parent=11 // pred_check_branch
        %173 = sbr.rel (%p171) target = $region24
      $region23: #{patch_discriminator_forward.5} parent=11 // pred_region
        _
      $region24: #{patch_discriminator_forward.5} parent=11 // pred_fallthru
        _
    $region12: #{patch_discriminator_forward.5} parent=5 // pred_fallthru
      _
    %p174 = scmp.lt.s32.totalorder %s10, 2
    // Predicated region
    $region25: #{patch_discriminator_forward.5} parent=5 // pred_check
      %p175 = pneg %p174
    $region26: #{patch_discriminator_forward.5} parent=5 // pred_check_branch
      %177 = sbr.rel (%p175) target = $region28
    $region27: #{patch_discriminator_forward.5} parent=5 // pred_region
      // Predicated region
      $region29: #{patch_discriminator_forward.5} parent=27 // pred_check
        %p178 = pneg %p44
      $region30: #{patch_discriminator_forward.5} parent=27 // pred_check_branch
        %180 = sbr.rel (%p178) target = $region32
      $region31: #{patch_discriminator_forward.5} parent=27 // pred_region
        %s181 = smul.u32 32, %s17
        %p182 = scmp.lt.s32.totalorder %s181, 63
        %s183 = scalar_select %p182, %s181, 63
        %p184 = scmp.lt.s32.totalorder %s18, 0
        %s185 = scalar_select %p184, %s18, 0
        %s186 = sadd.s32 %s185, %s183
        %s187 = smul.addr %s186, 4
        %s188 = scalar_lea.vmem %s0, %s187
        %s189 = smul.u32 32, %s17
      $region32: #{patch_discriminator_forward.5} parent=27 // pred_fallthru
        _
    $region28: #{patch_discriminator_forward.5} parent=5 // pred_fallthru
      _
    %p190 = scmp.le.s32.totalorder 1, %s10
    %p191 = scmp.lt.s32.totalorder %s10, 3
    %p192 = pnand %p190, %p191
    %p193 = pneg %p192
    // Predicated region
    $region33: #{patch_discriminator_forward.5} parent=5 // pred_check
      _
    $region34: #{patch_discriminator_forward.5} parent=5 // pred_check_branch
      %195 = sbr.rel (%p192) target = $region36
    $region35: #{patch_discriminator_forward.5} parent=5 // pred_region
      %s196 = ssub.s32 %s10, 1
      %s197 = smul.u32 32, %s19
      %p198 = scmp.lt.s32.totalorder %s197, 63
      %s199 = scalar_select %p198, %s197, 63
      %p200 = scmp.lt.s32.totalorder %s20, 0
      %s201 = scalar_select %p200, %s20, 0
      %s202 = sadd.s32 %s201, %s199
      %s203 = smul.addr %s202, 4
      %s204 = scalar_lea.vmem %s0, %s203
      %p205 = pneg %p50
      %p206 = pneg %p47
      %s207 = smul.u32 16, %s20
      %p208 = scmp.lt.s32.totalorder %s207, 15
      %s209 = scalar_select %p208, %s207, 15
      %s210 = smul.addr %s209, 4
      %s211 = scalar_lea.vmem %s1, %s210
      %p212 = pneg %p76
      %p213 = pneg %p73
      %p214 = pneg %p97
      %p215 = pneg %p94
      %p216 = pneg %p118
      %p217 = pneg %p115
      %p218 = pneg %p144
      %p219 = pneg %p141
      %s220 = smul.u32 32, %s19
      %p221 = scmp.lt.s32.totalorder %s220, 63
      %s222 = scalar_select %p221, %s220, 63
      %s223 = smul.addr %s222, 8
      %s224 = scalar_lea.vmem %s4, %s223
      %s225 = smul.u32 32, %s19
      %p226 = scmp.lt.s32.totalorder %s225, 63
      %s227 = scalar_select %p226, %s225, 63
      %p228 = scmp.lt.s32.totalorder %s20, 0
      %s229 = scalar_select %p228, %s20, 0
      %s230 = sadd.s32 %s229, %s227
      %s231 = smul.addr %s230, 4
      %s232 = scalar_lea.vmem %s0, %s231
      %s233 = smul.u32 32, %s19
      %s234 = smul.u32 16, %s20
      %p235 = scmp.lt.s32.totalorder %s234, 15
      %s236 = scalar_select %p235, %s234, 15
      %s237 = smul.addr %s236, 4
      %s238 = scalar_lea.vmem %s1, %s237
      %s239 = smul.u32 16, %s20
      %s240 = smul.u32 32, %s19
      %p241 = scmp.lt.s32.totalorder %s240, 63
      %s242 = scalar_select %p241, %s240, 63
      %s243 = smul.addr %s242, 8
      %s244 = scalar_lea.vmem %s4, %s243
      %s245 = smul.u32 32, %s19
      %p247 = scmp.eq.s32.totalorder %s20, 0
      // Predicated region
      $region37: #{patch_discriminator_forward.5} parent=35 // pred_check
        %p248 = pneg %p247
      $region38: #{patch_discriminator_forward.5} parent=35 // pred_check_branch
        %250 = sbr.rel (%p248) target = $region40
      $region39: #{patch_discriminator_forward.5} parent=35 // pred_region
        %251 = vst [vmem:[#allocation2] sm:$0xff] 0.0
        %252 = vst [vmem:[#allocation2 + $0x8] sm:$0xff] 0.0
        %253 = vst [vmem:[#allocation2 + $0x10] sm:$0xff] 0.0
        %254 = vst [vmem:[#allocation2 + $0x18] sm:$0xff] 0.0
        %255 = vst [vmem:[#allocation2 + $0x20] sm:$0xff] 0.0
        %256 = vst [vmem:[#allocation2 + $0x28] sm:$0xff] 0.0
        %257 = vst [vmem:[#allocation2 + $0x30] sm:$0xff] 0.0
        %258 = vst [vmem:[#allocation2 + $0x38] sm:$0xff] 0.0
        %259 = vst [vmem:[#allocation2 + $0x40] sm:$0xff] 0.0
        %260 = vst [vmem:[#allocation2 + $0x48] sm:$0xff] 0.0
        %261 = vst [vmem:[#allocation2 + $0x50] sm:$0xff] 0.0
        %262 = vst [vmem:[#allocation2 + $0x58] sm:$0xff] 0.0
        %263 = vst [vmem:[#allocation2 + $0x60] sm:$0xff] 0.0
        %264 = vst [vmem:[#allocation2 + $0x68] sm:$0xff] 0.0
        %265 = vst [vmem:[#allocation2 + $0x70] sm:$0xff] 0.0
        %266 = vst [vmem:[#allocation2 + $0x78] sm:$0xff] 0.0
        %267 = vst [vmem:[#allocation2 + $0x80] sm:$0xff] 0.0
        %268 = vst [vmem:[#allocation2 + $0x88] sm:$0xff] 0.0
        %269 = vst [vmem:[#allocation2 + $0x90] sm:$0xff] 0.0
        %270 = vst [vmem:[#allocation2 + $0x98] sm:$0xff] 0.0
        %271 = vst [vmem:[#allocation2 + $0xa0] sm:$0xff] 0.0
        %272 = vst [vmem:[#allocation2 + $0xa8] sm:$0xff] 0.0
        %273 = vst [vmem:[#allocation2 + $0xb0] sm:$0xff] 0.0
        %274 = vst [vmem:[#allocation2 + $0xb8] sm:$0xff] 0.0
        %275 = vst [vmem:[#allocation2 + $0xc0] sm:$0xff] 0.0
        %276 = vst [vmem:[#allocation2 + $0xc8] sm:$0xff] 0.0
        %277 = vst [vmem:[#allocation2 + $0xd0] sm:$0xff] 0.0
        %278 = vst [vmem:[#allocation2 + $0xd8] sm:$0xff] 0.0
        %279 = vst [vmem:[#allocation2 + $0xe0] sm:$0xff] 0.0
        %280 = vst [vmem:[#allocation2 + $0xe8] sm:$0xff] 0.0
        %281 = vst [vmem:[#allocation2 + $0xf0] sm:$0xff] 0.0
        %282 = vst [vmem:[#allocation2 + $0xf8] sm:$0xff] 0.0
      $region40: #{patch_discriminator_forward.5} parent=35 // pred_fallthru
        _
      %v283 = vld [vmem:[#allocation2] sm:$0xff]
      %v284 = vld [vmem:[#allocation2 + $0x8] sm:$0xff]
      %v285 = vld [vmem:[#allocation2 + $0x10] sm:$0xff]
      %v286 = vld [vmem:[#allocation2 + $0x18] sm:$0xff]
      %v287 = vld [vmem:[#allocation2 + $0x20] sm:$0xff]
      %v288 = vld [vmem:[#allocation2 + $0x28] sm:$0xff]
      %v289 = vld [vmem:[#allocation2 + $0x30] sm:$0xff]
      %v290 = vld [vmem:[#allocation2 + $0x38] sm:$0xff]
      %v291 = vld [vmem:[#allocation2 + $0x40] sm:$0xff]
      %v292 = vld [vmem:[#allocation2 + $0x48] sm:$0xff]
      %v293 = vld [vmem:[#allocation2 + $0x50] sm:$0xff]
      %v294 = vld [vmem:[#allocation2 + $0x58] sm:$0xff]
      %v295 = vld [vmem:[#allocation2 + $0x60] sm:$0xff]
      %v296 = vld [vmem:[#allocation2 + $0x68] sm:$0xff]
      %v297 = vld [vmem:[#allocation2 + $0x70] sm:$0xff]
      %v298 = vld [vmem:[#allocation2 + $0x78] sm:$0xff]
      %v299 = vld [vmem:[#allocation2 + $0x80] sm:$0xff]
      %v300 = vld [vmem:[#allocation2 + $0x88] sm:$0xff]
      %v301 = vld [vmem:[#allocation2 + $0x90] sm:$0xff]
      %v302 = vld [vmem:[#allocation2 + $0x98] sm:$0xff]
      %v303 = vld [vmem:[#allocation2 + $0xa0] sm:$0xff]
      %v304 = vld [vmem:[#allocation2 + $0xa8] sm:$0xff]
      %v305 = vld [vmem:[#allocation2 + $0xb0] sm:$0xff]
      %v306 = vld [vmem:[#allocation2 + $0xb8] sm:$0xff]
      %v307 = vld [vmem:[#allocation2 + $0xc0] sm:$0xff]
      %v308 = vld [vmem:[#allocation2 + $0xc8] sm:$0xff]
      %v309 = vld [vmem:[#allocation2 + $0xd0] sm:$0xff]
      %v310 = vld [vmem:[#allocation2 + $0xd8] sm:$0xff]
      %v311 = vld [vmem:[#allocation2 + $0xe0] sm:$0xff]
      %v312 = vld [vmem:[#allocation2 + $0xe8] sm:$0xff]
      %v313 = vld [vmem:[#allocation2 + $0xf0] sm:$0xff]
      %v314 = vld [vmem:[#allocation2 + $0xf8] sm:$0xff]
      %v315 = vld [vmem:[%s232] sm:$0xf]
      %v316 = vld [vmem:[%s232 + $0x4] sm:$0xf]
      %v317 = vld [vmem:[%s232 + $0x8] sm:$0xf]
      %v318 = vld [vmem:[%s232 + $0xc] sm:$0xf]
      %v319 = vld [vmem:[%s232 + $0x10] sm:$0xf]
      %v320 = vld [vmem:[%s232 + $0x14] sm:$0xf]
      %v321 = vld [vmem:[%s232 + $0x18] sm:$0xf]
      %v322 = vld [vmem:[%s232 + $0x1c] sm:$0xf]
      %v323 = vld [vmem:[%s232 + $0x20] sm:$0xf]
      %v324 = vld [vmem:[%s232 + $0x24] sm:$0xf]
      %v325 = vld [vmem:[%s232 + $0x28] sm:$0xf]
      %v326 = vld [vmem:[%s232 + $0x2c] sm:$0xf]
      %v327 = vld [vmem:[%s232 + $0x30] sm:$0xf]
      %v328 = vld [vmem:[%s232 + $0x34] sm:$0xf]
      %v329 = vld [vmem:[%s232 + $0x38] sm:$0xf]
      %v330 = vld [vmem:[%s232 + $0x3c] sm:$0xf]
      %v331 = vld [vmem:[%s232 + $0x40] sm:$0xf]
      %v332 = vld [vmem:[%s232 + $0x44] sm:$0xf]
      %v333 = vld [vmem:[%s232 + $0x48] sm:$0xf]
      %v334 = vld [vmem:[%s232 + $0x4c] sm:$0xf]
      %v335 = vld [vmem:[%s232 + $0x50] sm:$0xf]
      %v336 = vld [vmem:[%s232 + $0x54] sm:$0xf]
      %v337 = vld [vmem:[%s232 + $0x58] sm:$0xf]
      %v338 = vld [vmem:[%s232 + $0x5c] sm:$0xf]
      %v339 = vld [vmem:[%s232 + $0x60] sm:$0xf]
      %v340 = vld [vmem:[%s232 + $0x64] sm:$0xf]
      %v341 = vld [vmem:[%s232 + $0x68] sm:$0xf]
      %v342 = vld [vmem:[%s232 + $0x6c] sm:$0xf]
      %v343 = vld [vmem:[%s232 + $0x70] sm:$0xf]
      %v344 = vld [vmem:[%s232 + $0x74] sm:$0xf]
      %v345 = vld [vmem:[%s232 + $0x78] sm:$0xf]
      %v346 = vld [vmem:[%s232 + $0x7c] sm:$0xf]
      %v347 = vld [vmem:[%s238] sm:$0xf]
      %v348 = vld [vmem:[%s238 + $0x4] sm:$0xf]
      %v349 = vld [vmem:[%s238 + $0x8] sm:$0xf]
      %v350 = vld [vmem:[%s238 + $0xc] sm:$0xf]
      %v351 = vld [vmem:[%s238 + $0x10] sm:$0xf]
      %v352 = vld [vmem:[%s238 + $0x14] sm:$0xf]
      %v353 = vld [vmem:[%s238 + $0x18] sm:$0xf]
      %v354 = vld [vmem:[%s238 + $0x1c] sm:$0xf]
      %v355 = vld [vmem:[%s238 + $0x20] sm:$0xf]
      %v356 = vld [vmem:[%s238 + $0x24] sm:$0xf]
      %v357 = vld [vmem:[%s238 + $0x28] sm:$0xf]
      %v358 = vld [vmem:[%s238 + $0x2c] sm:$0xf]
      %v359 = vld [vmem:[%s238 + $0x30] sm:$0xf]
      %v360 = vld [vmem:[%s238 + $0x34] sm:$0xf]
      %v361 = vld [vmem:[%s238 + $0x38] sm:$0xf]
      %v362 = vld [vmem:[%s238 + $0x3c] sm:$0xf]
      %v395 = vunpack.c.l.b16 %v315
      %v396 = vunpack.c.l.b16 %v316
      %v397 = vunpack.c.l.b16 %v317
      %v398 = vunpack.c.l.b16 %v318
      %v399 = vunpack.c.l.b16 %v319
      %v400 = vunpack.c.l.b16 %v320
      %v401 = vunpack.c.l.b16 %v321
      %v402 = vunpack.c.l.b16 %v322
      %v403 = vunpack.c.l.b16 %v323
      %v404 = vunpack.c.l.b16 %v324
      %v405 = vunpack.c.l.b16 %v325
      %v406 = vunpack.c.l.b16 %v326
      %v407 = vunpack.c.l.b16 %v327
      %v408 = vunpack.c.l.b16 %v328
      %v409 = vunpack.c.l.b16 %v329
      %v410 = vunpack.c.l.b16 %v330
      %v411 = vunpack.c.l.b16 %v331
      %v412 = vunpack.c.l.b16 %v332
      %v413 = vunpack.c.l.b16 %v333
      %v414 = vunpack.c.l.b16 %v334
      %v415 = vunpack.c.l.b16 %v335
      %v416 = vunpack.c.l.b16 %v336
      %v417 = vunpack.c.l.b16 %v337
      %v418 = vunpack.c.l.b16 %v338
      %v419 = vunpack.c.l.b16 %v339
      %v420 = vunpack.c.l.b16 %v340
      %v421 = vunpack.c.l.b16 %v341
      %v422 = vunpack.c.l.b16 %v342
      %v423 = vunpack.c.l.b16 %v343
      %v424 = vunpack.c.l.b16 %v344
      %v425 = vunpack.c.l.b16 %v345
      %v426 = vunpack.c.l.b16 %v346
      %v427 = vpack.c.b16 %v396, %v395
      %v428 = vpack.c.b16 %v398, %v397
      %v429 = vpack.c.b16 %v400, %v399
      %v430 = vpack.c.b16 %v402, %v401
      %v431 = vpack.c.b16 %v404, %v403
      %v432 = vpack.c.b16 %v406, %v405
      %v433 = vpack.c.b16 %v408, %v407
      %v434 = vpack.c.b16 %v410, %v409
      %v435 = vpack.c.b16 %v412, %v411
      %v436 = vpack.c.b16 %v414, %v413
      %v437 = vpack.c.b16 %v416, %v415
      %v438 = vpack.c.b16 %v418, %v417
      %v439 = vpack.c.b16 %v420, %v419
      %v440 = vpack.c.b16 %v422, %v421
      %v441 = vpack.c.b16 %v424, %v423
      %v442 = vpack.c.b16 %v426, %v425
      %v475 = vunpack.c.l.b16 %v347
      %v476 = vunpack.c.l.b16 %v348
      %v477 = vunpack.c.l.b16 %v349
      %v478 = vunpack.c.l.b16 %v350
      %v479 = vunpack.c.l.b16 %v351
      %v480 = vunpack.c.l.b16 %v352
      %v481 = vunpack.c.l.b16 %v353
      %v482 = vunpack.c.l.b16 %v354
      %v483 = vunpack.c.l.b16 %v355
      %v484 = vunpack.c.l.b16 %v356
      %v485 = vunpack.c.l.b16 %v357
      %v486 = vunpack.c.l.b16 %v358
      %v487 = vunpack.c.l.b16 %v359
      %v488 = vunpack.c.l.b16 %v360
      %v489 = vunpack.c.l.b16 %v361
      %v490 = vunpack.c.l.b16 %v362
      %v491 = vpack.c.b16 %v476, %v475
      %v492 = vpack.c.b16 %v478, %v477
      %v493 = vpack.c.b16 %v480, %v479
      %v494 = vpack.c.b16 %v482, %v481
      %v495 = vpack.c.b16 %v484, %v483
      %v496 = vpack.c.b16 %v486, %v485
      %v497 = vpack.c.b16 %v488, %v487
      %v498 = vpack.c.b16 %v490, %v489
      %507 = vmatprep.subr.bf16.mxu0 0
      %508 = vmatpush1.bf16.msra.mxu0 %v498
      %509 = vmatprep.subr.bf16.mxu0 0
      %510 = vmatpush1.bf16.msra.mxu0 %v497
      %511 = vmatprep.subr.bf16.mxu0 0
      %512 = vmatpush1.bf16.msra.mxu0 %v496
      %513 = vmatprep.subr.bf16.mxu0 0
      %514 = vmatpush1.bf16.msra.mxu0 %v495
      %515 = vmatprep.subr.bf16.mxu0 0
      %516 = vmatpush1.bf16.msra.mxu0 %v494
      %517 = vmatprep.subr.bf16.mxu0 0
      %518 = vmatpush1.bf16.msra.mxu0 %v493
      %519 = vmatprep.subr.bf16.mxu0 0
      %520 = vmatpush1.bf16.msra.mxu0 %v492
      %521 = vmatprep.subr.bf16.mxu0 0
      %522 = vmatpush1.bf16.msra.mxu0 %v491
      %523 = vmatprep.subr.bf16.mxu0 0
      %524 = vmatpush2.bf16.msra.mxu0 0
      %525 = vmatprep.subr.bf16.mxu0 0
      %526 = vmatpush2.bf16.msra.mxu0 0
      %527 = vmatprep.subr.bf16.mxu0 0
      %528 = vmatpush2.bf16.msra.mxu0 0
      %529 = vmatprep.subr.bf16.mxu0 0
      %530 = vmatpush2.bf16.msra.mxu0 0
      %531 = vmatprep.subr.bf16.mxu0 0
      %532 = vmatpush2.bf16.msra.mxu0 0
      %533 = vmatprep.subr.bf16.mxu0 0
      %534 = vmatpush2.bf16.msra.mxu0 0
      %535 = vmatprep.subr.bf16.mxu0 0
      %536 = vmatpush2.bf16.msra.mxu0 0
      %537 = vmatprep.subr.bf16.mxu0 0
      %538 = vmatpush2.bf16.msra.mxu0 0
      %539 = vmatprep.mubr.bf16.mxu0 0
      %540 = vmatmul.mubr.bf16.gmra.mxu0 %v427
      %v541 = vpop.f32.mrf.mxu0
      %v542 = vadd.f32 0.0, %v541
      %v543 = vpop.f32.mrf.mxu0
      %v544 = vpop.f32.mrf.mxu0
      %v545 = vadd.f32 0.0, %v544
      %v546 = vpop.f32.mrf.mxu0
      %547 = vmatprep.mubr.bf16.mxu0 0
      %548 = vmatmul.mubr.bf16.gmra.mxu0 %v428
      %v549 = vpop.f32.mrf.mxu0
      %v550 = vadd.f32 0.0, %v549
      %v551 = vpop.f32.mrf.mxu0
      %v552 = vpop.f32.mrf.mxu0
      %v553 = vadd.f32 0.0, %v552
      %v554 = vpop.f32.mrf.mxu0
      %555 = vmatprep.mubr.bf16.mxu0 0
      %556 = vmatmul.mubr.bf16.gmra.mxu0 %v429
      %v557 = vpop.f32.mrf.mxu0
      %v558 = vadd.f32 0.0, %v557
      %v559 = vpop.f32.mrf.mxu0
      %v560 = vpop.f32.mrf.mxu0
      %v561 = vadd.f32 0.0, %v560
      %v562 = vpop.f32.mrf.mxu0
      %563 = vmatprep.mubr.bf16.mxu0 0
      %564 = vmatmul.mubr.bf16.gmra.mxu0 %v430
      %v565 = vpop.f32.mrf.mxu0
      %v566 = vadd.f32 0.0, %v565
      %v567 = vpop.f32.mrf.mxu0
      %v568 = vpop.f32.mrf.mxu0
      %v569 = vadd.f32 0.0, %v568
      %v570 = vpop.f32.mrf.mxu0
      %571 = vmatprep.mubr.bf16.mxu0 0
      %572 = vmatmul.mubr.bf16.gmra.mxu0 %v431
      %v573 = vpop.f32.mrf.mxu0
      %v574 = vadd.f32 0.0, %v573
      %v575 = vpop.f32.mrf.mxu0
      %v576 = vpop.f32.mrf.mxu0
      %v577 = vadd.f32 0.0, %v576
      %v578 = vpop.f32.mrf.mxu0
      %579 = vmatprep.mubr.bf16.mxu0 0
      %580 = vmatmul.mubr.bf16.gmra.mxu0 %v432
      %v581 = vpop.f32.mrf.mxu0
      %v582 = vadd.f32 0.0, %v581
      %v583 = vpop.f32.mrf.mxu0
      %v584 = vpop.f32.mrf.mxu0
      %v585 = vadd.f32 0.0, %v584
      %v586 = vpop.f32.mrf.mxu0
      %587 = vmatprep.mubr.bf16.mxu0 0
      %588 = vmatmul.mubr.bf16.gmra.mxu0 %v433
      %v589 = vpop.f32.mrf.mxu0
      %v590 = vadd.f32 0.0, %v589
      %v591 = vpop.f32.mrf.mxu0
      %v592 = vpop.f32.mrf.mxu0
      %v593 = vadd.f32 0.0, %v592
      %v594 = vpop.f32.mrf.mxu0
      %595 = vmatprep.mubr.bf16.mxu0 0
      %596 = vmatmul.mubr.bf16.gmra.mxu0 %v434
      %v597 = vpop.f32.mrf.mxu0
      %v598 = vadd.f32 0.0, %v597
      %v599 = vpop.f32.mrf.mxu0
      %v600 = vpop.f32.mrf.mxu0
      %v601 = vadd.f32 0.0, %v600
      %v602 = vpop.f32.mrf.mxu0
      %603 = vmatprep.mubr.bf16.mxu0 0
      %604 = vmatmul.mubr.bf16.gmra.mxu0 %v435
      %v605 = vpop.f32.mrf.mxu0
      %v606 = vadd.f32 0.0, %v605
      %v607 = vpop.f32.mrf.mxu0
      %v608 = vpop.f32.mrf.mxu0
      %v609 = vadd.f32 0.0, %v608
      %v610 = vpop.f32.mrf.mxu0
      %611 = vmatprep.mubr.bf16.mxu0 0
      %612 = vmatmul.mubr.bf16.gmra.mxu0 %v436
      %v613 = vpop.f32.mrf.mxu0
      %v614 = vadd.f32 0.0, %v613
      %v615 = vpop.f32.mrf.mxu0
      %v616 = vpop.f32.mrf.mxu0
      %v617 = vadd.f32 0.0, %v616
      %v618 = vpop.f32.mrf.mxu0
      %619 = vmatprep.mubr.bf16.mxu0 0
      %620 = vmatmul.mubr.bf16.gmra.mxu0 %v437
      %v621 = vpop.f32.mrf.mxu0
      %v622 = vadd.f32 0.0, %v621
      %v623 = vpop.f32.mrf.mxu0
      %v624 = vpop.f32.mrf.mxu0
      %v625 = vadd.f32 0.0, %v624
      %v626 = vpop.f32.mrf.mxu0
      %627 = vmatprep.mubr.bf16.mxu0 0
      %628 = vmatmul.mubr.bf16.gmra.mxu0 %v438
      %v629 = vpop.f32.mrf.mxu0
      %v630 = vadd.f32 0.0, %v629
      %v631 = vpop.f32.mrf.mxu0
      %v632 = vpop.f32.mrf.mxu0
      %v633 = vadd.f32 0.0, %v632
      %v634 = vpop.f32.mrf.mxu0
      %635 = vmatprep.mubr.bf16.mxu0 0
      %636 = vmatmul.mubr.bf16.gmra.mxu0 %v439
      %v637 = vpop.f32.mrf.mxu0
      %v638 = vadd.f32 0.0, %v637
      %v639 = vpop.f32.mrf.mxu0
      %v640 = vpop.f32.mrf.mxu0
      %v641 = vadd.f32 0.0, %v640
      %v642 = vpop.f32.mrf.mxu0
      %643 = vmatprep.mubr.bf16.mxu0 0
      %644 = vmatmul.mubr.bf16.gmra.mxu0 %v440
      %v645 = vpop.f32.mrf.mxu0
      %v646 = vadd.f32 0.0, %v645
      %v647 = vpop.f32.mrf.mxu0
      %v648 = vpop.f32.mrf.mxu0
      %v649 = vadd.f32 0.0, %v648
      %v650 = vpop.f32.mrf.mxu0
      %651 = vmatprep.mubr.bf16.mxu0 0
      %652 = vmatmul.mubr.bf16.gmra.mxu0 %v441
      %v653 = vpop.f32.mrf.mxu0
      %v654 = vadd.f32 0.0, %v653
      %v655 = vpop.f32.mrf.mxu0
      %v656 = vpop.f32.mrf.mxu0
      %v657 = vadd.f32 0.0, %v656
      %v658 = vpop.f32.mrf.mxu0
      %659 = vmatprep.mubr.bf16.mxu0 0
      %660 = vmatmul.mubr.bf16.gmra.mxu0 %v442
      %v661 = vpop.f32.mrf.mxu0
      %v662 = vadd.f32 0.0, %v661
      %v663 = vpop.f32.mrf.mxu0
      %v664 = vpop.f32.mrf.mxu0
      %v665 = vadd.f32 0.0, %v664
      %v666 = vpop.f32.mrf.mxu0
      %667 = vdwg.mxu0
      %v668 = vadd.f32 %v283, %v542
      %v669 = vadd.f32 %v284, %v545
      %v670 = vadd.f32 %v285, %v550
      %v671 = vadd.f32 %v286, %v553
      %v672 = vadd.f32 %v287, %v558
      %v673 = vadd.f32 %v288, %v561
      %v674 = vadd.f32 %v289, %v566
      %v675 = vadd.f32 %v290, %v569
      %v676 = vadd.f32 %v291, %v574
      %v677 = vadd.f32 %v292, %v577
      %v678 = vadd.f32 %v293, %v582
      %v679 = vadd.f32 %v294, %v585
      %v680 = vadd.f32 %v295, %v590
      %v681 = vadd.f32 %v296, %v593
      %v682 = vadd.f32 %v297, %v598
      %v683 = vadd.f32 %v298, %v601
      %v684 = vadd.f32 %v299, %v606
      %v685 = vadd.f32 %v300, %v609
      %v686 = vadd.f32 %v301, %v614
      %v687 = vadd.f32 %v302, %v617
      %v688 = vadd.f32 %v303, %v622
      %v689 = vadd.f32 %v304, %v625
      %v690 = vadd.f32 %v305, %v630
      %v691 = vadd.f32 %v306, %v633
      %v692 = vadd.f32 %v307, %v638
      %v693 = vadd.f32 %v308, %v641
      %v694 = vadd.f32 %v309, %v646
      %v695 = vadd.f32 %v310, %v649
      %v696 = vadd.f32 %v311, %v654
      %v697 = vadd.f32 %v312, %v657
      %v698 = vadd.f32 %v313, %v662
      %v699 = vadd.f32 %v314, %v665
      %700 = vst [vmem:[#allocation2] sm:$0xff] %v668
      %701 = vst [vmem:[#allocation2 + $0x8] sm:$0xff] %v669
      %702 = vst [vmem:[#allocation2 + $0x10] sm:$0xff] %v670
      %703 = vst [vmem:[#allocation2 + $0x18] sm:$0xff] %v671
      %704 = vst [vmem:[#allocation2 + $0x20] sm:$0xff] %v672
      %705 = vst [vmem:[#allocation2 + $0x28] sm:$0xff] %v673
      %706 = vst [vmem:[#allocation2 + $0x30] sm:$0xff] %v674
      %707 = vst [vmem:[#allocation2 + $0x38] sm:$0xff] %v675
      %708 = vst [vmem:[#allocation2 + $0x40] sm:$0xff] %v676
      %709 = vst [vmem:[#allocation2 + $0x48] sm:$0xff] %v677
      %710 = vst [vmem:[#allocation2 + $0x50] sm:$0xff] %v678
      %711 = vst [vmem:[#allocation2 + $0x58] sm:$0xff] %v679
      %712 = vst [vmem:[#allocation2 + $0x60] sm:$0xff] %v680
      %713 = vst [vmem:[#allocation2 + $0x68] sm:$0xff] %v681
      %714 = vst [vmem:[#allocation2 + $0x70] sm:$0xff] %v682
      %715 = vst [vmem:[#allocation2 + $0x78] sm:$0xff] %v683
      %716 = vst [vmem:[#allocation2 + $0x80] sm:$0xff] %v684
      %717 = vst [vmem:[#allocation2 + $0x88] sm:$0xff] %v685
      %718 = vst [vmem:[#allocation2 + $0x90] sm:$0xff] %v686
      %719 = vst [vmem:[#allocation2 + $0x98] sm:$0xff] %v687
      %720 = vst [vmem:[#allocation2 + $0xa0] sm:$0xff] %v688
      %721 = vst [vmem:[#allocation2 + $0xa8] sm:$0xff] %v689
      %722 = vst [vmem:[#allocation2 + $0xb0] sm:$0xff] %v690
      %723 = vst [vmem:[#allocation2 + $0xb8] sm:$0xff] %v691
      %724 = vst [vmem:[#allocation2 + $0xc0] sm:$0xff] %v692
      %725 = vst [vmem:[#allocation2 + $0xc8] sm:$0xff] %v693
      %726 = vst [vmem:[#allocation2 + $0xd0] sm:$0xff] %v694
      %727 = vst [vmem:[#allocation2 + $0xd8] sm:$0xff] %v695
      %728 = vst [vmem:[#allocation2 + $0xe0] sm:$0xff] %v696
      %729 = vst [vmem:[#allocation2 + $0xe8] sm:$0xff] %v697
      %730 = vst [vmem:[#allocation2 + $0xf0] sm:$0xff] %v698
      %731 = vst [vmem:[#allocation2 + $0xf8] sm:$0xff] %v699
      // Predicated region
      $region41: #{patch_discriminator_forward.5} parent=35 // pred_check
        %p732 = pneg %p247
      $region42: #{patch_discriminator_forward.5} parent=35 // pred_check_branch
        %734 = sbr.rel (%p732) target = $region44
      $region43: #{patch_discriminator_forward.5} parent=35 // pred_region
        %v735 = vld [vmem:[#allocation2] sm:$0xff]
        %v736 = vld [vmem:[#allocation2 + $0x8] sm:$0xff]
        %v737 = vld [vmem:[#allocation2 + $0x10] sm:$0xff]
        %v738 = vld [vmem:[#allocation2 + $0x18] sm:$0xff]
        %v739 = vld [vmem:[#allocation2 + $0x20] sm:$0xff]
        %v740 = vld [vmem:[#allocation2 + $0x28] sm:$0xff]
        %v741 = vld [vmem:[#allocation2 + $0x30] sm:$0xff]
        %v742 = vld [vmem:[#allocation2 + $0x38] sm:$0xff]
        %v743 = vld [vmem:[#allocation2 + $0x40] sm:$0xff]
        %v744 = vld [vmem:[#allocation2 + $0x48] sm:$0xff]
        %v745 = vld [vmem:[#allocation2 + $0x50] sm:$0xff]
        %v746 = vld [vmem:[#allocation2 + $0x58] sm:$0xff]
        %v747 = vld [vmem:[#allocation2 + $0x60] sm:$0xff]
        %v748 = vld [vmem:[#allocation2 + $0x68] sm:$0xff]
        %v749 = vld [vmem:[#allocation2 + $0x70] sm:$0xff]
        %v750 = vld [vmem:[#allocation2 + $0x78] sm:$0xff]
        %v751 = vld [vmem:[#allocation2 + $0x80] sm:$0xff]
        %v752 = vld [vmem:[#allocation2 + $0x88] sm:$0xff]
        %v753 = vld [vmem:[#allocation2 + $0x90] sm:$0xff]
        %v754 = vld [vmem:[#allocation2 + $0x98] sm:$0xff]
        %v755 = vld [vmem:[#allocation2 + $0xa0] sm:$0xff]
        %v756 = vld [vmem:[#allocation2 + $0xa8] sm:$0xff]
        %v757 = vld [vmem:[#allocation2 + $0xb0] sm:$0xff]
        %v758 = vld [vmem:[#allocation2 + $0xb8] sm:$0xff]
        %v759 = vld [vmem:[#allocation2 + $0xc0] sm:$0xff]
        %v760 = vld [vmem:[#allocation2 + $0xc8] sm:$0xff]
        %v761 = vld [vmem:[#allocation2 + $0xd0] sm:$0xff]
        %v762 = vld [vmem:[#allocation2 + $0xd8] sm:$0xff]
        %v763 = vld [vmem:[#allocation2 + $0xe0] sm:$0xff]
        %v764 = vld [vmem:[#allocation2 + $0xe8] sm:$0xff]
        %v765 = vld [vmem:[#allocation2 + $0xf0] sm:$0xff]
        %v766 = vld [vmem:[#allocation2 + $0xf8] sm:$0xff]
        %v767 = vld [vmem:[%s2] sm:$0x1]
        %v769 = vlaneseq
        %v770 = vshrl.u32 %v769, 7
        %v771 = vsub.s32 0, %v770
        %v772 = vrot.slane %v767, %v771
        %v774 = vmul.f32 %v735, %v772
        %v775 = vmul.f32 %v736, %v772
        %v776 = vmul.f32 %v737, %v772
        %v777 = vmul.f32 %v738, %v772
        %v778 = vmul.f32 %v739, %v772
        %v779 = vmul.f32 %v740, %v772
        %v780 = vmul.f32 %v741, %v772
        %v781 = vmul.f32 %v742, %v772
        %v782 = vmul.f32 %v743, %v772
        %v783 = vmul.f32 %v744, %v772
        %v784 = vmul.f32 %v745, %v772
        %v785 = vmul.f32 %v746, %v772
        %v786 = vmul.f32 %v747, %v772
        %v787 = vmul.f32 %v748, %v772
        %v788 = vmul.f32 %v749, %v772
        %v789 = vmul.f32 %v750, %v772
        %v790 = vmul.f32 %v751, %v772
        %v791 = vmul.f32 %v752, %v772
        %v792 = vmul.f32 %v753, %v772
        %v793 = vmul.f32 %v754, %v772
        %v794 = vmul.f32 %v755, %v772
        %v795 = vmul.f32 %v756, %v772
        %v796 = vmul.f32 %v757, %v772
        %v797 = vmul.f32 %v758, %v772
        %v798 = vmul.f32 %v759, %v772
        %v799 = vmul.f32 %v760, %v772
        %v800 = vmul.f32 %v761, %v772
        %v801 = vmul.f32 %v762, %v772
        %v802 = vmul.f32 %v763, %v772
        %v803 = vmul.f32 %v764, %v772
        %v804 = vmul.f32 %v765, %v772
        %v805 = vmul.f32 %v766, %v772
        %v806 = vld [vmem:[%s3] sm:$0x1]
        %v808 = vlaneseq
        %v809 = vshrl.u32 %v808, 7
        %v810 = vsub.s32 0, %v809
        %v811 = vrot.slane %v806, %v810
        %v813 = vadd.f32 %v774, %v811
        %v814 = vadd.f32 %v775, %v811
        %v815 = vadd.f32 %v776, %v811
        %v816 = vadd.f32 %v777, %v811
        %v817 = vadd.f32 %v778, %v811
        %v818 = vadd.f32 %v779, %v811
        %v819 = vadd.f32 %v780, %v811
        %v820 = vadd.f32 %v781, %v811
        %v821 = vadd.f32 %v782, %v811
        %v822 = vadd.f32 %v783, %v811
        %v823 = vadd.f32 %v784, %v811
        %v824 = vadd.f32 %v785, %v811
        %v825 = vadd.f32 %v786, %v811
        %v826 = vadd.f32 %v787, %v811
        %v827 = vadd.f32 %v788, %v811
        %v828 = vadd.f32 %v789, %v811
        %v829 = vadd.f32 %v790, %v811
        %v830 = vadd.f32 %v791, %v811
        %v831 = vadd.f32 %v792, %v811
        %v832 = vadd.f32 %v793, %v811
        %v833 = vadd.f32 %v794, %v811
        %v834 = vadd.f32 %v795, %v811
        %v835 = vadd.f32 %v796, %v811
        %v836 = vadd.f32 %v797, %v811
        %v837 = vadd.f32 %v798, %v811
        %v838 = vadd.f32 %v799, %v811
        %v839 = vadd.f32 %v800, %v811
        %v840 = vadd.f32 %v801, %v811
        %v841 = vadd.f32 %v802, %v811
        %v842 = vadd.f32 %v803, %v811
        %v843 = vadd.f32 %v804, %v811
        %v844 = vadd.f32 %v805, %v811
        %vm845 = vcmp.gt.f32.partialorder %v813, 0.0
        %vm846 = vcmp.gt.f32.partialorder %v814, 0.0
        %vm847 = vcmp.gt.f32.partialorder %v815, 0.0
        %vm848 = vcmp.gt.f32.partialorder %v816, 0.0
        %vm849 = vcmp.gt.f32.partialorder %v817, 0.0
        %vm850 = vcmp.gt.f32.partialorder %v818, 0.0
        %vm851 = vcmp.gt.f32.partialorder %v819, 0.0
        %vm852 = vcmp.gt.f32.partialorder %v820, 0.0
        %vm853 = vcmp.gt.f32.partialorder %v821, 0.0
        %vm854 = vcmp.gt.f32.partialorder %v822, 0.0
        %vm855 = vcmp.gt.f32.partialorder %v823, 0.0
        %vm856 = vcmp.gt.f32.partialorder %v824, 0.0
        %vm857 = vcmp.gt.f32.partialorder %v825, 0.0
        %vm858 = vcmp.gt.f32.partialorder %v826, 0.0
        %vm859 = vcmp.gt.f32.partialorder %v827, 0.0
        %vm860 = vcmp.gt.f32.partialorder %v828, 0.0
        %vm861 = vcmp.gt.f32.partialorder %v829, 0.0
        %vm862 = vcmp.gt.f32.partialorder %v830, 0.0
        %vm863 = vcmp.gt.f32.partialorder %v831, 0.0
        %vm864 = vcmp.gt.f32.partialorder %v832, 0.0
        %vm865 = vcmp.gt.f32.partialorder %v833, 0.0
        %vm866 = vcmp.gt.f32.partialorder %v834, 0.0
        %vm867 = vcmp.gt.f32.partialorder %v835, 0.0
        %vm868 = vcmp.gt.f32.partialorder %v836, 0.0
        %vm869 = vcmp.gt.f32.partialorder %v837, 0.0
        %vm870 = vcmp.gt.f32.partialorder %v838, 0.0
        %vm871 = vcmp.gt.f32.partialorder %v839, 0.0
        %vm872 = vcmp.gt.f32.partialorder %v840, 0.0
        %vm873 = vcmp.gt.f32.partialorder %v841, 0.0
        %vm874 = vcmp.gt.f32.partialorder %v842, 0.0
        %vm875 = vcmp.gt.f32.partialorder %v843, 0.0
        %vm876 = vcmp.gt.f32.partialorder %v844, 0.0
        %v877 = vmul.f32 %v813, 0.2
        %v878 = vmul.f32 %v814, 0.2
        %v879 = vmul.f32 %v815, 0.2
        %v880 = vmul.f32 %v816, 0.2
        %v881 = vmul.f32 %v817, 0.2
        %v882 = vmul.f32 %v818, 0.2
        %v883 = vmul.f32 %v819, 0.2
        %v884 = vmul.f32 %v820, 0.2
        %v885 = vmul.f32 %v821, 0.2
        %v886 = vmul.f32 %v822, 0.2
        %v887 = vmul.f32 %v823, 0.2
        %v888 = vmul.f32 %v824, 0.2
        %v889 = vmul.f32 %v825, 0.2
        %v890 = vmul.f32 %v826, 0.2
        %v891 = vmul.f32 %v827, 0.2
        %v892 = vmul.f32 %v828, 0.2
        %v893 = vmul.f32 %v829, 0.2
        %v894 = vmul.f32 %v830, 0.2
        %v895 = vmul.f32 %v831, 0.2
        %v896 = vmul.f32 %v832, 0.2
        %v897 = vmul.f32 %v833, 0.2
        %v898 = vmul.f32 %v834, 0.2
        %v899 = vmul.f32 %v835, 0.2
        %v900 = vmul.f32 %v836, 0.2
        %v901 = vmul.f32 %v837, 0.2
        %v902 = vmul.f32 %v838, 0.2
        %v903 = vmul.f32 %v839, 0.2
        %v904 = vmul.f32 %v840, 0.2
        %v905 = vmul.f32 %v841, 0.2
        %v906 = vmul.f32 %v842, 0.2
        %v907 = vmul.f32 %v843, 0.2
        %v908 = vmul.f32 %v844, 0.2
        %v909 = vsel %vm845, %v813, %v877
        %v910 = vsel %vm846, %v814, %v878
        %v911 = vsel %vm847, %v815, %v879
        %v912 = vsel %vm848, %v816, %v880
        %v913 = vsel %vm849, %v817, %v881
        %v914 = vsel %vm850, %v818, %v882
        %v915 = vsel %vm851, %v819, %v883
        %v916 = vsel %vm852, %v820, %v884
        %v917 = vsel %vm853, %v821, %v885
        %v918 = vsel %vm854, %v822, %v886
        %v919 = vsel %vm855, %v823, %v887
        %v920 = vsel %vm856, %v824, %v888
        %v921 = vsel %vm857, %v825, %v889
        %v922 = vsel %vm858, %v826, %v890
        %v923 = vsel %vm859, %v827, %v891
        %v924 = vsel %vm860, %v828, %v892
        %v925 = vsel %vm861, %v829, %v893
        %v926 = vsel %vm862, %v830, %v894
        %v927 = vsel %vm863, %v831, %v895
        %v928 = vsel %vm864, %v832, %v896
        %v929 = vsel %vm865, %v833, %v897
        %v930 = vsel %vm866, %v834, %v898
        %v931 = vsel %vm867, %v835, %v899
        %v932 = vsel %vm868, %v836, %v900
        %v933 = vsel %vm869, %v837, %v901
        %v934 = vsel %vm870, %v838, %v902
        %v935 = vsel %vm871, %v839, %v903
        %v936 = vsel %vm872, %v840, %v904
        %v937 = vsel %vm873, %v841, %v905
        %v938 = vsel %vm874, %v842, %v906
        %v939 = vsel %vm875, %v843, %v907
        %v940 = vsel %vm876, %v844, %v908
        %941 = vst [vmem:[%s244] sm:$0xff] %v909
        %942 = vst [vmem:[%s244 + $0x8] sm:$0xff] %v910
        %943 = vst [vmem:[%s244 + $0x10] sm:$0xff] %v911
        %944 = vst [vmem:[%s244 + $0x18] sm:$0xff] %v912
        %945 = vst [vmem:[%s244 + $0x20] sm:$0xff] %v913
        %946 = vst [vmem:[%s244 + $0x28] sm:$0xff] %v914
        %947 = vst [vmem:[%s244 + $0x30] sm:$0xff] %v915
        %948 = vst [vmem:[%s244 + $0x38] sm:$0xff] %v916
        %949 = vst [vmem:[%s244 + $0x40] sm:$0xff] %v917
        %950 = vst [vmem:[%s244 + $0x48] sm:$0xff] %v918
        %951 = vst [vmem:[%s244 + $0x50] sm:$0xff] %v919
        %952 = vst [vmem:[%s244 + $0x58] sm:$0xff] %v920
        %953 = vst [vmem:[%s244 + $0x60] sm:$0xff] %v921
        %954 = vst [vmem:[%s244 + $0x68] sm:$0xff] %v922
        %955 = vst [vmem:[%s244 + $0x70] sm:$0xff] %v923
        %956 = vst [vmem:[%s244 + $0x78] sm:$0xff] %v924
        %957 = vst [vmem:[%s244 + $0x80] sm:$0xff] %v925
        %958 = vst [vmem:[%s244 + $0x88] sm:$0xff] %v926
        %959 = vst [vmem:[%s244 + $0x90] sm:$0xff] %v927
        %960 = vst [vmem:[%s244 + $0x98] sm:$0xff] %v928
        %961 = vst [vmem:[%s244 + $0xa0] sm:$0xff] %v929
        %962 = vst [vmem:[%s244 + $0xa8] sm:$0xff] %v930
        %963 = vst [vmem:[%s244 + $0xb0] sm:$0xff] %v931
        %964 = vst [vmem:[%s244 + $0xb8] sm:$0xff] %v932
        %965 = vst [vmem:[%s244 + $0xc0] sm:$0xff] %v933
        %966 = vst [vmem:[%s244 + $0xc8] sm:$0xff] %v934
        %967 = vst [vmem:[%s244 + $0xd0] sm:$0xff] %v935
        %968 = vst [vmem:[%s244 + $0xd8] sm:$0xff] %v936
        %969 = vst [vmem:[%s244 + $0xe0] sm:$0xff] %v937
        %970 = vst [vmem:[%s244 + $0xe8] sm:$0xff] %v938
        %971 = vst [vmem:[%s244 + $0xf0] sm:$0xff] %v939
        %972 = vst [vmem:[%s244 + $0xf8] sm:$0xff] %v940
      $region44: #{patch_discriminator_forward.5} parent=35 // pred_fallthru
        _
      %s973 = smul.u32 32, %s19
      %p974 = scmp.lt.s32.totalorder %s973, 63
      %s975 = scalar_select %p974, %s973, 63
      %s976 = smul.addr %s975, 8
      %s977 = scalar_lea.vmem %s4, %s976
      // Predicated region
      $region45: #{patch_discriminator_forward.5} parent=35 // pred_check
        %p978 = pneg %p141
      $region46: #{patch_discriminator_forward.5} parent=35 // pred_check_branch
        %980 = sbr.rel (%p978) target = $region48
      $region47: #{patch_discriminator_forward.5} parent=35 // pred_region
        %s981 = smul.u32 32, %s19
      $region48: #{patch_discriminator_forward.5} parent=35 // pred_fallthru
        _
    $region36: #{patch_discriminator_forward.5} parent=5 // pred_fallthru
      _
    %p982 = scmp.le.s32.totalorder 2, %s10
    // Predicated region
    $region49: #{patch_discriminator_forward.5} parent=5 // pred_check
      %p983 = pneg %p982
    $region50: #{patch_discriminator_forward.5} parent=5 // pred_check_branch
      %985 = sbr.rel (%p983) target = $region52
    $region51: #{patch_discriminator_forward.5} parent=5 // pred_region
      %s986 = ssub.s32 %s10, 2
      // Predicated region
      $region53: #{patch_discriminator_forward.5} parent=51 // pred_check
        %p987 = pneg %p147
      $region54: #{patch_discriminator_forward.5} parent=51 // pred_check_branch
        %989 = sbr.rel (%p987) target = $region56
      $region55: #{patch_discriminator_forward.5} parent=51 // pred_region
        %s990 = smul.u32 32, %s21
        %p991 = scmp.lt.s32.totalorder %s990, 63
        %s992 = scalar_select %p991, %s990, 63
        %s993 = smul.addr %s992, 8
        %s994 = scalar_lea.vmem %s4, %s993
      $region56: #{patch_discriminator_forward.5} parent=51 // pred_fallthru
        _
    $region52: #{patch_discriminator_forward.5} parent=5 // pred_fallthru
      _
  $region6: #{patch_discriminator_forward.5} parent=0 // loop_footer
    %s14 = sadd.s32 1, %s10
  $region7: #{patch_discriminator_forward.5} parent=0 // loop_footer_branch
    %9 = sbr.rel target = $region3
  $region8: #{patch_discriminator_forward.5} parent=0 // loop_exit
    _

// kernel: patch_discriminator_forward.6
$region0: #{patch_discriminator_forward.6}
  #allocation0 [shape = 'u32[]', space=smem, size = 0x4, offset = 0x4, fixed_abs, tag = 'smem constant byte address 0x4 - core index']
  #allocation1 [shape = 'u32[144,128]{1,0:T(1,128)}', space=vmem, size = 0x12000, scoped, tag = 'internal scratch']
  #allocation2 [shape = 'f32[128,128]{1,0:T(8,128)}', space=vmem, size = 0x10000, scoped, tag = 'scratch operand']
  %s0 = inlined_call_operand.vmem [shape: bf16[128,256], index: 0, kind: input, shape index: {}]
  %s1 = inlined_call_operand.vmem [shape: bf16[256,128], index: 1, kind: input, shape index: {}]
  %s2 = inlined_call_operand.vmem [shape: f32[1,128], index: 2, kind: input, shape index: {}]
  %s3 = inlined_call_operand.vmem [shape: f32[1,128], index: 3, kind: input, shape index: {}]
  %s4 = inlined_call_operand.vmem [shape: f32[128,128], index: 4, kind: output, shape index: {}]
  %s5 = sld [smem:[#allocation0]]
  $region34: #{patch_discriminator_forward.6} parent=0
    _
  %s7 = ssub.s32 1, %s5
  %s8 = scalar_select 0, %s7, %s5
  // Predicated region
  $region2: #{patch_discriminator_forward.6} parent=0 // pred_check
    _
  $region3: #{patch_discriminator_forward.6} parent=0 // pred_check_branch
    %10 = sbr.rel (0) target = $region5
  $region4: #{patch_discriminator_forward.6} parent=0 // pred_region
    _
  $region5: #{patch_discriminator_forward.6} parent=0 // pred_fallthru
    _
  // Predicated region
  $region6: #{patch_discriminator_forward.6} parent=0 // pred_check
    _
  $region7: #{patch_discriminator_forward.6} parent=0 // pred_check_branch
    %12 = sbr.rel (0) target = $region9
  $region8: #{patch_discriminator_forward.6} parent=0 // pred_region
    _
  $region9: #{patch_discriminator_forward.6} parent=0 // pred_fallthru
    _
  // Predicated region
  $region10: #{patch_discriminator_forward.6} parent=0 // pred_check
    _
  $region11: #{patch_discriminator_forward.6} parent=0 // pred_check_branch
    %14 = sbr.rel (0) target = $region13
  $region12: #{patch_discriminator_forward.6} parent=0 // pred_region
    _
  $region13: #{patch_discriminator_forward.6} parent=0 // pred_fallthru
    _
  // Predicated region
  $region14: #{patch_discriminator_forward.6} parent=0 // pred_check
    _
  $region15: #{patch_discriminator_forward.6} parent=0 // pred_check_branch
    %16 = sbr.rel (0) target = $region17
  $region16: #{patch_discriminator_forward.6} parent=0 // pred_region
    _
  $region17: #{patch_discriminator_forward.6} parent=0 // pred_fallthru
    _
  %p18 = scmp.eq.s32.totalorder 0, 0
  // Predicated region
  $region18: #{patch_discriminator_forward.6} parent=0 // pred_check
    %p19 = pneg %p18
  $region19: #{patch_discriminator_forward.6} parent=0 // pred_check_branch
    %21 = sbr.rel (%p19) target = $region21
  $region20: #{patch_discriminator_forward.6} parent=0 // pred_region
    %22 = vst [vmem:[#allocation2] sm:$0xff] 0.0
    %23 = vst [vmem:[#allocation2 + $0x8] sm:$0xff] 0.0
    %24 = vst [vmem:[#allocation2 + $0x10] sm:$0xff] 0.0
    %25 = vst [vmem:[#allocation2 + $0x18] sm:$0xff] 0.0
    %26 = vst [vmem:[#allocation2 + $0x20] sm:$0xff] 0.0
    %27 = vst [vmem:[#allocation2 + $0x28] sm:$0xff] 0.0
    %28 = vst [vmem:[#allocation2 + $0x30] sm:$0xff] 0.0
    %29 = vst [vmem:[#allocation2 + $0x38] sm:$0xff] 0.0
    %30 = vst [vmem:[#allocation2 + $0x40] sm:$0xff] 0.0
    %31 = vst [vmem:[#allocation2 + $0x48] sm:$0xff] 0.0
    %32 = vst [vmem:[#allocation2 + $0x50] sm:$0xff] 0.0
    %33 = vst [vmem:[#allocation2 + $0x58] sm:$0xff] 0.0
    %34 = vst [vmem:[#allocation2 + $0x60] sm:$0xff] 0.0
    %35 = vst [vmem:[#allocation2 + $0x68] sm:$0xff] 0.0
    %36 = vst [vmem:[#allocation2 + $0x70] sm:$0xff] 0.0
    %37 = vst [vmem:[#allocation2 + $0x78] sm:$0xff] 0.0
  $region21: #{patch_discriminator_forward.6} parent=0 // pred_fallthru
    _
  %v38 = vld [vmem:[#allocation2] sm:$0xff]
  %v39 = vld [vmem:[#allocation2 + $0x8] sm:$0xff]
  %v40 = vld [vmem:[#allocation2 + $0x10] sm:$0xff]
  %v41 = vld [vmem:[#allocation2 + $0x18] sm:$0xff]
  %v42 = vld [vmem:[#allocation2 + $0x20] sm:$0xff]
  %v43 = vld [vmem:[#allocation2 + $0x28] sm:$0xff]
  %v44 = vld [vmem:[#allocation2 + $0x30] sm:$0xff]
  %v45 = vld [vmem:[#allocation2 + $0x38] sm:$0xff]
  %v46 = vld [vmem:[#allocation2 + $0x40] sm:$0xff]
  %v47 = vld [vmem:[#allocation2 + $0x48] sm:$0xff]
  %v48 = vld [vmem:[#allocation2 + $0x50] sm:$0xff]
  %v49 = vld [vmem:[#allocation2 + $0x58] sm:$0xff]
  %v50 = vld [vmem:[#allocation2 + $0x60] sm:$0xff]
  %v51 = vld [vmem:[#allocation2 + $0x68] sm:$0xff]
  %v52 = vld [vmem:[#allocation2 + $0x70] sm:$0xff]
  %v53 = vld [vmem:[#allocation2 + $0x78] sm:$0xff]
  %v54 = vld [vmem:[%s0] sm:$0xff]
  %v55 = vld [vmem:[%s0 + $0x8] sm:$0xff]
  %v56 = vld [vmem:[%s0 + $0x10] sm:$0xff]
  %v57 = vld [vmem:[%s0 + $0x18] sm:$0xff]
  %v58 = vld [vmem:[%s0 + $0x20] sm:$0xff]
  %v59 = vld [vmem:[%s0 + $0x28] sm:$0xff]
  %v60 = vld [vmem:[%s0 + $0x30] sm:$0xff]
  %v61 = vld [vmem:[%s0 + $0x38] sm:$0xff]
  %v62 = vld [vmem:[%s0 + $0x40] sm:$0xff]
  %v63 = vld [vmem:[%s0 + $0x48] sm:$0xff]
  %v64 = vld [vmem:[%s0 + $0x50] sm:$0xff]
  %v65 = vld [vmem:[%s0 + $0x58] sm:$0xff]
  %v66 = vld [vmem:[%s0 + $0x60] sm:$0xff]
  %v67 = vld [vmem:[%s0 + $0x68] sm:$0xff]
  %v68 = vld [vmem:[%s0 + $0x70] sm:$0xff]
  %v69 = vld [vmem:[%s0 + $0x78] sm:$0xff]
  %v70 = vld [vmem:[%s1] sm:$0xf]
  %v71 = vld [vmem:[%s1 + $0x4] sm:$0xf]
  %v72 = vld [vmem:[%s1 + $0x8] sm:$0xf]
  %v73 = vld [vmem:[%s1 + $0xc] sm:$0xf]
  %v74 = vld [vmem:[%s1 + $0x10] sm:$0xf]
  %v75 = vld [vmem:[%s1 + $0x14] sm:$0xf]
  %v76 = vld [vmem:[%s1 + $0x18] sm:$0xf]
  %v77 = vld [vmem:[%s1 + $0x1c] sm:$0xf]
  %v78 = vld [vmem:[%s1 + $0x20] sm:$0xf]
  %v79 = vld [vmem:[%s1 + $0x24] sm:$0xf]
  %v80 = vld [vmem:[%s1 + $0x28] sm:$0xf]
  %v81 = vld [vmem:[%s1 + $0x2c] sm:$0xf]
  %v82 = vld [vmem:[%s1 + $0x30] sm:$0xf]
  %v83 = vld [vmem:[%s1 + $0x34] sm:$0xf]
  %v84 = vld [vmem:[%s1 + $0x38] sm:$0xf]
  %v85 = vld [vmem:[%s1 + $0x3c] sm:$0xf]
  %v86 = vld [vmem:[%s1 + $0x40] sm:$0xf]
  %v87 = vld [vmem:[%s1 + $0x44] sm:$0xf]
  %v88 = vld [vmem:[%s1 + $0x48] sm:$0xf]
  %v89 = vld [vmem:[%s1 + $0x4c] sm:$0xf]
  %v90 = vld [vmem:[%s1 + $0x50] sm:$0xf]
  %v91 = vld [vmem:[%s1 + $0x54] sm:$0xf]
  %v92 = vld [vmem:[%s1 + $0x58] sm:$0xf]
  %v93 = vld [vmem:[%s1 + $0x5c] sm:$0xf]
  %v94 = vld [vmem:[%s1 + $0x60] sm:$0xf]
  %v95 = vld [vmem:[%s1 + $0x64] sm:$0xf]
  %v96 = vld [vmem:[%s1 + $0x68] sm:$0xf]
  %v97 = vld [vmem:[%s1 + $0x6c] sm:$0xf]
  %v98 = vld [vmem:[%s1 + $0x70] sm:$0xf]
  %v99 = vld [vmem:[%s1 + $0x74] sm:$0xf]
  %v100 = vld [vmem:[%s1 + $0x78] sm:$0xf]
  %v101 = vld [vmem:[%s1 + $0x7c] sm:$0xf]
  %v118 = vunpack.c.l.b16 %v54
  %v119 = vunpack.c.h.b16 %v54
  %v120 = vunpack.c.l.b16 %v55
  %v121 = vunpack.c.h.b16 %v55
  %v122 = vunpack.c.l.b16 %v56
  %v123 = vunpack.c.h.b16 %v56
  %v124 = vunpack.c.l.b16 %v57
  %v125 = vunpack.c.h.b16 %v57
  %v126 = vunpack.c.l.b16 %v58
  %v127 = vunpack.c.h.b16 %v58
  %v128 = vunpack.c.l.b16 %v59
  %v129 = vunpack.c.h.b16 %v59
  %v130 = vunpack.c.l.b16 %v60
  %v131 = vunpack.c.h.b16 %v60
  %v132 = vunpack.c.l.b16 %v61
  %v133 = vunpack.c.h.b16 %v61
  %v134 = vunpack.c.l.b16 %v62
  %v135 = vunpack.c.h.b16 %v62
  %v136 = vunpack.c.l.b16 %v63
  %v137 = vunpack.c.h.b16 %v63
  %v138 = vunpack.c.l.b16 %v64
  %v139 = vunpack.c.h.b16 %v64
  %v140 = vunpack.c.l.b16 %v65
  %v141 = vunpack.c.h.b16 %v65
  %v142 = vunpack.c.l.b16 %v66
  %v143 = vunpack.c.h.b16 %v66
  %v144 = vunpack.c.l.b16 %v67
  %v145 = vunpack.c.h.b16 %v67
  %v146 = vunpack.c.l.b16 %v68
  %v147 = vunpack.c.h.b16 %v68
  %v148 = vunpack.c.l.b16 %v69
  %v149 = vunpack.c.h.b16 %v69
  %v150 = vpack.c.b16 %v120, %v118
  %v151 = vpack.c.b16 %v121, %v119
  %v152 = vpack.c.b16 %v124, %v122
  %v153 = vpack.c.b16 %v125, %v123
  %v154 = vpack.c.b16 %v128, %v126
  %v155 = vpack.c.b16 %v129, %v127
  %v156 = vpack.c.b16 %v132, %v130
  %v157 = vpack.c.b16 %v133, %v131
  %v158 = vpack.c.b16 %v136, %v134
  %v159 = vpack.c.b16 %v137, %v135
  %v160 = vpack.c.b16 %v140, %v138
  %v161 = vpack.c.b16 %v141, %v139
  %v162 = vpack.c.b16 %v144, %v142
  %v163 = vpack.c.b16 %v145, %v143
  %v164 = vpack.c.b16 %v148, %v146
  %v165 = vpack.c.b16 %v149, %v147
  %v214 = vunpack.c.l.b16 %v70
  %v215 = vunpack.c.l.b16 %v71
  %v216 = vunpack.c.l.b16 %v72
  %v217 = vunpack.c.l.b16 %v73
  %v218 = vunpack.c.l.b16 %v74
  %v219 = vunpack.c.l.b16 %v75
  %v220 = vunpack.c.l.b16 %v76
  %v221 = vunpack.c.l.b16 %v77
  %v222 = vunpack.c.l.b16 %v78
  %v223 = vunpack.c.l.b16 %v79
  %v224 = vunpack.c.l.b16 %v80
  %v225 = vunpack.c.l.b16 %v81
  %v226 = vunpack.c.l.b16 %v82
  %v227 = vunpack.c.l.b16 %v83
  %v228 = vunpack.c.l.b16 %v84
  %v229 = vunpack.c.l.b16 %v85
  %v230 = vunpack.c.l.b16 %v86
  %v231 = vunpack.c.l.b16 %v87
  %v232 = vunpack.c.l.b16 %v88
  %v233 = vunpack.c.l.b16 %v89
  %v234 = vunpack.c.l.b16 %v90
  %v235 = vunpack.c.l.b16 %v91
  %v236 = vunpack.c.l.b16 %v92
  %v237 = vunpack.c.l.b16 %v93
  %v238 = vunpack.c.l.b16 %v94
  %v239 = vunpack.c.l.b16 %v95
  %v240 = vunpack.c.l.b16 %v96
  %v241 = vunpack.c.l.b16 %v97
  %v242 = vunpack.c.l.b16 %v98
  %v243 = vunpack.c.l.b16 %v99
  %v244 = vunpack.c.l.b16 %v100
  %v245 = vunpack.c.l.b16 %v101
  %v246 = vpack.c.b16 %v215, %v214
  %v247 = vpack.c.b16 %v217, %v216
  %v248 = vpack.c.b16 %v219, %v218
  %v249 = vpack.c.b16 %v221, %v220
  %v250 = vpack.c.b16 %v223, %v222
  %v251 = vpack.c.b16 %v225, %v224
  %v252 = vpack.c.b16 %v227, %v226
  %v253 = vpack.c.b16 %v229, %v228
  %v254 = vpack.c.b16 %v231, %v230
  %v255 = vpack.c.b16 %v233, %v232
  %v256 = vpack.c.b16 %v235, %v234
  %v257 = vpack.c.b16 %v237, %v236
  %v258 = vpack.c.b16 %v239, %v238
  %v259 = vpack.c.b16 %v241, %v240
  %v260 = vpack.c.b16 %v243, %v242
  %v261 = vpack.c.b16 %v245, %v244
  %278 = vmatprep.subr.bf16.mxu0 0
  %279 = vmatpush1.bf16.msra.mxu0 %v253
  %280 = vmatprep.subr.bf16.mxu0 0
  %281 = vmatpush1.bf16.msra.mxu0 %v252
  %282 = vmatprep.subr.bf16.mxu0 0
  %283 = vmatpush1.bf16.msra.mxu0 %v251
  %284 = vmatprep.subr.bf16.mxu0 0
  %285 = vmatpush1.bf16.msra.mxu0 %v250
  %286 = vmatprep.subr.bf16.mxu0 0
  %287 = vmatpush1.bf16.msra.mxu0 %v249
  %288 = vmatprep.subr.bf16.mxu0 0
  %289 = vmatpush1.bf16.msra.mxu0 %v248
  %290 = vmatprep.subr.bf16.mxu0 0
  %291 = vmatpush1.bf16.msra.mxu0 %v247
  %292 = vmatprep.subr.bf16.mxu0 0
  %293 = vmatpush1.bf16.msra.mxu0 %v246
  %294 = vmatprep.subr.bf16.mxu0 0
  %295 = vmatpush2.bf16.msra.mxu0 %v261
  %296 = vmatprep.subr.bf16.mxu0 0
  %297 = vmatpush2.bf16.msra.mxu0 %v260
  %298 = vmatprep.subr.bf16.mxu0 0
  %299 = vmatpush2.bf16.msra.mxu0 %v259
  %300 = vmatprep.subr.bf16.mxu0 0
  %301 = vmatpush2.bf16.msra.mxu0 %v258
  %302 = vmatprep.subr.bf16.mxu0 0
  %303 = vmatpush2.bf16.msra.mxu0 %v257
  %304 = vmatprep.subr.bf16.mxu0 0
  %305 = vmatpush2.bf16.msra.mxu0 %v256
  %306 = vmatprep.subr.bf16.mxu0 0
  %307 = vmatpush2.bf16.msra.mxu0 %v255
  %308 = vmatprep.subr.bf16.mxu0 0
  %309 = vmatpush2.bf16.msra.mxu0 %v254
  %310 = vmatprep.mubr.bf16.mxu0 %v151
  %311 = vmatmul.mubr.bf16.gmra.mxu0 %v150
  %v312 = vpop.f32.mrf.mxu0
  %v313 = vadd.f32 0.0, %v312
  %v314 = vpop.f32.mrf.mxu0
  %v315 = vpop.f32.mrf.mxu0
  %v316 = vadd.f32 0.0, %v315
  %v317 = vpop.f32.mrf.mxu0
  %318 = vmatprep.mubr.bf16.mxu0 %v153
  %319 = vmatmul.mubr.bf16.gmra.mxu0 %v152
  %v320 = vpop.f32.mrf.mxu0
  %v321 = vadd.f32 0.0, %v320
  %v322 = vpop.f32.mrf.mxu0
  %v323 = vpop.f32.mrf.mxu0
  %v324 = vadd.f32 0.0, %v323
  %v325 = vpop.f32.mrf.mxu0
  %326 = vmatprep.mubr.bf16.mxu0 %v155
  %327 = vmatmul.mubr.bf16.gmra.mxu0 %v154
  %v328 = vpop.f32.mrf.mxu0
  %v329 = vadd.f32 0.0, %v328
  %v330 = vpop.f32.mrf.mxu0
  %v331 = vpop.f32.mrf.mxu0
  %v332 = vadd.f32 0.0, %v331
  %v333 = vpop.f32.mrf.mxu0
  %334 = vmatprep.mubr.bf16.mxu0 %v157
  %335 = vmatmul.mubr.bf16.gmra.mxu0 %v156
  %v336 = vpop.f32.mrf.mxu0
  %v337 = vadd.f32 0.0, %v336
  %v338 = vpop.f32.mrf.mxu0
  %v339 = vpop.f32.mrf.mxu0
  %v340 = vadd.f32 0.0, %v339
  %v341 = vpop.f32.mrf.mxu0
  %342 = vmatprep.mubr.bf16.mxu0 %v159
  %343 = vmatmul.mubr.bf16.gmra.mxu0 %v158
  %v344 = vpop.f32.mrf.mxu0
  %v345 = vadd.f32 0.0, %v344
  %v346 = vpop.f32.mrf.mxu0
  %v347 = vpop.f32.mrf.mxu0
  %v348 = vadd.f32 0.0, %v347
  %v349 = vpop.f32.mrf.mxu0
  %350 = vmatprep.mubr.bf16.mxu0 %v161
  %351 = vmatmul.mubr.bf16.gmra.mxu0 %v160
  %v352 = vpop.f32.mrf.mxu0
  %v353 = vadd.f32 0.0, %v352
  %v354 = vpop.f32.mrf.mxu0
  %v355 = vpop.f32.mrf.mxu0
  %v356 = vadd.f32 0.0, %v355
  %v357 = vpop.f32.mrf.mxu0
  %358 = vmatprep.mubr.bf16.mxu0 %v163
  %359 = vmatmul.mubr.bf16.gmra.mxu0 %v162
  %v360 = vpop.f32.mrf.mxu0
  %v361 = vadd.f32 0.0, %v360
  %v362 = vpop.f32.mrf.mxu0
  %v363 = vpop.f32.mrf.mxu0
  %v364 = vadd.f32 0.0, %v363
  %v365 = vpop.f32.mrf.mxu0
  %366 = vmatprep.mubr.bf16.mxu0 %v165
  %367 = vmatmul.mubr.bf16.gmra.mxu0 %v164
  %v368 = vpop.f32.mrf.mxu0
  %v369 = vadd.f32 0.0, %v368
  %v370 = vpop.f32.mrf.mxu0
  %v371 = vpop.f32.mrf.mxu0
  %v372 = vadd.f32 0.0, %v371
  %v373 = vpop.f32.mrf.mxu0
  %374 = vdwg.mxu0
  %v375 = vadd.f32 %v38, %v313
  %v376 = vadd.f32 %v39, %v316
  %v377 = vadd.f32 %v40, %v321
  %v378 = vadd.f32 %v41, %v324
  %v379 = vadd.f32 %v42, %v329
  %v380 = vadd.f32 %v43, %v332
  %v381 = vadd.f32 %v44, %v337
  %v382 = vadd.f32 %v45, %v340
  %v383 = vadd.f32 %v46, %v345
  %v384 = vadd.f32 %v47, %v348
  %v385 = vadd.f32 %v48, %v353
  %v386 = vadd.f32 %v49, %v356
  %v387 = vadd.f32 %v50, %v361
  %v388 = vadd.f32 %v51, %v364
  %v389 = vadd.f32 %v52, %v369
  %v390 = vadd.f32 %v53, %v372
  %391 = vst [vmem:[#allocation2] sm:$0xff] %v375
  %392 = vst [vmem:[#allocation2 + $0x8] sm:$0xff] %v376
  %393 = vst [vmem:[#allocation2 + $0x10] sm:$0xff] %v377
  %394 = vst [vmem:[#allocation2 + $0x18] sm:$0xff] %v378
  %395 = vst [vmem:[#allocation2 + $0x20] sm:$0xff] %v379
  %396 = vst [vmem:[#allocation2 + $0x28] sm:$0xff] %v380
  %397 = vst [vmem:[#allocation2 + $0x30] sm:$0xff] %v381
  %398 = vst [vmem:[#allocation2 + $0x38] sm:$0xff] %v382
  %399 = vst [vmem:[#allocation2 + $0x40] sm:$0xff] %v383
  %400 = vst [vmem:[#allocation2 + $0x48] sm:$0xff] %v384
  %401 = vst [vmem:[#allocation2 + $0x50] sm:$0xff] %v385
  %402 = vst [vmem:[#allocation2 + $0x58] sm:$0xff] %v386
  %403 = vst [vmem:[#allocation2 + $0x60] sm:$0xff] %v387
  %404 = vst [vmem:[#allocation2 + $0x68] sm:$0xff] %v388
  %405 = vst [vmem:[#allocation2 + $0x70] sm:$0xff] %v389
  %406 = vst [vmem:[#allocation2 + $0x78] sm:$0xff] %v390
  // Predicated region
  $region22: #{patch_discriminator_forward.6} parent=0 // pred_check
    %p407 = pneg %p18
  $region23: #{patch_discriminator_forward.6} parent=0 // pred_check_branch
    %409 = sbr.rel (%p407) target = $region25
  $region24: #{patch_discriminator_forward.6} parent=0 // pred_region
    %v410 = vld [vmem:[#allocation2] sm:$0xff]
    %v411 = vld [vmem:[#allocation2 + $0x8] sm:$0xff]
    %v412 = vld [vmem:[#allocation2 + $0x10] sm:$0xff]
    %v413 = vld [vmem:[#allocation2 + $0x18] sm:$0xff]
    %v414 = vld [vmem:[#allocation2 + $0x20] sm:$0xff]
    %v415 = vld [vmem:[#allocation2 + $0x28] sm:$0xff]
    %v416 = vld [vmem:[#allocation2 + $0x30] sm:$0xff]
    %v417 = vld [vmem:[#allocation2 + $0x38] sm:$0xff]
    %v418 = vld [vmem:[#allocation2 + $0x40] sm:$0xff]
    %v419 = vld [vmem:[#allocation2 + $0x48] sm:$0xff]
    %v420 = vld [vmem:[#allocation2 + $0x50] sm:$0xff]
    %v421 = vld [vmem:[#allocation2 + $0x58] sm:$0xff]
    %v422 = vld [vmem:[#allocation2 + $0x60] sm:$0xff]
    %v423 = vld [vmem:[#allocation2 + $0x68] sm:$0xff]
    %v424 = vld [vmem:[#allocation2 + $0x70] sm:$0xff]
    %v425 = vld [vmem:[#allocation2 + $0x78] sm:$0xff]
    %v426 = vld [vmem:[%s2] sm:$0x1]
    %v428 = vlaneseq
    %v429 = vshrl.u32 %v428, 7
    %v430 = vsub.s32 0, %v429
    %v431 = vrot.slane %v426, %v430
    %v433 = vmul.f32 %v410, %v431
    %v434 = vmul.f32 %v411, %v431
    %v435 = vmul.f32 %v412, %v431
    %v436 = vmul.f32 %v413, %v431
    %v437 = vmul.f32 %v414, %v431
    %v438 = vmul.f32 %v415, %v431
    %v439 = vmul.f32 %v416, %v431
    %v440 = vmul.f32 %v417, %v431
    %v441 = vmul.f32 %v418, %v431
    %v442 = vmul.f32 %v419, %v431
    %v443 = vmul.f32 %v420, %v431
    %v444 = vmul.f32 %v421, %v431
    %v445 = vmul.f32 %v422, %v431
    %v446 = vmul.f32 %v423, %v431
    %v447 = vmul.f32 %v424, %v431
    %v448 = vmul.f32 %v425, %v431
    %v449 = vld [vmem:[%s3] sm:$0x1]
    %v451 = vlaneseq
    %v452 = vshrl.u32 %v451, 7
    %v453 = vsub.s32 0, %v452
    %v454 = vrot.slane %v449, %v453
    %v456 = vadd.f32 %v433, %v454
    %v457 = vadd.f32 %v434, %v454
    %v458 = vadd.f32 %v435, %v454
    %v459 = vadd.f32 %v436, %v454
    %v460 = vadd.f32 %v437, %v454
    %v461 = vadd.f32 %v438, %v454
    %v462 = vadd.f32 %v439, %v454
    %v463 = vadd.f32 %v440, %v454
    %v464 = vadd.f32 %v441, %v454
    %v465 = vadd.f32 %v442, %v454
    %v466 = vadd.f32 %v443, %v454
    %v467 = vadd.f32 %v444, %v454
    %v468 = vadd.f32 %v445, %v454
    %v469 = vadd.f32 %v446, %v454
    %v470 = vadd.f32 %v447, %v454
    %v471 = vadd.f32 %v448, %v454
    %vm472 = vcmp.gt.f32.partialorder %v456, 0.0
    %vm473 = vcmp.gt.f32.partialorder %v457, 0.0
    %vm474 = vcmp.gt.f32.partialorder %v458, 0.0
    %vm475 = vcmp.gt.f32.partialorder %v459, 0.0
    %vm476 = vcmp.gt.f32.partialorder %v460, 0.0
    %vm477 = vcmp.gt.f32.partialorder %v461, 0.0
    %vm478 = vcmp.gt.f32.partialorder %v462, 0.0
    %vm479 = vcmp.gt.f32.partialorder %v463, 0.0
    %vm480 = vcmp.gt.f32.partialorder %v464, 0.0
    %vm481 = vcmp.gt.f32.partialorder %v465, 0.0
    %vm482 = vcmp.gt.f32.partialorder %v466, 0.0
    %vm483 = vcmp.gt.f32.partialorder %v467, 0.0
    %vm484 = vcmp.gt.f32.partialorder %v468, 0.0
    %vm485 = vcmp.gt.f32.partialorder %v469, 0.0
    %vm486 = vcmp.gt.f32.partialorder %v470, 0.0
    %vm487 = vcmp.gt.f32.partialorder %v471, 0.0
    %v488 = vmul.f32 %v456, 0.2
    %v489 = vmul.f32 %v457, 0.2
    %v490 = vmul.f32 %v458, 0.2
    %v491 = vmul.f32 %v459, 0.2
    %v492 = vmul.f32 %v460, 0.2
    %v493 = vmul.f32 %v461, 0.2
    %v494 = vmul.f32 %v462, 0.2
    %v495 = vmul.f32 %v463, 0.2
    %v496 = vmul.f32 %v464, 0.2
    %v497 = vmul.f32 %v465, 0.2
    %v498 = vmul.f32 %v466, 0.2
    %v499 = vmul.f32 %v467, 0.2
    %v500 = vmul.f32 %v468, 0.2
    %v501 = vmul.f32 %v469, 0.2
    %v502 = vmul.f32 %v470, 0.2
    %v503 = vmul.f32 %v471, 0.2
    %v504 = vsel %vm472, %v456, %v488
    %v505 = vsel %vm473, %v457, %v489
    %v506 = vsel %vm474, %v458, %v490
    %v507 = vsel %vm475, %v459, %v491
    %v508 = vsel %vm476, %v460, %v492
    %v509 = vsel %vm477, %v461, %v493
    %v510 = vsel %vm478, %v462, %v494
    %v511 = vsel %vm479, %v463, %v495
    %v512 = vsel %vm480, %v464, %v496
    %v513 = vsel %vm481, %v465, %v497
    %v514 = vsel %vm482, %v466, %v498
    %v515 = vsel %vm483, %v467, %v499
    %v516 = vsel %vm484, %v468, %v500
    %v517 = vsel %vm485, %v469, %v501
    %v518 = vsel %vm486, %v470, %v502
    %v519 = vsel %vm487, %v471, %v503
    %520 = vst [vmem:[%s4] sm:$0xff] %v504
    %521 = vst [vmem:[%s4 + $0x8] sm:$0xff] %v505
    %522 = vst [vmem:[%s4 + $0x10] sm:$0xff] %v506
    %523 = vst [vmem:[%s4 + $0x18] sm:$0xff] %v507
    %524 = vst [vmem:[%s4 + $0x20] sm:$0xff] %v508
    %525 = vst [vmem:[%s4 + $0x28] sm:$0xff] %v509
    %526 = vst [vmem:[%s4 + $0x30] sm:$0xff] %v510
    %527 = vst [vmem:[%s4 + $0x38] sm:$0xff] %v511
    %528 = vst [vmem:[%s4 + $0x40] sm:$0xff] %v512
    %529 = vst [vmem:[%s4 + $0x48] sm:$0xff] %v513
    %530 = vst [vmem:[%s4 + $0x50] sm:$0xff] %v514
    %531 = vst [vmem:[%s4 + $0x58] sm:$0xff] %v515
    %532 = vst [vmem:[%s4 + $0x60] sm:$0xff] %v516
    %533 = vst [vmem:[%s4 + $0x68] sm:$0xff] %v517
    %534 = vst [vmem:[%s4 + $0x70] sm:$0xff] %v518
    %535 = vst [vmem:[%s4 + $0x78] sm:$0xff] %v519
  $region25: #{patch_discriminator_forward.6} parent=0 // pred_fallthru
    _
  // Predicated region
  $region26: #{patch_discriminator_forward.6} parent=0 // pred_check
    _
  $region27: #{patch_discriminator_forward.6} parent=0 // pred_check_branch
    %537 = sbr.rel (0) target = $region29
  $region28: #{patch_discriminator_forward.6} parent=0 // pred_region
    _
  $region29: #{patch_discriminator_forward.6} parent=0 // pred_fallthru
    _
  // Predicated region
  $region30: #{patch_discriminator_forward.6} parent=0 // pred_check
    _
  $region31: #{patch_discriminator_forward.6} parent=0 // pred_check_branch
    %539 = sbr.rel (0) target = $region33
  $region32: #{patch_discriminator_forward.6} parent=0 // pred_region
    _
  $region33: #{patch_discriminator_forward.6} parent=0 // pred_fallthru
    _

// kernel: patch_discriminator_forward.7
$region0: #{patch_discriminator_forward.7}
  #allocation0 [shape = 'u32[]', space=smem, size = 0x4, offset = 0x4, fixed_abs, tag = 'smem constant byte address 0x4 - core index']
  #allocation1 [shape = 'u32[144,128]{1,0:T(1,128)}', space=vmem, size = 0x12000, scoped, tag = 'internal scratch']
  #allocation2 [shape = 'f32[32,128]{1,0:T(8,128)}', space=vmem, size = 0x4000, scoped, tag = 'scratch operand']
  %s0 = inlined_call_operand.vmem [shape: bf16[32,512], index: 0, kind: input, shape index: {}]
  %s1 = inlined_call_operand.vmem [shape: bf16[512,128], index: 1, kind: input, shape index: {}]
  %s2 = inlined_call_operand.vmem [shape: f32[1,128], index: 2, kind: input, shape index: {}]
  %s3 = inlined_call_operand.vmem [shape: f32[1,128], index: 3, kind: input, shape index: {}]
  %s4 = inlined_call_operand.vmem [shape: f32[32,128], index: 4, kind: output, shape index: {}]
  %s5 = sld [smem:[#allocation0]]
  $region34: #{patch_discriminator_forward.7} parent=0
    _
  %s7 = ssub.s32 1, %s5
  %s8 = scalar_select 0, %s7, %s5
  // Predicated region
  $region2: #{patch_discriminator_forward.7} parent=0 // pred_check
    _
  $region3: #{patch_discriminator_forward.7} parent=0 // pred_check_branch
    %10 = sbr.rel (0) target = $region5
  $region4: #{patch_discriminator_forward.7} parent=0 // pred_region
    _
  $region5: #{patch_discriminator_forward.7} parent=0 // pred_fallthru
    _
  // Predicated region
  $region6: #{patch_discriminator_forward.7} parent=0 // pred_check
    _
  $region7: #{patch_discriminator_forward.7} parent=0 // pred_check_branch
    %12 = sbr.rel (0) target = $region9
  $region8: #{patch_discriminator_forward.7} parent=0 // pred_region
    _
  $region9: #{patch_discriminator_forward.7} parent=0 // pred_fallthru
    _
  // Predicated region
  $region10: #{patch_discriminator_forward.7} parent=0 // pred_check
    _
  $region11: #{patch_discriminator_forward.7} parent=0 // pred_check_branch
    %14 = sbr.rel (0) target = $region13
  $region12: #{patch_discriminator_forward.7} parent=0 // pred_region
    _
  $region13: #{patch_discriminator_forward.7} parent=0 // pred_fallthru
    _
  // Predicated region
  $region14: #{patch_discriminator_forward.7} parent=0 // pred_check
    _
  $region15: #{patch_discriminator_forward.7} parent=0 // pred_check_branch
    %16 = sbr.rel (0) target = $region17
  $region16: #{patch_discriminator_forward.7} parent=0 // pred_region
    _
  $region17: #{patch_discriminator_forward.7} parent=0 // pred_fallthru
    _
  %p18 = scmp.eq.s32.totalorder 0, 0
  // Predicated region
  $region18: #{patch_discriminator_forward.7} parent=0 // pred_check
    %p19 = pneg %p18
  $region19: #{patch_discriminator_forward.7} parent=0 // pred_check_branch
    %21 = sbr.rel (%p19) target = $region21
  $region20: #{patch_discriminator_forward.7} parent=0 // pred_region
    %22 = vst [vmem:[#allocation2] sm:$0xff] 0.0
    %23 = vst [vmem:[#allocation2 + $0x8] sm:$0xff] 0.0
    %24 = vst [vmem:[#allocation2 + $0x10] sm:$0xff] 0.0
    %25 = vst [vmem:[#allocation2 + $0x18] sm:$0xff] 0.0
  $region21: #{patch_discriminator_forward.7} parent=0 // pred_fallthru
    _
  %v26 = vld [vmem:[#allocation2] sm:$0xff]
  %v27 = vld [vmem:[#allocation2 + $0x8] sm:$0xff]
  %v28 = vld [vmem:[#allocation2 + $0x10] sm:$0xff]
  %v29 = vld [vmem:[#allocation2 + $0x18] sm:$0xff]
  %v30 = vld [vmem:[%s0] sm:$0xff]
  %v31 = vld [vmem:[%s0 + $0x8] sm:$0xff]
  %v32 = vld [vmem:[%s0 + $0x10] sm:$0xff]
  %v33 = vld [vmem:[%s0 + $0x18] sm:$0xff]
  %v34 = vld [vmem:[%s0 + $0x20] sm:$0xff]
  %v35 = vld [vmem:[%s0 + $0x28] sm:$0xff]
  %v36 = vld [vmem:[%s0 + $0x30] sm:$0xff]
  %v37 = vld [vmem:[%s0 + $0x38] sm:$0xff]
  %v38 = vld [vmem:[%s1] sm:$0xf]
  %v39 = vld [vmem:[%s1 + $0x4] sm:$0xf]
  %v40 = vld [vmem:[%s1 + $0x8] sm:$0xf]
  %v41 = vld [vmem:[%s1 + $0xc] sm:$0xf]
  %v42 = vld [vmem:[%s1 + $0x10] sm:$0xf]
  %v43 = vld [vmem:[%s1 + $0x14] sm:$0xf]
  %v44 = vld [vmem:[%s1 + $0x18] sm:$0xf]
  %v45 = vld [vmem:[%s1 + $0x1c] sm:$0xf]
  %v46 = vld [vmem:[%s1 + $0x20] sm:$0xf]
  %v47 = vld [vmem:[%s1 + $0x24] sm:$0xf]
  %v48 = vld [vmem:[%s1 + $0x28] sm:$0xf]
  %v49 = vld [vmem:[%s1 + $0x2c] sm:$0xf]
  %v50 = vld [vmem:[%s1 + $0x30] sm:$0xf]
  %v51 = vld [vmem:[%s1 + $0x34] sm:$0xf]
  %v52 = vld [vmem:[%s1 + $0x38] sm:$0xf]
  %v53 = vld [vmem:[%s1 + $0x3c] sm:$0xf]
  %v54 = vld [vmem:[%s1 + $0x40] sm:$0xf]
  %v55 = vld [vmem:[%s1 + $0x44] sm:$0xf]
  %v56 = vld [vmem:[%s1 + $0x48] sm:$0xf]
  %v57 = vld [vmem:[%s1 + $0x4c] sm:$0xf]
  %v58 = vld [vmem:[%s1 + $0x50] sm:$0xf]
  %v59 = vld [vmem:[%s1 + $0x54] sm:$0xf]
  %v60 = vld [vmem:[%s1 + $0x58] sm:$0xf]
  %v61 = vld [vmem:[%s1 + $0x5c] sm:$0xf]
  %v62 = vld [vmem:[%s1 + $0x60] sm:$0xf]
  %v63 = vld [vmem:[%s1 + $0x64] sm:$0xf]
  %v64 = vld [vmem:[%s1 + $0x68] sm:$0xf]
  %v65 = vld [vmem:[%s1 + $0x6c] sm:$0xf]
  %v66 = vld [vmem:[%s1 + $0x70] sm:$0xf]
  %v67 = vld [vmem:[%s1 + $0x74] sm:$0xf]
  %v68 = vld [vmem:[%s1 + $0x78] sm:$0xf]
  %v69 = vld [vmem:[%s1 + $0x7c] sm:$0xf]
  %v70 = vld [vmem:[%s1 + $0x80] sm:$0xf]
  %v71 = vld [vmem:[%s1 + $0x84] sm:$0xf]
  %v72 = vld [vmem:[%s1 + $0x88] sm:$0xf]
  %v73 = vld [vmem:[%s1 + $0x8c] sm:$0xf]
  %v74 = vld [vmem:[%s1 + $0x90] sm:$0xf]
  %v75 = vld [vmem:[%s1 + $0x94] sm:$0xf]
  %v76 = vld [vmem:[%s1 + $0x98] sm:$0xf]
  %v77 = vld [vmem:[%s1 + $0x9c] sm:$0xf]
  %v78 = vld [vmem:[%s1 + $0xa0] sm:$0xf]
  %v79 = vld [vmem:[%s1 + $0xa4] sm:$0xf]
  %v80 = vld [vmem:[%s1 + $0xa8] sm:$0xf]
  %v81 = vld [vmem:[%s1 + $0xac] sm:$0xf]
  %v82 = vld [vmem:[%s1 + $0xb0] sm:$0xf]
  %v83 = vld [vmem:[%s1 + $0xb4] sm:$0xf]
  %v84 = vld [vmem:[%s1 + $0xb8] sm:$0xf]
  %v85 = vld [vmem:[%s1 + $0xbc] sm:$0xf]
  %v86 = vld [vmem:[%s1 + $0xc0] sm:$0xf]
  %v87 = vld [vmem:[%s1 + $0xc4] sm:$0xf]
  %v88 = vld [vmem:[%s1 + $0xc8] sm:$0xf]
  %v89 = vld [vmem:[%s1 + $0xcc] sm:$0xf]
  %v90 = vld [vmem:[%s1 + $0xd0] sm:$0xf]
  %v91 = vld [vmem:[%s1 + $0xd4] sm:$0xf]
  %v92 = vld [vmem:[%s1 + $0xd8] sm:$0xf]
  %v93 = vld [vmem:[%s1 + $0xdc] sm:$0xf]
  %v94 = vld [vmem:[%s1 + $0xe0] sm:$0xf]
  %v95 = vld [vmem:[%s1 + $0xe4] sm:$0xf]
  %v96 = vld [vmem:[%s1 + $0xe8] sm:$0xf]
  %v97 = vld [vmem:[%s1 + $0xec] sm:$0xf]
  %v98 = vld [vmem:[%s1 + $0xf0] sm:$0xf]
  %v99 = vld [vmem:[%s1 + $0xf4] sm:$0xf]
  %v100 = vld [vmem:[%s1 + $0xf8] sm:$0xf]
  %v101 = vld [vmem:[%s1 + $0xfc] sm:$0xf]
  %v110 = vunpack.c.l.b16 %v30
  %v111 = vunpack.c.h.b16 %v30
  %v112 = vunpack.c.l.b16 %v31
  %v113 = vunpack.c.h.b16 %v31
  %v114 = vunpack.c.l.b16 %v32
  %v115 = vunpack.c.h.b16 %v32
  %v116 = vunpack.c.l.b16 %v33
  %v117 = vunpack.c.h.b16 %v33
  %v118 = vunpack.c.l.b16 %v34
  %v119 = vunpack.c.h.b16 %v34
  %v120 = vunpack.c.l.b16 %v35
  %v121 = vunpack.c.h.b16 %v35
  %v122 = vunpack.c.l.b16 %v36
  %v123 = vunpack.c.h.b16 %v36
  %v124 = vunpack.c.l.b16 %v37
  %v125 = vunpack.c.h.b16 %v37
  %v126 = vpack.c.b16 %v114, %v110
  %v127 = vpack.c.b16 %v115, %v111
  %v128 = vpack.c.b16 %v116, %v112
  %v129 = vpack.c.b16 %v117, %v113
  %v130 = vpack.c.b16 %v122, %v118
  %v131 = vpack.c.b16 %v123, %v119
  %v132 = vpack.c.b16 %v124, %v120
  %v133 = vpack.c.b16 %v125, %v121
  %v206 = vunpack.c.l.b16 %v38
  %v207 = vunpack.c.l.b16 %v39
  %v208 = vunpack.c.l.b16 %v40
  %v209 = vunpack.c.l.b16 %v41
  %v210 = vunpack.c.l.b16 %v42
  %v211 = vunpack.c.l.b16 %v43
  %v212 = vunpack.c.l.b16 %v44
  %v213 = vunpack.c.l.b16 %v45
  %v214 = vunpack.c.l.b16 %v46
  %v215 = vunpack.c.l.b16 %v47
  %v216 = vunpack.c.l.b16 %v48
  %v217 = vunpack.c.l.b16 %v49
  %v218 = vunpack.c.l.b16 %v50
  %v219 = vunpack.c.l.b16 %v51
  %v220 = vunpack.c.l.b16 %v52
  %v221 = vunpack.c.l.b16 %v53
  %v222 = vunpack.c.l.b16 %v54
  %v223 = vunpack.c.l.b16 %v55
  %v224 = vunpack.c.l.b16 %v56
  %v225 = vunpack.c.l.b16 %v57
  %v226 = vunpack.c.l.b16 %v58
  %v227 = vunpack.c.l.b16 %v59
  %v228 = vunpack.c.l.b16 %v60
  %v229 = vunpack.c.l.b16 %v61
  %v230 = vunpack.c.l.b16 %v62
  %v231 = vunpack.c.l.b16 %v63
  %v232 = vunpack.c.l.b16 %v64
  %v233 = vunpack.c.l.b16 %v65
  %v234 = vunpack.c.l.b16 %v66
  %v235 = vunpack.c.l.b16 %v67
  %v236 = vunpack.c.l.b16 %v68
  %v237 = vunpack.c.l.b16 %v69
  %v238 = vunpack.c.l.b16 %v70
  %v239 = vunpack.c.l.b16 %v71
  %v240 = vunpack.c.l.b16 %v72
  %v241 = vunpack.c.l.b16 %v73
  %v242 = vunpack.c.l.b16 %v74
  %v243 = vunpack.c.l.b16 %v75
  %v244 = vunpack.c.l.b16 %v76
  %v245 = vunpack.c.l.b16 %v77
  %v246 = vunpack.c.l.b16 %v78
  %v247 = vunpack.c.l.b16 %v79
  %v248 = vunpack.c.l.b16 %v80
  %v249 = vunpack.c.l.b16 %v81
  %v250 = vunpack.c.l.b16 %v82
  %v251 = vunpack.c.l.b16 %v83
  %v252 = vunpack.c.l.b16 %v84
  %v253 = vunpack.c.l.b16 %v85
  %v254 = vunpack.c.l.b16 %v86
  %v255 = vunpack.c.l.b16 %v87
  %v256 = vunpack.c.l.b16 %v88
  %v257 = vunpack.c.l.b16 %v89
  %v258 = vunpack.c.l.b16 %v90
  %v259 = vunpack.c.l.b16 %v91
  %v260 = vunpack.c.l.b16 %v92
  %v261 = vunpack.c.l.b16 %v93
  %v262 = vunpack.c.l.b16 %v94
  %v263 = vunpack.c.l.b16 %v95
  %v264 = vunpack.c.l.b16 %v96
  %v265 = vunpack.c.l.b16 %v97
  %v266 = vunpack.c.l.b16 %v98
  %v267 = vunpack.c.l.b16 %v99
  %v268 = vunpack.c.l.b16 %v100
  %v269 = vunpack.c.l.b16 %v101
  %v270 = vpack.c.b16 %v207, %v206
  %v271 = vpack.c.b16 %v209, %v208
  %v272 = vpack.c.b16 %v211, %v210
  %v273 = vpack.c.b16 %v213, %v212
  %v274 = vpack.c.b16 %v215, %v214
  %v275 = vpack.c.b16 %v217, %v216
  %v276 = vpack.c.b16 %v219, %v218
  %v277 = vpack.c.b16 %v221, %v220
  %v278 = vpack.c.b16 %v223, %v222
  %v279 = vpack.c.b16 %v225, %v224
  %v280 = vpack.c.b16 %v227, %v226
  %v281 = vpack.c.b16 %v229, %v228
  %v282 = vpack.c.b16 %v231, %v230
  %v283 = vpack.c.b16 %v233, %v232
  %v284 = vpack.c.b16 %v235, %v234
  %v285 = vpack.c.b16 %v237, %v236
  %v286 = vpack.c.b16 %v239, %v238
  %v287 = vpack.c.b16 %v241, %v240
  %v288 = vpack.c.b16 %v243, %v242
  %v289 = vpack.c.b16 %v245, %v244
  %v290 = vpack.c.b16 %v247, %v246
  %v291 = vpack.c.b16 %v249, %v248
  %v292 = vpack.c.b16 %v251, %v250
  %v293 = vpack.c.b16 %v253, %v252
  %v294 = vpack.c.b16 %v255, %v254
  %v295 = vpack.c.b16 %v257, %v256
  %v296 = vpack.c.b16 %v259, %v258
  %v297 = vpack.c.b16 %v261, %v260
  %v298 = vpack.c.b16 %v263, %v262
  %v299 = vpack.c.b16 %v265, %v264
  %v300 = vpack.c.b16 %v267, %v266
  %v301 = vpack.c.b16 %v269, %v268
  %334 = vmatprep.subr.bf16.mxu0 0
  %335 = vmatpush1.bf16.msra.mxu0 %v277
  %336 = vmatprep.subr.bf16.mxu0 0
  %337 = vmatpush1.bf16.msra.mxu0 %v276
  %338 = vmatprep.subr.bf16.mxu0 0
  %339 = vmatpush1.bf16.msra.mxu0 %v275
  %340 = vmatprep.subr.bf16.mxu0 0
  %341 = vmatpush1.bf16.msra.mxu0 %v274
  %342 = vmatprep.subr.bf16.mxu0 0
  %343 = vmatpush1.bf16.msra.mxu0 %v273
  %344 = vmatprep.subr.bf16.mxu0 0
  %345 = vmatpush1.bf16.msra.mxu0 %v272
  %346 = vmatprep.subr.bf16.mxu0 0
  %347 = vmatpush1.bf16.msra.mxu0 %v271
  %348 = vmatprep.subr.bf16.mxu0 0
  %349 = vmatpush1.bf16.msra.mxu0 %v270
  %350 = vmatprep.subr.bf16.mxu0 0
  %351 = vmatpush2.bf16.msra.mxu0 %v285
  %352 = vmatprep.subr.bf16.mxu0 0
  %353 = vmatpush2.bf16.msra.mxu0 %v284
  %354 = vmatprep.subr.bf16.mxu0 0
  %355 = vmatpush2.bf16.msra.mxu0 %v283
  %356 = vmatprep.subr.bf16.mxu0 0
  %357 = vmatpush2.bf16.msra.mxu0 %v282
  %358 = vmatprep.subr.bf16.mxu0 0
  %359 = vmatpush2.bf16.msra.mxu0 %v281
  %360 = vmatprep.subr.bf16.mxu0 0
  %361 = vmatpush2.bf16.msra.mxu0 %v280
  %362 = vmatprep.subr.bf16.mxu0 0
  %363 = vmatpush2.bf16.msra.mxu0 %v279
  %364 = vmatprep.subr.bf16.mxu0 0
  %365 = vmatpush2.bf16.msra.mxu0 %v278
  %366 = vmatprep.mubr.bf16.mxu0 %v127
  %367 = vmatmul.mubr.bf16.gmra.mxu0 %v126
  %v368 = vpop.f32.mrf.mxu0
  %v369 = vadd.f32 0.0, %v368
  %v370 = vpop.f32.mrf.mxu0
  %v371 = vpop.f32.mrf.mxu0
  %v372 = vadd.f32 0.0, %v371
  %v373 = vpop.f32.mrf.mxu0
  %374 = vmatprep.mubr.bf16.mxu0 %v131
  %375 = vmatmul.mubr.bf16.gmra.mxu0 %v130
  %v376 = vpop.f32.mrf.mxu0
  %v377 = vadd.f32 0.0, %v376
  %v378 = vpop.f32.mrf.mxu0
  %v379 = vpop.f32.mrf.mxu0
  %v380 = vadd.f32 0.0, %v379
  %v381 = vpop.f32.mrf.mxu0
  %382 = vdwg.mxu0
  %383 = vmatprep.subr.bf16.mxu0 0
  %384 = vmatpush1.bf16.msra.mxu0 %v293
  %385 = vmatprep.subr.bf16.mxu0 0
  %386 = vmatpush1.bf16.msra.mxu0 %v292
  %387 = vmatprep.subr.bf16.mxu0 0
  %388 = vmatpush1.bf16.msra.mxu0 %v291
  %389 = vmatprep.subr.bf16.mxu0 0
  %390 = vmatpush1.bf16.msra.mxu0 %v290
  %391 = vmatprep.subr.bf16.mxu0 0
  %392 = vmatpush1.bf16.msra.mxu0 %v289
  %393 = vmatprep.subr.bf16.mxu0 0
  %394 = vmatpush1.bf16.msra.mxu0 %v288
  %395 = vmatprep.subr.bf16.mxu0 0
  %396 = vmatpush1.bf16.msra.mxu0 %v287
  %397 = vmatprep.subr.bf16.mxu0 0
  %398 = vmatpush1.bf16.msra.mxu0 %v286
  %399 = vmatprep.subr.bf16.mxu0 0
  %400 = vmatpush2.bf16.msra.mxu0 %v301
  %401 = vmatprep.subr.bf16.mxu0 0
  %402 = vmatpush2.bf16.msra.mxu0 %v300
  %403 = vmatprep.subr.bf16.mxu0 0
  %404 = vmatpush2.bf16.msra.mxu0 %v299
  %405 = vmatprep.subr.bf16.mxu0 0
  %406 = vmatpush2.bf16.msra.mxu0 %v298
  %407 = vmatprep.subr.bf16.mxu0 0
  %408 = vmatpush2.bf16.msra.mxu0 %v297
  %409 = vmatprep.subr.bf16.mxu0 0
  %410 = vmatpush2.bf16.msra.mxu0 %v296
  %411 = vmatprep.subr.bf16.mxu0 0
  %412 = vmatpush2.bf16.msra.mxu0 %v295
  %413 = vmatprep.subr.bf16.mxu0 0
  %414 = vmatpush2.bf16.msra.mxu0 %v294
  %415 = vmatprep.mubr.bf16.mxu0 %v129
  %416 = vmatmul.mubr.bf16.gmra.mxu0 %v128
  %v417 = vpop.f32.mrf.mxu0
  %v418 = vadd.f32 %v369, %v417
  %v419 = vpop.f32.mrf.mxu0
  %v420 = vpop.f32.mrf.mxu0
  %v421 = vadd.f32 %v372, %v420
  %v422 = vpop.f32.mrf.mxu0
  %423 = vmatprep.mubr.bf16.mxu0 %v133
  %424 = vmatmul.mubr.bf16.gmra.mxu0 %v132
  %v425 = vpop.f32.mrf.mxu0
  %v426 = vadd.f32 %v377, %v425
  %v427 = vpop.f32.mrf.mxu0
  %v428 = vpop.f32.mrf.mxu0
  %v429 = vadd.f32 %v380, %v428
  %v430 = vpop.f32.mrf.mxu0
  %431 = vdwg.mxu0
  %v432 = vadd.f32 %v26, %v418
  %v433 = vadd.f32 %v27, %v421
  %v434 = vadd.f32 %v28, %v426
  %v435 = vadd.f32 %v29, %v429
  %436 = vst [vmem:[#allocation2] sm:$0xff] %v432
  %437 = vst [vmem:[#allocation2 + $0x8] sm:$0xff] %v433
  %438 = vst [vmem:[#allocation2 + $0x10] sm:$0xff] %v434
  %439 = vst [vmem:[#allocation2 + $0x18] sm:$0xff] %v435
  // Predicated region
  $region22: #{patch_discriminator_forward.7} parent=0 // pred_check
    %p440 = pneg %p18
  $region23: #{patch_discriminator_forward.7} parent=0 // pred_check_branch
    %442 = sbr.rel (%p440) target = $region25
  $region24: #{patch_discriminator_forward.7} parent=0 // pred_region
    %v443 = vld [vmem:[#allocation2] sm:$0xff]
    %v444 = vld [vmem:[#allocation2 + $0x8] sm:$0xff]
    %v445 = vld [vmem:[#allocation2 + $0x10] sm:$0xff]
    %v446 = vld [vmem:[#allocation2 + $0x18] sm:$0xff]
    %v447 = vld [vmem:[%s2] sm:$0x1]
    %v449 = vlaneseq
    %v450 = vshrl.u32 %v449, 7
    %v451 = vsub.s32 0, %v450
    %v452 = vrot.slane %v447, %v451
    %v454 = vmul.f32 %v443, %v452
    %v455 = vmul.f32 %v444, %v452
    %v456 = vmul.f32 %v445, %v452
    %v457 = vmul.f32 %v446, %v452
    %v458 = vld [vmem:[%s3] sm:$0x1]
    %v460 = vlaneseq
    %v461 = vshrl.u32 %v460, 7
    %v462 = vsub.s32 0, %v461
    %v463 = vrot.slane %v458, %v462
    %v465 = vadd.f32 %v454, %v463
    %v466 = vadd.f32 %v455, %v463
    %v467 = vadd.f32 %v456, %v463
    %v468 = vadd.f32 %v457, %v463
    %vm469 = vcmp.gt.f32.partialorder %v465, 0.0
    %vm470 = vcmp.gt.f32.partialorder %v466, 0.0
    %vm471 = vcmp.gt.f32.partialorder %v467, 0.0
    %vm472 = vcmp.gt.f32.partialorder %v468, 0.0
    %v473 = vmul.f32 %v465, 0.2
    %v474 = vmul.f32 %v466, 0.2
    %v475 = vmul.f32 %v467, 0.2
    %v476 = vmul.f32 %v468, 0.2
    %v477 = vsel %vm469, %v465, %v473
    %v478 = vsel %vm470, %v466, %v474
    %v479 = vsel %vm471, %v467, %v475
    %v480 = vsel %vm472, %v468, %v476
    %481 = vst [vmem:[%s4] sm:$0xff] %v477
    %482 = vst [vmem:[%s4 + $0x8] sm:$0xff] %v478
    %483 = vst [vmem:[%s4 + $0x10] sm:$0xff] %v479
    %484 = vst [vmem:[%s4 + $0x18] sm:$0xff] %v480
  $region25: #{patch_discriminator_forward.7} parent=0 // pred_fallthru
    _
  // Predicated region
  $region26: #{patch_discriminator_forward.7} parent=0 // pred_check
    _
  $region27: #{patch_discriminator_forward.7} parent=0 // pred_check_branch
    %486 = sbr.rel (0) target = $region29
  $region28: #{patch_discriminator_forward.7} parent=0 // pred_region
    _
  $region29: #{patch_discriminator_forward.7} parent=0 // pred_fallthru
    _
  // Predicated region
  $region30: #{patch_discriminator_forward.7} parent=0 // pred_check
    _
  $region31: #{patch_discriminator_forward.7} parent=0 // pred_check_branch
    %488 = sbr.rel (0) target = $region33
  $region32: #{patch_discriminator_forward.7} parent=0 // pred_region
    _
  $region33: #{patch_discriminator_forward.7} parent=0 // pred_fallthru
    _

// kernel: patch_discriminator_forward.9
$region0: #{patch_discriminator_forward.9}
  #allocation0 [shape = 'u32[]', space=smem, size = 0x4, offset = 0x4, fixed_abs, tag = 'smem constant byte address 0x4 - core index']
  #allocation1 [shape = 'u32[144,128]{1,0:T(1,128)}', space=vmem, size = 0x12000, scoped, tag = 'internal scratch']
  #allocation2 [shape = 'f32[8,128]{1,0:T(8,128)}', space=vmem, size = 0x1000, scoped, tag = 'scratch operand']
  %s0 = inlined_call_operand.vmem [shape: bf16[8,2048], index: 0, kind: input, shape index: {}]
  %s1 = inlined_call_operand.vmem [shape: bf16[2048,128], index: 1, kind: input, shape index: {}]
  %s2 = inlined_call_operand.vmem [shape: f32[1,128], index: 2, kind: input, shape index: {}]
  %s3 = inlined_call_operand.vmem [shape: f32[1,128], index: 3, kind: input, shape index: {}]
  %s4 = inlined_call_operand.vmem [shape: f32[8,128], index: 4, kind: output, shape index: {}]
  %s5 = sld [smem:[#allocation0]]
  $region57: #{patch_discriminator_forward.9} parent=0
    _
  %s7 = ssub.s32 1, %s5
  %s8 = scalar_select 0, %s7, %s5
  loop: start=0, step=1, limit=4
  $region2: #{patch_discriminator_forward.9} parent=0 // loop_pre_header
    _
  $region3: #{patch_discriminator_forward.9} parent=0 // loop_header
    %s10 = sphi 0, %s14
    %p11 = scmp.ge.s32.totalorder %s10, 4
    %s17 = sphi 0, %s29
    %s18 = sphi 0, %s25
    %s19 = sphi 0, %s17
    %s20 = sphi 0, %s18
    %s21 = sphi 0, %s19
    %s22 = sphi 0, %s20
    %s34 = sphi 0, %s36
    %s37 = sphi 0, %s34
    %s38 = sphi 0, %s37
    %s54 = sphi 0, %s38
    %s60 = sphi 0, %s62
    %s63 = sphi 0, %s60
    %s64 = sphi 0, %s63
    %s80 = sphi 0, %s64
    %s84 = sphi 0, %s84
    %s86 = sphi 0, %s84
    %s87 = sphi 0, %s86
    %s101 = sphi 0, %s87
    %s105 = sphi 0, %s105
    %s107 = sphi 0, %s105
    %s108 = sphi 0, %s107
    %s122 = sphi 0, %s108
    %s128 = sphi 0, %s130
    %s131 = sphi 0, %s128
    %s132 = sphi 0, %s131
    %s148 = sphi 0, %s132
  $region4: #{patch_discriminator_forward.9} parent=0 // loop_header_branch
    %13 = sbr.rel (%p11) target = $region8
  $region5: #{patch_discriminator_forward.9} parent=0 // loop_body
    %s15 = ssub.s32 %s10, 1
    %s16 = ssub.s32 %s10, 2
    %s23 = sadd.s32 1, %s18
    %p24 = scmp.ge.s32.totalorder %s23, 2
    %s25 = scalar_select %p24, 0, %s23
    %s26 = sadd.s32 1, %s17
    %s27 = scalar_select %p24, %s26, %s17
    %p28 = scmp.ge.s32.totalorder %s27, 1
    %s29 = scalar_select %p28, 0, %s27
    %s30 = ssub.s32 %s17, %s29
    %s31 = ssub.s32 %s18, %s25
    %s32 = sor.u32 %s30, %s31
    %p33 = scmp.eq.s32.totalorder %s32, 0
    %s35 = sadd.s32 %s34, 1
    %s36 = scalar_select %p33, %s34, %s35
    %p39 = pneg %p33
    %p40 = scmp.eq.s32.totalorder %s10, 1
    %p41 = por %p39, %p40
    %p42 = scmp.ne.s32.totalorder %s34, %s37
    %p43 = scmp.eq.s32.totalorder %s10, 0
    %p44 = por %p42, %p43
    %p45 = scmp.ne.s32.totalorder %s34, %s37
    %p46 = scmp.eq.s32.totalorder %s15, 1
    %p47 = por %p45, %p46
    %p48 = scmp.ne.s32.totalorder %s37, %s38
    %p49 = scmp.eq.s32.totalorder %s15, 0
    %p50 = por %p48, %p49
    %p51 = scmp.ne.s32.totalorder %s37, %s38
    %p52 = scmp.eq.s32.totalorder %s16, 1
    %p53 = por %p51, %p52
    %p55 = scmp.ne.s32.totalorder %s38, %s54
    %p56 = scmp.eq.s32.totalorder %s16, 0
    %p57 = por %p55, %p56
    %s58 = ssub.s32 %s18, %s25
    %p59 = scmp.eq.s32.totalorder %s58, 0
    %s61 = sadd.s32 %s60, 1
    %s62 = scalar_select %p59, %s60, %s61
    %p65 = pneg %p59
    %p66 = scmp.eq.s32.totalorder %s10, 1
    %p67 = por %p65, %p66
    %p68 = scmp.ne.s32.totalorder %s60, %s63
    %p69 = scmp.eq.s32.totalorder %s10, 0
    %p70 = por %p68, %p69
    %p71 = scmp.ne.s32.totalorder %s60, %s63
    %p72 = scmp.eq.s32.totalorder %s15, 1
    %p73 = por %p71, %p72
    %p74 = scmp.ne.s32.totalorder %s63, %s64
    %p75 = scmp.eq.s32.totalorder %s15, 0
    %p76 = por %p74, %p75
    %p77 = scmp.ne.s32.totalorder %s63, %s64
    %p78 = scmp.eq.s32.totalorder %s16, 1
    %p79 = por %p77, %p78
    %p81 = scmp.ne.s32.totalorder %s64, %s80
    %p82 = scmp.eq.s32.totalorder %s16, 0
    %p83 = por %p81, %p82
    %s85 = sadd.s32 %s84, 1
    %p88 = scmp.eq.s32.totalorder %s10, 1
    %p89 = scmp.ne.s32.totalorder %s84, %s86
    %p90 = scmp.eq.s32.totalorder %s10, 0
    %p91 = por %p89, %p90
    %p92 = scmp.ne.s32.totalorder %s84, %s86
    %p93 = scmp.eq.s32.totalorder %s15, 1
    %p94 = por %p92, %p93
    %p95 = scmp.ne.s32.totalorder %s86, %s87
    %p96 = scmp.eq.s32.totalorder %s15, 0
    %p97 = por %p95, %p96
    %p98 = scmp.ne.s32.totalorder %s86, %s87
    %p99 = scmp.eq.s32.totalorder %s16, 1
    %p100 = por %p98, %p99
    %p102 = scmp.ne.s32.totalorder %s87, %s101
    %p103 = scmp.eq.s32.totalorder %s16, 0
    %p104 = por %p102, %p103
    %s106 = sadd.s32 %s105, 1
    %p109 = scmp.eq.s32.totalorder %s10, 1
    %p110 = scmp.ne.s32.totalorder %s105, %s107
    %p111 = scmp.eq.s32.totalorder %s10, 0
    %p112 = por %p110, %p111
    %p113 = scmp.ne.s32.totalorder %s105, %s107
    %p114 = scmp.eq.s32.totalorder %s15, 1
    %p115 = por %p113, %p114
    %p116 = scmp.ne.s32.totalorder %s107, %s108
    %p117 = scmp.eq.s32.totalorder %s15, 0
    %p118 = por %p116, %p117
    %p119 = scmp.ne.s32.totalorder %s107, %s108
    %p120 = scmp.eq.s32.totalorder %s16, 1
    %p121 = por %p119, %p120
    %p123 = scmp.ne.s32.totalorder %s108, %s122
    %p124 = scmp.eq.s32.totalorder %s16, 0
    %p125 = por %p123, %p124
    %s126 = ssub.s32 %s17, %s29
    %p127 = scmp.eq.s32.totalorder %s126, 0
    %s129 = sadd.s32 %s128, 1
    %s130 = scalar_select %p127, %s128, %s129
    %p133 = pneg %p127
    %p134 = scmp.eq.s32.totalorder %s10, 1
    %p135 = por %p133, %p134
    %p136 = scmp.ne.s32.totalorder %s128, %s131
    %p137 = scmp.eq.s32.totalorder %s10, 0
    %p138 = por %p136, %p137
    %p139 = scmp.ne.s32.totalorder %s128, %s131
    %p140 = scmp.eq.s32.totalorder %s15, 1
    %p141 = por %p139, %p140
    %p142 = scmp.ne.s32.totalorder %s131, %s132
    %p143 = scmp.eq.s32.totalorder %s15, 0
    %p144 = por %p142, %p143
    %p145 = scmp.ne.s32.totalorder %s131, %s132
    %p146 = scmp.eq.s32.totalorder %s16, 1
    %p147 = por %p145, %p146
    %p149 = scmp.ne.s32.totalorder %s132, %s148
    %p150 = scmp.eq.s32.totalorder %s16, 0
    %p151 = por %p149, %p150
    %p152 = scmp.le.s32.totalorder 1, %s10
    %p153 = scmp.lt.s32.totalorder %s10, 3
    %p154 = pnand %p152, %p153
    %p155 = pneg %p154
    // Predicated region
    $region9: #{patch_discriminator_forward.9} parent=5 // pred_check
      _
    $region10: #{patch_discriminator_forward.9} parent=5 // pred_check_branch
      %157 = sbr.rel (%p154) target = $region12
    $region11: #{patch_discriminator_forward.9} parent=5 // pred_region
      %s158 = ssub.s32 %s10, 1
      // Predicated region
      $region13: #{patch_discriminator_forward.9} parent=11 // pred_check
        %p159 = pneg %p97
      $region14: #{patch_discriminator_forward.9} parent=11 // pred_check_branch
        %161 = sbr.rel (%p159) target = $region16
      $region15: #{patch_discriminator_forward.9} parent=11 // pred_region
        _
      $region16: #{patch_discriminator_forward.9} parent=11 // pred_fallthru
        _
      // Predicated region
      $region17: #{patch_discriminator_forward.9} parent=11 // pred_check
        %p162 = pneg %p118
      $region18: #{patch_discriminator_forward.9} parent=11 // pred_check_branch
        %164 = sbr.rel (%p162) target = $region20
      $region19: #{patch_discriminator_forward.9} parent=11 // pred_region
        _
      $region20: #{patch_discriminator_forward.9} parent=11 // pred_fallthru
        _
    $region12: #{patch_discriminator_forward.9} parent=5 // pred_fallthru
      _
    %p165 = scmp.lt.s32.totalorder %s10, 2
    // Predicated region
    $region21: #{patch_discriminator_forward.9} parent=5 // pred_check
      %p166 = pneg %p165
    $region22: #{patch_discriminator_forward.9} parent=5 // pred_check_branch
      %168 = sbr.rel (%p166) target = $region24
    $region23: #{patch_discriminator_forward.9} parent=5 // pred_region
      // Predicated region
      $region25: #{patch_discriminator_forward.9} parent=23 // pred_check
        %p169 = pneg %p44
      $region26: #{patch_discriminator_forward.9} parent=23 // pred_check_branch
        %171 = sbr.rel (%p169) target = $region28
      $region27: #{patch_discriminator_forward.9} parent=23 // pred_region
        %s172 = smul.u32 8, %s18
        %p173 = scmp.lt.s32.totalorder %s17, 0
        %s174 = scalar_select %p173, %s17, 0
        %p175 = scmp.lt.s32.totalorder %s172, 15
        %s176 = scalar_select %p175, %s172, 15
        %s177 = smul.addr %s174, 16
        %s178 = sadd.s32 %s176, %s177
        %s179 = smul.addr %s178, 4
        %s180 = scalar_lea.vmem %s0, %s179
        %s181 = smul.u32 8, %s18
      $region28: #{patch_discriminator_forward.9} parent=23 // pred_fallthru
        _
      // Predicated region
      $region29: #{patch_discriminator_forward.9} parent=23 // pred_check
        %p182 = pneg %p70
      $region30: #{patch_discriminator_forward.9} parent=23 // pred_check_branch
        %184 = sbr.rel (%p182) target = $region32
      $region31: #{patch_discriminator_forward.9} parent=23 // pred_region
        %s185 = smul.u32 128, %s18
        %p186 = scmp.lt.s32.totalorder %s185, 255
        %s187 = scalar_select %p186, %s185, 255
        %s188 = smul.addr %s187, 4
        %s189 = scalar_lea.vmem %s1, %s188
        %s190 = smul.u32 128, %s18
      $region32: #{patch_discriminator_forward.9} parent=23 // pred_fallthru
        _
    $region24: #{patch_discriminator_forward.9} parent=5 // pred_fallthru
      _
    %p191 = scmp.le.s32.totalorder 1, %s10
    %p192 = scmp.lt.s32.totalorder %s10, 3
    %p193 = pnand %p191, %p192
    %p194 = pneg %p193
    // Predicated region
    $region33: #{patch_discriminator_forward.9} parent=5 // pred_check
      _
    $region34: #{patch_discriminator_forward.9} parent=5 // pred_check_branch
      %196 = sbr.rel (%p193) target = $region36
    $region35: #{patch_discriminator_forward.9} parent=5 // pred_region
      %s197 = ssub.s32 %s10, 1
      %s198 = smul.u32 8, %s20
      %p199 = scmp.lt.s32.totalorder %s19, 0
      %s200 = scalar_select %p199, %s19, 0
      %p201 = scmp.lt.s32.totalorder %s198, 15
      %s202 = scalar_select %p201, %s198, 15
      %s203 = smul.addr %s200, 16
      %s204 = sadd.s32 %s202, %s203
      %s205 = smul.addr %s204, 4
      %s206 = scalar_lea.vmem %s0, %s205
      %p207 = pneg %p50
      %p208 = pneg %p47
      %s209 = smul.u32 128, %s20
      %p210 = scmp.lt.s32.totalorder %s209, 255
      %s211 = scalar_select %p210, %s209, 255
      %s212 = smul.addr %s211, 4
      %s213 = scalar_lea.vmem %s1, %s212
      %p214 = pneg %p76
      %p215 = pneg %p73
      %p216 = pneg %p97
      %p217 = pneg %p94
      %p218 = pneg %p118
      %p219 = pneg %p115
      %p220 = pneg %p144
      %p221 = pneg %p141
      %p222 = scmp.lt.s32.totalorder %s19, 0
      %s223 = scalar_select %p222, %s19, 0
      %s224 = smul.addr %s223, 8
      %s225 = scalar_lea.vmem %s4, %s224
      %s226 = smul.u32 8, %s20
      %p227 = scmp.lt.s32.totalorder %s19, 0
      %s228 = scalar_select %p227, %s19, 0
      %p229 = scmp.lt.s32.totalorder %s226, 15
      %s230 = scalar_select %p229, %s226, 15
      %s231 = smul.addr %s228, 16
      %s232 = sadd.s32 %s230, %s231
      %s233 = smul.addr %s232, 4
      %s234 = scalar_lea.vmem %s0, %s233
      %s235 = smul.u32 8, %s20
      %s236 = smul.u32 128, %s20
      %p237 = scmp.lt.s32.totalorder %s236, 255
      %s238 = scalar_select %p237, %s236, 255
      %s239 = smul.addr %s238, 4
      %s240 = scalar_lea.vmem %s1, %s239
      %s241 = smul.u32 128, %s20
      %p242 = scmp.lt.s32.totalorder %s19, 0
      %s243 = scalar_select %p242, %s19, 0
      %s244 = smul.addr %s243, 8
      %s245 = scalar_lea.vmem %s4, %s244
      %p247 = scmp.eq.s32.totalorder %s20, 0
      // Predicated region
      $region37: #{patch_discriminator_forward.9} parent=35 // pred_check
        %p248 = pneg %p247
      $region38: #{patch_discriminator_forward.9} parent=35 // pred_check_branch
        %250 = sbr.rel (%p248) target = $region40
      $region39: #{patch_discriminator_forward.9} parent=35 // pred_region
        %251 = vst [vmem:[#allocation2] sm:$0xff] 0.0
      $region40: #{patch_discriminator_forward.9} parent=35 // pred_fallthru
        _
      %v252 = vld [vmem:[#allocation2] sm:$0xff]
      %v253 = vld [vmem:[%s234] sm:$0xff]
      %v254 = vld [vmem:[%s234 + $0x8] sm:$0xff]
      %v255 = vld [vmem:[%s234 + $0x10] sm:$0xff]
      %v256 = vld [vmem:[%s234 + $0x18] sm:$0xff]
      %v257 = vld [vmem:[%s240] sm:$0xf]
      %v258 = vld [vmem:[%s240 + $0x4] sm:$0xf]
      %v259 = vld [vmem:[%s240 + $0x8] sm:$0xf]
      %v260 = vld [vmem:[%s240 + $0xc] sm:$0xf]
      %v261 = vld [vmem:[%s240 + $0x10] sm:$0xf]
      %v262 = vld [vmem:[%s240 + $0x14] sm:$0xf]
      %v263 = vld [vmem:[%s240 + $0x18] sm:$0xf]
      %v264 = vld [vmem:[%s240 + $0x1c] sm:$0xf]
      %v265 = vld [vmem:[%s240 + $0x20] sm:$0xf]
      %v266 = vld [vmem:[%s240 + $0x24] sm:$0xf]
      %v267 = vld [vmem:[%s240 + $0x28] sm:$0xf]
      %v268 = vld [vmem:[%s240 + $0x2c] sm:$0xf]
      %v269 = vld [vmem:[%s240 + $0x30] sm:$0xf]
      %v270 = vld [vmem:[%s240 + $0x34] sm:$0xf]
      %v271 = vld [vmem:[%s240 + $0x38] sm:$0xf]
      %v272 = vld [vmem:[%s240 + $0x3c] sm:$0xf]
      %v273 = vld [vmem:[%s240 + $0x40] sm:$0xf]
      %v274 = vld [vmem:[%s240 + $0x44] sm:$0xf]
      %v275 = vld [vmem:[%s240 + $0x48] sm:$0xf]
      %v276 = vld [vmem:[%s240 + $0x4c] sm:$0xf]
      %v277 = vld [vmem:[%s240 + $0x50] sm:$0xf]
      %v278 = vld [vmem:[%s240 + $0x54] sm:$0xf]
      %v279 = vld [vmem:[%s240 + $0x58] sm:$0xf]
      %v280 = vld [vmem:[%s240 + $0x5c] sm:$0xf]
      %v281 = vld [vmem:[%s240 + $0x60] sm:$0xf]
      %v282 = vld [vmem:[%s240 + $0x64] sm:$0xf]
      %v283 = vld [vmem:[%s240 + $0x68] sm:$0xf]
      %v284 = vld [vmem:[%s240 + $0x6c] sm:$0xf]
      %v285 = vld [vmem:[%s240 + $0x70] sm:$0xf]
      %v286 = vld [vmem:[%s240 + $0x74] sm:$0xf]
      %v287 = vld [vmem:[%s240 + $0x78] sm:$0xf]
      %v288 = vld [vmem:[%s240 + $0x7c] sm:$0xf]
      %v289 = vld [vmem:[%s240 + $0x80] sm:$0xf]
      %v290 = vld [vmem:[%s240 + $0x84] sm:$0xf]
      %v291 = vld [vmem:[%s240 + $0x88] sm:$0xf]
      %v292 = vld [vmem:[%s240 + $0x8c] sm:$0xf]
      %v293 = vld [vmem:[%s240 + $0x90] sm:$0xf]
      %v294 = vld [vmem:[%s240 + $0x94] sm:$0xf]
      %v295 = vld [vmem:[%s240 + $0x98] sm:$0xf]
      %v296 = vld [vmem:[%s240 + $0x9c] sm:$0xf]
      %v297 = vld [vmem:[%s240 + $0xa0] sm:$0xf]
      %v298 = vld [vmem:[%s240 + $0xa4] sm:$0xf]
      %v299 = vld [vmem:[%s240 + $0xa8] sm:$0xf]
      %v300 = vld [vmem:[%s240 + $0xac] sm:$0xf]
      %v301 = vld [vmem:[%s240 + $0xb0] sm:$0xf]
      %v302 = vld [vmem:[%s240 + $0xb4] sm:$0xf]
      %v303 = vld [vmem:[%s240 + $0xb8] sm:$0xf]
      %v304 = vld [vmem:[%s240 + $0xbc] sm:$0xf]
      %v305 = vld [vmem:[%s240 + $0xc0] sm:$0xf]
      %v306 = vld [vmem:[%s240 + $0xc4] sm:$0xf]
      %v307 = vld [vmem:[%s240 + $0xc8] sm:$0xf]
      %v308 = vld [vmem:[%s240 + $0xcc] sm:$0xf]
      %v309 = vld [vmem:[%s240 + $0xd0] sm:$0xf]
      %v310 = vld [vmem:[%s240 + $0xd4] sm:$0xf]
      %v311 = vld [vmem:[%s240 + $0xd8] sm:$0xf]
      %v312 = vld [vmem:[%s240 + $0xdc] sm:$0xf]
      %v313 = vld [vmem:[%s240 + $0xe0] sm:$0xf]
      %v314 = vld [vmem:[%s240 + $0xe4] sm:$0xf]
      %v315 = vld [vmem:[%s240 + $0xe8] sm:$0xf]
      %v316 = vld [vmem:[%s240 + $0xec] sm:$0xf]
      %v317 = vld [vmem:[%s240 + $0xf0] sm:$0xf]
      %v318 = vld [vmem:[%s240 + $0xf4] sm:$0xf]
      %v319 = vld [vmem:[%s240 + $0xf8] sm:$0xf]
      %v320 = vld [vmem:[%s240 + $0xfc] sm:$0xf]
      %v321 = vld [vmem:[%s240 + $0x100] sm:$0xf]
      %v322 = vld [vmem:[%s240 + $0x104] sm:$0xf]
      %v323 = vld [vmem:[%s240 + $0x108] sm:$0xf]
      %v324 = vld [vmem:[%s240 + $0x10c] sm:$0xf]
      %v325 = vld [vmem:[%s240 + $0x110] sm:$0xf]
      %v326 = vld [vmem:[%s240 + $0x114] sm:$0xf]
      %v327 = vld [vmem:[%s240 + $0x118] sm:$0xf]
      %v328 = vld [vmem:[%s240 + $0x11c] sm:$0xf]
      %v329 = vld [vmem:[%s240 + $0x120] sm:$0xf]
      %v330 = vld [vmem:[%s240 + $0x124] sm:$0xf]
      %v331 = vld [vmem:[%s240 + $0x128] sm:$0xf]
      %v332 = vld [vmem:[%s240 + $0x12c] sm:$0xf]
      %v333 = vld [vmem:[%s240 + $0x130] sm:$0xf]
      %v334 = vld [vmem:[%s240 + $0x134] sm:$0xf]
      %v335 = vld [vmem:[%s240 + $0x138] sm:$0xf]
      %v336 = vld [vmem:[%s240 + $0x13c] sm:$0xf]
      %v337 = vld [vmem:[%s240 + $0x140] sm:$0xf]
      %v338 = vld [vmem:[%s240 + $0x144] sm:$0xf]
      %v339 = vld [vmem:[%s240 + $0x148] sm:$0xf]
      %v340 = vld [vmem:[%s240 + $0x14c] sm:$0xf]
      %v341 = vld [vmem:[%s240 + $0x150] sm:$0xf]
      %v342 = vld [vmem:[%s240 + $0x154] sm:$0xf]
      %v343 = vld [vmem:[%s240 + $0x158] sm:$0xf]
      %v344 = vld [vmem:[%s240 + $0x15c] sm:$0xf]
      %v345 = vld [vmem:[%s240 + $0x160] sm:$0xf]
      %v346 = vld [vmem:[%s240 + $0x164] sm:$0xf]
      %v347 = vld [vmem:[%s240 + $0x168] sm:$0xf]
      %v348 = vld [vmem:[%s240 + $0x16c] sm:$0xf]
      %v349 = vld [vmem:[%s240 + $0x170] sm:$0xf]
      %v350 = vld [vmem:[%s240 + $0x174] sm:$0xf]
      %v351 = vld [vmem:[%s240 + $0x178] sm:$0xf]
      %v352 = vld [vmem:[%s240 + $0x17c] sm:$0xf]
      %v353 = vld [vmem:[%s240 + $0x180] sm:$0xf]
      %v354 = vld [vmem:[%s240 + $0x184] sm:$0xf]
      %v355 = vld [vmem:[%s240 + $0x188] sm:$0xf]
      %v356 = vld [vmem:[%s240 + $0x18c] sm:$0xf]
      %v357 = vld [vmem:[%s240 + $0x190] sm:$0xf]
      %v358 = vld [vmem:[%s240 + $0x194] sm:$0xf]
      %v359 = vld [vmem:[%s240 + $0x198] sm:$0xf]
      %v360 = vld [vmem:[%s240 + $0x19c] sm:$0xf]
      %v361 = vld [vmem:[%s240 + $0x1a0] sm:$0xf]
      %v362 = vld [vmem:[%s240 + $0x1a4] sm:$0xf]
      %v363 = vld [vmem:[%s240 + $0x1a8] sm:$0xf]
      %v364 = vld [vmem:[%s240 + $0x1ac] sm:$0xf]
      %v365 = vld [vmem:[%s240 + $0x1b0] sm:$0xf]
      %v366 = vld [vmem:[%s240 + $0x1b4] sm:$0xf]
      %v367 = vld [vmem:[%s240 + $0x1b8] sm:$0xf]
      %v368 = vld [vmem:[%s240 + $0x1bc] sm:$0xf]
      %v369 = vld [vmem:[%s240 + $0x1c0] sm:$0xf]
      %v370 = vld [vmem:[%s240 + $0x1c4] sm:$0xf]
      %v371 = vld [vmem:[%s240 + $0x1c8] sm:$0xf]
      %v372 = vld [vmem:[%s240 + $0x1cc] sm:$0xf]
      %v373 = vld [vmem:[%s240 + $0x1d0] sm:$0xf]
      %v374 = vld [vmem:[%s240 + $0x1d4] sm:$0xf]
      %v375 = vld [vmem:[%s240 + $0x1d8] sm:$0xf]
      %v376 = vld [vmem:[%s240 + $0x1dc] sm:$0xf]
      %v377 = vld [vmem:[%s240 + $0x1e0] sm:$0xf]
      %v378 = vld [vmem:[%s240 + $0x1e4] sm:$0xf]
      %v379 = vld [vmem:[%s240 + $0x1e8] sm:$0xf]
      %v380 = vld [vmem:[%s240 + $0x1ec] sm:$0xf]
      %v381 = vld [vmem:[%s240 + $0x1f0] sm:$0xf]
      %v382 = vld [vmem:[%s240 + $0x1f4] sm:$0xf]
      %v383 = vld [vmem:[%s240 + $0x1f8] sm:$0xf]
      %v384 = vld [vmem:[%s240 + $0x1fc] sm:$0xf]
      %v389 = vunpack.c.l.b16 %v253
      %v390 = vunpack.c.h.b16 %v253
      %v391 = vunpack.c.l.b16 %v254
      %v392 = vunpack.c.h.b16 %v254
      %v393 = vunpack.c.l.b16 %v255
      %v394 = vunpack.c.h.b16 %v255
      %v395 = vunpack.c.l.b16 %v256
      %v396 = vunpack.c.h.b16 %v256
      %v397 = vpack.c.b16 %v389, %v389
      %v398 = vpack.c.b16 %v390, %v390
      %v399 = vpack.c.b16 %v391, %v391
      %v400 = vpack.c.b16 %v392, %v392
      %v401 = vpack.c.b16 %v393, %v393
      %v402 = vpack.c.b16 %v394, %v394
      %v403 = vpack.c.b16 %v395, %v395
      %v404 = vpack.c.b16 %v396, %v396
      %v541 = vunpack.c.l.b16 %v257
      %v542 = vunpack.c.l.b16 %v258
      %v543 = vunpack.c.l.b16 %v259
      %v544 = vunpack.c.l.b16 %v260
      %v545 = vunpack.c.l.b16 %v261
      %v546 = vunpack.c.l.b16 %v262
      %v547 = vunpack.c.l.b16 %v263
      %v548 = vunpack.c.l.b16 %v264
      %v549 = vunpack.c.l.b16 %v265
      %v550 = vunpack.c.l.b16 %v266
      %v551 = vunpack.c.l.b16 %v267
      %v552 = vunpack.c.l.b16 %v268
      %v553 = vunpack.c.l.b16 %v269
      %v554 = vunpack.c.l.b16 %v270
      %v555 = vunpack.c.l.b16 %v271
      %v556 = vunpack.c.l.b16 %v272
      %v557 = vunpack.c.l.b16 %v273
      %v558 = vunpack.c.l.b16 %v274
      %v559 = vunpack.c.l.b16 %v275
      %v560 = vunpack.c.l.b16 %v276
      %v561 = vunpack.c.l.b16 %v277
      %v562 = vunpack.c.l.b16 %v278
      %v563 = vunpack.c.l.b16 %v279
      %v564 = vunpack.c.l.b16 %v280
      %v565 = vunpack.c.l.b16 %v281
      %v566 = vunpack.c.l.b16 %v282
      %v567 = vunpack.c.l.b16 %v283
      %v568 = vunpack.c.l.b16 %v284
      %v569 = vunpack.c.l.b16 %v285
      %v570 = vunpack.c.l.b16 %v286
      %v571 = vunpack.c.l.b16 %v287
      %v572 = vunpack.c.l.b16 %v288
      %v573 = vunpack.c.l.b16 %v289
      %v574 = vunpack.c.l.b16 %v290
      %v575 = vunpack.c.l.b16 %v291
      %v576 = vunpack.c.l.b16 %v292
      %v577 = vunpack.c.l.b16 %v293
      %v578 = vunpack.c.l.b16 %v294
      %v579 = vunpack.c.l.b16 %v295
      %v580 = vunpack.c.l.b16 %v296
      %v581 = vunpack.c.l.b16 %v297
      %v582 = vunpack.c.l.b16 %v298
      %v583 = vunpack.c.l.b16 %v299
      %v584 = vunpack.c.l.b16 %v300
      %v585 = vunpack.c.l.b16 %v301
      %v586 = vunpack.c.l.b16 %v302
      %v587 = vunpack.c.l.b16 %v303
      %v588 = vunpack.c.l.b16 %v304
      %v589 = vunpack.c.l.b16 %v305
      %v590 = vunpack.c.l.b16 %v306
      %v591 = vunpack.c.l.b16 %v307
      %v592 = vunpack.c.l.b16 %v308
      %v593 = vunpack.c.l.b16 %v309
      %v594 = vunpack.c.l.b16 %v310
      %v595 = vunpack.c.l.b16 %v311
      %v596 = vunpack.c.l.b16 %v312
      %v597 = vunpack.c.l.b16 %v313
      %v598 = vunpack.c.l.b16 %v314
      %v599 = vunpack.c.l.b16 %v315
      %v600 = vunpack.c.l.b16 %v316
      %v601 = vunpack.c.l.b16 %v317
      %v602 = vunpack.c.l.b16 %v318
      %v603 = vunpack.c.l.b16 %v319
      %v604 = vunpack.c.l.b16 %v320
      %v605 = vunpack.c.l.b16 %v321
      %v606 = vunpack.c.l.b16 %v322
      %v607 = vunpack.c.l.b16 %v323
      %v608 = vunpack.c.l.b16 %v324
      %v609 = vunpack.c.l.b16 %v325
      %v610 = vunpack.c.l.b16 %v326
      %v611 = vunpack.c.l.b16 %v327
      %v612 = vunpack.c.l.b16 %v328
      %v613 = vunpack.c.l.b16 %v329
      %v614 = vunpack.c.l.b16 %v330
      %v615 = vunpack.c.l.b16 %v331
      %v616 = vunpack.c.l.b16 %v332
      %v617 = vunpack.c.l.b16 %v333
      %v618 = vunpack.c.l.b16 %v334
      %v619 = vunpack.c.l.b16 %v335
      %v620 = vunpack.c.l.b16 %v336
      %v621 = vunpack.c.l.b16 %v337
      %v622 = vunpack.c.l.b16 %v338
      %v623 = vunpack.c.l.b16 %v339
      %v624 = vunpack.c.l.b16 %v340
      %v625 = vunpack.c.l.b16 %v341
      %v626 = vunpack.c.l.b16 %v342
      %v627 = vunpack.c.l.b16 %v343
      %v628 = vunpack.c.l.b16 %v344
      %v629 = vunpack.c.l.b16 %v345
      %v630 = vunpack.c.l.b16 %v346
      %v631 = vunpack.c.l.b16 %v347
      %v632 = vunpack.c.l.b16 %v348
      %v633 = vunpack.c.l.b16 %v349
      %v634 = vunpack.c.l.b16 %v350
      %v635 = vunpack.c.l.b16 %v351
      %v636 = vunpack.c.l.b16 %v352
      %v637 = vunpack.c.l.b16 %v353
      %v638 = vunpack.c.l.b16 %v354
      %v639 = vunpack.c.l.b16 %v355
      %v640 = vunpack.c.l.b16 %v356
      %v641 = vunpack.c.l.b16 %v357
      %v642 = vunpack.c.l.b16 %v358
      %v643 = vunpack.c.l.b16 %v359
      %v644 = vunpack.c.l.b16 %v360
      %v645 = vunpack.c.l.b16 %v361
      %v646 = vunpack.c.l.b16 %v362
      %v647 = vunpack.c.l.b16 %v363
      %v648 = vunpack.c.l.b16 %v364
      %v649 = vunpack.c.l.b16 %v365
      %v650 = vunpack.c.l.b16 %v366
      %v651 = vunpack.c.l.b16 %v367
      %v652 = vunpack.c.l.b16 %v368
      %v653 = vunpack.c.l.b16 %v369
      %v654 = vunpack.c.l.b16 %v370
      %v655 = vunpack.c.l.b16 %v371
      %v656 = vunpack.c.l.b16 %v372
      %v657 = vunpack.c.l.b16 %v373
      %v658 = vunpack.c.l.b16 %v374
      %v659 = vunpack.c.l.b16 %v375
      %v660 = vunpack.c.l.b16 %v376
      %v661 = vunpack.c.l.b16 %v377
      %v662 = vunpack.c.l.b16 %v378
      %v663 = vunpack.c.l.b16 %v379
      %v664 = vunpack.c.l.b16 %v380
      %v665 = vunpack.c.l.b16 %v381
      %v666 = vunpack.c.l.b16 %v382
      %v667 = vunpack.c.l.b16 %v383
      %v668 = vunpack.c.l.b16 %v384
      %v669 = vpack.c.b16 %v542, %v541
      %v670 = vpack.c.b16 %v544, %v543
      %v671 = vpack.c.b16 %v546, %v545
      %v672 = vpack.c.b16 %v548, %v547
      %v673 = vpack.c.b16 %v550, %v549
      %v674 = vpack.c.b16 %v552, %v551
      %v675 = vpack.c.b16 %v554, %v553
      %v676 = vpack.c.b16 %v556, %v555
      %v677 = vpack.c.b16 %v558, %v557
      %v678 = vpack.c.b16 %v560, %v559
      %v679 = vpack.c.b16 %v562, %v561
      %v680 = vpack.c.b16 %v564, %v563
      %v681 = vpack.c.b16 %v566, %v565
      %v682 = vpack.c.b16 %v568, %v567
      %v683 = vpack.c.b16 %v570, %v569
      %v684 = vpack.c.b16 %v572, %v571
      %v685 = vpack.c.b16 %v574, %v573
      %v686 = vpack.c.b16 %v576, %v575
      %v687 = vpack.c.b16 %v578, %v577
      %v688 = vpack.c.b16 %v580, %v579
      %v689 = vpack.c.b16 %v582, %v581
      %v690 = vpack.c.b16 %v584, %v583
      %v691 = vpack.c.b16 %v586, %v585
      %v692 = vpack.c.b16 %v588, %v587
      %v693 = vpack.c.b16 %v590, %v589
      %v694 = vpack.c.b16 %v592, %v591
      %v695 = vpack.c.b16 %v594, %v593
      %v696 = vpack.c.b16 %v596, %v595
      %v697 = vpack.c.b16 %v598, %v597
      %v698 = vpack.c.b16 %v600, %v599
      %v699 = vpack.c.b16 %v602, %v601
      %v700 = vpack.c.b16 %v604, %v603
      %v701 = vpack.c.b16 %v606, %v605
      %v702 = vpack.c.b16 %v608, %v607
      %v703 = vpack.c.b16 %v610, %v609
      %v704 = vpack.c.b16 %v612, %v611
      %v705 = vpack.c.b16 %v614, %v613
      %v706 = vpack.c.b16 %v616, %v615
      %v707 = vpack.c.b16 %v618, %v617
      %v708 = vpack.c.b16 %v620, %v619
      %v709 = vpack.c.b16 %v622, %v621
      %v710 = vpack.c.b16 %v624, %v623
      %v711 = vpack.c.b16 %v626, %v625
      %v712 = vpack.c.b16 %v628, %v627
      %v713 = vpack.c.b16 %v630, %v629
      %v714 = vpack.c.b16 %v632, %v631
      %v715 = vpack.c.b16 %v634, %v633
      %v716 = vpack.c.b16 %v636, %v635
      %v717 = vpack.c.b16 %v638, %v637
      %v718 = vpack.c.b16 %v640, %v639
      %v719 = vpack.c.b16 %v642, %v641
      %v720 = vpack.c.b16 %v644, %v643
      %v721 = vpack.c.b16 %v646, %v645
      %v722 = vpack.c.b16 %v648, %v647
      %v723 = vpack.c.b16 %v650, %v649
      %v724 = vpack.c.b16 %v652, %v651
      %v725 = vpack.c.b16 %v654, %v653
      %v726 = vpack.c.b16 %v656, %v655
      %v727 = vpack.c.b16 %v658, %v657
      %v728 = vpack.c.b16 %v660, %v659
      %v729 = vpack.c.b16 %v662, %v661
      %v730 = vpack.c.b16 %v664, %v663
      %v731 = vpack.c.b16 %v666, %v665
      %v732 = vpack.c.b16 %v668, %v667
      %797 = vmatprep.subr.bf16.mxu0 0
      %798 = vmatpush1.bf16.msra.mxu0 %v676
      %799 = vmatprep.subr.bf16.mxu0 0
      %800 = vmatpush1.bf16.msra.mxu0 %v675
      %801 = vmatprep.subr.bf16.mxu0 0
      %802 = vmatpush1.bf16.msra.mxu0 %v674
      %803 = vmatprep.subr.bf16.mxu0 0
      %804 = vmatpush1.bf16.msra.mxu0 %v673
      %805 = vmatprep.subr.bf16.mxu0 0
      %806 = vmatpush1.bf16.msra.mxu0 %v672
      %807 = vmatprep.subr.bf16.mxu0 0
      %808 = vmatpush1.bf16.msra.mxu0 %v671
      %809 = vmatprep.subr.bf16.mxu0 0
      %810 = vmatpush1.bf16.msra.mxu0 %v670
      %811 = vmatprep.subr.bf16.mxu0 0
      %812 = vmatpush1.bf16.msra.mxu0 %v669
      %813 = vmatprep.subr.bf16.mxu0 0
      %814 = vmatpush2.bf16.msra.mxu0 %v684
      %815 = vmatprep.subr.bf16.mxu0 0
      %816 = vmatpush2.bf16.msra.mxu0 %v683
      %817 = vmatprep.subr.bf16.mxu0 0
      %818 = vmatpush2.bf16.msra.mxu0 %v682
      %819 = vmatprep.subr.bf16.mxu0 0
      %820 = vmatpush2.bf16.msra.mxu0 %v681
      %821 = vmatprep.subr.bf16.mxu0 0
      %822 = vmatpush2.bf16.msra.mxu0 %v680
      %823 = vmatprep.subr.bf16.mxu0 0
      %824 = vmatpush2.bf16.msra.mxu0 %v679
      %825 = vmatprep.subr.bf16.mxu0 0
      %826 = vmatpush2.bf16.msra.mxu0 %v678
      %827 = vmatprep.subr.bf16.mxu0 0
      %828 = vmatpush2.bf16.msra.mxu0 %v677
      %829 = vmatprep.mubr.bf16.mxu0 %v398
      %830 = vmatmul.mubr.bf16.gmra.mxu0 %v397
      %v831 = vpop.f32.mrf.mxu0
      %v832 = vadd.f32 0.0, %v831
      %v833 = vpop.f32.mrf.mxu0
      %v834 = vpop.f32.mrf.mxu0
      %v835 = vpop.f32.mrf.mxu0
      %836 = vdwg.mxu0
      %837 = vmatprep.subr.bf16.mxu0 0
      %838 = vmatpush1.bf16.msra.mxu0 %v692
      %839 = vmatprep.subr.bf16.mxu0 0
      %840 = vmatpush1.bf16.msra.mxu0 %v691
      %841 = vmatprep.subr.bf16.mxu0 0
      %842 = vmatpush1.bf16.msra.mxu0 %v690
      %843 = vmatprep.subr.bf16.mxu0 0
      %844 = vmatpush1.bf16.msra.mxu0 %v689
      %845 = vmatprep.subr.bf16.mxu0 0
      %846 = vmatpush1.bf16.msra.mxu0 %v688
      %847 = vmatprep.subr.bf16.mxu0 0
      %848 = vmatpush1.bf16.msra.mxu0 %v687
      %849 = vmatprep.subr.bf16.mxu0 0
      %850 = vmatpush1.bf16.msra.mxu0 %v686
      %851 = vmatprep.subr.bf16.mxu0 0
      %852 = vmatpush1.bf16.msra.mxu0 %v685
      %853 = vmatprep.subr.bf16.mxu0 0
      %854 = vmatpush2.bf16.msra.mxu0 %v700
      %855 = vmatprep.subr.bf16.mxu0 0
      %856 = vmatpush2.bf16.msra.mxu0 %v699
      %857 = vmatprep.subr.bf16.mxu0 0
      %858 = vmatpush2.bf16.msra.mxu0 %v698
      %859 = vmatprep.subr.bf16.mxu0 0
      %860 = vmatpush2.bf16.msra.mxu0 %v697
      %861 = vmatprep.subr.bf16.mxu0 0
      %862 = vmatpush2.bf16.msra.mxu0 %v696
      %863 = vmatprep.subr.bf16.mxu0 0
      %864 = vmatpush2.bf16.msra.mxu0 %v695
      %865 = vmatprep.subr.bf16.mxu0 0
      %866 = vmatpush2.bf16.msra.mxu0 %v694
      %867 = vmatprep.subr.bf16.mxu0 0
      %868 = vmatpush2.bf16.msra.mxu0 %v693
      %869 = vmatprep.mubr.bf16.mxu0 %v400
      %870 = vmatmul.mubr.bf16.gmra.mxu0 %v399
      %v871 = vpop.f32.mrf.mxu0
      %v872 = vadd.f32 %v832, %v871
      %v873 = vpop.f32.mrf.mxu0
      %v874 = vpop.f32.mrf.mxu0
      %v875 = vpop.f32.mrf.mxu0
      %876 = vdwg.mxu0
      %877 = vmatprep.subr.bf16.mxu0 0
      %878 = vmatpush1.bf16.msra.mxu0 %v708
      %879 = vmatprep.subr.bf16.mxu0 0
      %880 = vmatpush1.bf16.msra.mxu0 %v707
      %881 = vmatprep.subr.bf16.mxu0 0
      %882 = vmatpush1.bf16.msra.mxu0 %v706
      %883 = vmatprep.subr.bf16.mxu0 0
      %884 = vmatpush1.bf16.msra.mxu0 %v705
      %885 = vmatprep.subr.bf16.mxu0 0
      %886 = vmatpush1.bf16.msra.mxu0 %v704
      %887 = vmatprep.subr.bf16.mxu0 0
      %888 = vmatpush1.bf16.msra.mxu0 %v703
      %889 = vmatprep.subr.bf16.mxu0 0
      %890 = vmatpush1.bf16.msra.mxu0 %v702
      %891 = vmatprep.subr.bf16.mxu0 0
      %892 = vmatpush1.bf16.msra.mxu0 %v701
      %893 = vmatprep.subr.bf16.mxu0 0
      %894 = vmatpush2.bf16.msra.mxu0 %v716
      %895 = vmatprep.subr.bf16.mxu0 0
      %896 = vmatpush2.bf16.msra.mxu0 %v715
      %897 = vmatprep.subr.bf16.mxu0 0
      %898 = vmatpush2.bf16.msra.mxu0 %v714
      %899 = vmatprep.subr.bf16.mxu0 0
      %900 = vmatpush2.bf16.msra.mxu0 %v713
      %901 = vmatprep.subr.bf16.mxu0 0
      %902 = vmatpush2.bf16.msra.mxu0 %v712
      %903 = vmatprep.subr.bf16.mxu0 0
      %904 = vmatpush2.bf16.msra.mxu0 %v711
      %905 = vmatprep.subr.bf16.mxu0 0
      %906 = vmatpush2.bf16.msra.mxu0 %v710
      %907 = vmatprep.subr.bf16.mxu0 0
      %908 = vmatpush2.bf16.msra.mxu0 %v709
      %909 = vmatprep.mubr.bf16.mxu0 %v402
      %910 = vmatmul.mubr.bf16.gmra.mxu0 %v401
      %v911 = vpop.f32.mrf.mxu0
      %v912 = vadd.f32 %v872, %v911
      %v913 = vpop.f32.mrf.mxu0
      %v914 = vpop.f32.mrf.mxu0
      %v915 = vpop.f32.mrf.mxu0
      %916 = vdwg.mxu0
      %917 = vmatprep.subr.bf16.mxu0 0
      %918 = vmatpush1.bf16.msra.mxu0 %v724
      %919 = vmatprep.subr.bf16.mxu0 0
      %920 = vmatpush1.bf16.msra.mxu0 %v723
      %921 = vmatprep.subr.bf16.mxu0 0
      %922 = vmatpush1.bf16.msra.mxu0 %v722
      %923 = vmatprep.subr.bf16.mxu0 0
      %924 = vmatpush1.bf16.msra.mxu0 %v721
      %925 = vmatprep.subr.bf16.mxu0 0
      %926 = vmatpush1.bf16.msra.mxu0 %v720
      %927 = vmatprep.subr.bf16.mxu0 0
      %928 = vmatpush1.bf16.msra.mxu0 %v719
      %929 = vmatprep.subr.bf16.mxu0 0
      %930 = vmatpush1.bf16.msra.mxu0 %v718
      %931 = vmatprep.subr.bf16.mxu0 0
      %932 = vmatpush1.bf16.msra.mxu0 %v717
      %933 = vmatprep.subr.bf16.mxu0 0
      %934 = vmatpush2.bf16.msra.mxu0 %v732
      %935 = vmatprep.subr.bf16.mxu0 0
      %936 = vmatpush2.bf16.msra.mxu0 %v731
      %937 = vmatprep.subr.bf16.mxu0 0
      %938 = vmatpush2.bf16.msra.mxu0 %v730
      %939 = vmatprep.subr.bf16.mxu0 0
      %940 = vmatpush2.bf16.msra.mxu0 %v729
      %941 = vmatprep.subr.bf16.mxu0 0
      %942 = vmatpush2.bf16.msra.mxu0 %v728
      %943 = vmatprep.subr.bf16.mxu0 0
      %944 = vmatpush2.bf16.msra.mxu0 %v727
      %945 = vmatprep.subr.bf16.mxu0 0
      %946 = vmatpush2.bf16.msra.mxu0 %v726
      %947 = vmatprep.subr.bf16.mxu0 0
      %948 = vmatpush2.bf16.msra.mxu0 %v725
      %949 = vmatprep.mubr.bf16.mxu0 %v404
      %950 = vmatmul.mubr.bf16.gmra.mxu0 %v403
      %v951 = vpop.f32.mrf.mxu0
      %v952 = vadd.f32 %v912, %v951
      %v953 = vpop.f32.mrf.mxu0
      %v954 = vpop.f32.mrf.mxu0
      %v955 = vpop.f32.mrf.mxu0
      %956 = vdwg.mxu0
      %v957 = vadd.f32 %v252, %v952
      %958 = vst [vmem:[#allocation2] sm:$0xff] %v957
      %p959 = scmp.eq.s32.totalorder %s20, 1
      // Predicated region
      $region41: #{patch_discriminator_forward.9} parent=35 // pred_check
        %p960 = pneg %p959
      $region42: #{patch_discriminator_forward.9} parent=35 // pred_check_branch
        %962 = sbr.rel (%p960) target = $region44
      $region43: #{patch_discriminator_forward.9} parent=35 // pred_region
        %v963 = vld [vmem:[#allocation2] sm:$0xff]
        %v964 = vld [vmem:[%s2] sm:$0x1]
        %v966 = vlaneseq
        %v967 = vshrl.u32 %v966, 7
        %v968 = vsub.s32 0, %v967
        %v969 = vrot.slane %v964, %v968
        %v971 = vmul.f32 %v963, %v969
        %v972 = vld [vmem:[%s3] sm:$0x1]
        %v974 = vlaneseq
        %v975 = vshrl.u32 %v974, 7
        %v976 = vsub.s32 0, %v975
        %v977 = vrot.slane %v972, %v976
        %v979 = vadd.f32 %v971, %v977
        %980 = vst [vmem:[%s245] sm:$0xff] %v979
      $region44: #{patch_discriminator_forward.9} parent=35 // pred_fallthru
        _
      %p981 = scmp.lt.s32.totalorder %s19, 0
      %s982 = scalar_select %p981, %s19, 0
      %s983 = smul.addr %s982, 8
      %s984 = scalar_lea.vmem %s4, %s983
      // Predicated region
      $region45: #{patch_discriminator_forward.9} parent=35 // pred_check
        %p985 = pneg %p141
      $region46: #{patch_discriminator_forward.9} parent=35 // pred_check_branch
        %987 = sbr.rel (%p985) target = $region48
      $region47: #{patch_discriminator_forward.9} parent=35 // pred_region
        _
      $region48: #{patch_discriminator_forward.9} parent=35 // pred_fallthru
        _
      // Predicated region
      $region49: #{patch_discriminator_forward.9} parent=35 // pred_check
        %p988 = pneg %p141
      $region50: #{patch_discriminator_forward.9} parent=35 // pred_check_branch
        %990 = sbr.rel (%p988) target = $region52
      $region51: #{patch_discriminator_forward.9} parent=35 // pred_region
        %p991 = scmp.lt.s32.totalorder %s19, 0
        %s992 = scalar_select %p991, %s19, 0
        %s993 = smul.addr %s992, 8
        %s994 = scalar_lea.vmem %s4, %s993
      $region52: #{patch_discriminator_forward.9} parent=35 // pred_fallthru
        _
    $region36: #{patch_discriminator_forward.9} parent=5 // pred_fallthru
      _
    %p995 = scmp.le.s32.totalorder 2, %s10
    // Predicated region
    $region53: #{patch_discriminator_forward.9} parent=5 // pred_check
      %p996 = pneg %p995
    $region54: #{patch_discriminator_forward.9} parent=5 // pred_check_branch
      %998 = sbr.rel (%p996) target = $region56
    $region55: #{patch_discriminator_forward.9} parent=5 // pred_region
      %s999 = ssub.s32 %s10, 2
    $region56: #{patch_discriminator_forward.9} parent=5 // pred_fallthru
      _
  $region6: #{patch_discriminator_forward.9} parent=0 // loop_footer
    %s14 = sadd.s32 1, %s10
  $region7: #{patch_discriminator_forward.9} parent=0 // loop_footer_branch
    %9 = sbr.rel target = $region3
  $region8: #{patch_discriminator_forward.9} parent=0 // loop_exit
    _

// kernel: patch_discriminator_forward.8
$region0: #{patch_discriminator_forward.8}
  #allocation0 [shape = 'u32[]', space=smem, size = 0x4, offset = 0x4, fixed_abs, tag = 'smem constant byte address 0x4 - core index']
  #allocation1 [shape = 'u32[144,128]{1,0:T(1,128)}', space=vmem, size = 0x12000, scoped, tag = 'internal scratch']
  #allocation2 [shape = 'f32[24,128]{1,0:T(8,128)}', space=vmem, size = 0x3000, scoped, tag = 'scratch operand']
  %s0 = inlined_call_operand.vmem [shape: bf16[24,1024], index: 0, kind: input, shape index: {}]
  %s1 = inlined_call_operand.vmem [shape: bf16[1024,128], index: 1, kind: input, shape index: {}]
  %s2 = inlined_call_operand.vmem [shape: f32[1,128], index: 2, kind: input, shape index: {}]
  %s3 = inlined_call_operand.vmem [shape: f32[1,128], index: 3, kind: input, shape index: {}]
  %s4 = inlined_call_operand.vmem [shape: f32[24,128], index: 4, kind: output, shape index: {}]
  %s5 = sld [smem:[#allocation0]]
  $region34: #{patch_discriminator_forward.8} parent=0
    _
  %s7 = ssub.s32 1, %s5
  %s8 = scalar_select 0, %s7, %s5
  // Predicated region
  $region2: #{patch_discriminator_forward.8} parent=0 // pred_check
    _
  $region3: #{patch_discriminator_forward.8} parent=0 // pred_check_branch
    %10 = sbr.rel (0) target = $region5
  $region4: #{patch_discriminator_forward.8} parent=0 // pred_region
    _
  $region5: #{patch_discriminator_forward.8} parent=0 // pred_fallthru
    _
  // Predicated region
  $region6: #{patch_discriminator_forward.8} parent=0 // pred_check
    _
  $region7: #{patch_discriminator_forward.8} parent=0 // pred_check_branch
    %12 = sbr.rel (0) target = $region9
  $region8: #{patch_discriminator_forward.8} parent=0 // pred_region
    _
  $region9: #{patch_discriminator_forward.8} parent=0 // pred_fallthru
    _
  // Predicated region
  $region10: #{patch_discriminator_forward.8} parent=0 // pred_check
    _
  $region11: #{patch_discriminator_forward.8} parent=0 // pred_check_branch
    %14 = sbr.rel (0) target = $region13
  $region12: #{patch_discriminator_forward.8} parent=0 // pred_region
    _
  $region13: #{patch_discriminator_forward.8} parent=0 // pred_fallthru
    _
  // Predicated region
  $region14: #{patch_discriminator_forward.8} parent=0 // pred_check
    _
  $region15: #{patch_discriminator_forward.8} parent=0 // pred_check_branch
    %16 = sbr.rel (0) target = $region17
  $region16: #{patch_discriminator_forward.8} parent=0 // pred_region
    _
  $region17: #{patch_discriminator_forward.8} parent=0 // pred_fallthru
    _
  %p18 = scmp.eq.s32.totalorder 0, 0
  // Predicated region
  $region18: #{patch_discriminator_forward.8} parent=0 // pred_check
    %p19 = pneg %p18
  $region19: #{patch_discriminator_forward.8} parent=0 // pred_check_branch
    %21 = sbr.rel (%p19) target = $region21
  $region20: #{patch_discriminator_forward.8} parent=0 // pred_region
    %22 = vst [vmem:[#allocation2] sm:$0xff] 0.0
    %23 = vst [vmem:[#allocation2 + $0x8] sm:$0xff] 0.0
    %24 = vst [vmem:[#allocation2 + $0x10] sm:$0xff] 0.0
  $region21: #{patch_discriminator_forward.8} parent=0 // pred_fallthru
    _
  %v25 = vld [vmem:[#allocation2] sm:$0xff]
  %v26 = vld [vmem:[#allocation2 + $0x8] sm:$0xff]
  %v27 = vld [vmem:[#allocation2 + $0x10] sm:$0xff]
  %v28 = vld [vmem:[%s0] sm:$0xff]
  %v29 = vld [vmem:[%s0 + $0x8] sm:$0xff]
  %v30 = vld [vmem:[%s0 + $0x10] sm:$0xff]
  %v31 = vld [vmem:[%s0 + $0x18] sm:$0xff]
  %v32 = vld [vmem:[%s0 + $0x20] sm:$0xff]
  %v33 = vld [vmem:[%s0 + $0x28] sm:$0xff]
  %v34 = vld [vmem:[%s0 + $0x30] sm:$0xff]
  %v35 = vld [vmem:[%s0 + $0x38] sm:$0xff]
  %v36 = vld [vmem:[%s0 + $0x40] sm:$0xff]
  %v37 = vld [vmem:[%s0 + $0x48] sm:$0xff]
  %v38 = vld [vmem:[%s0 + $0x50] sm:$0xff]
  %v39 = vld [vmem:[%s0 + $0x58] sm:$0xff]
  %v40 = vld [vmem:[%s1] sm:$0xf]
  %v41 = vld [vmem:[%s1 + $0x4] sm:$0xf]
  %v42 = vld [vmem:[%s1 + $0x8] sm:$0xf]
  %v43 = vld [vmem:[%s1 + $0xc] sm:$0xf]
  %v44 = vld [vmem:[%s1 + $0x10] sm:$0xf]
  %v45 = vld [vmem:[%s1 + $0x14] sm:$0xf]
  %v46 = vld [vmem:[%s1 + $0x18] sm:$0xf]
  %v47 = vld [vmem:[%s1 + $0x1c] sm:$0xf]
  %v48 = vld [vmem:[%s1 + $0x20] sm:$0xf]
  %v49 = vld [vmem:[%s1 + $0x24] sm:$0xf]
  %v50 = vld [vmem:[%s1 + $0x28] sm:$0xf]
  %v51 = vld [vmem:[%s1 + $0x2c] sm:$0xf]
  %v52 = vld [vmem:[%s1 + $0x30] sm:$0xf]
  %v53 = vld [vmem:[%s1 + $0x34] sm:$0xf]
  %v54 = vld [vmem:[%s1 + $0x38] sm:$0xf]
  %v55 = vld [vmem:[%s1 + $0x3c] sm:$0xf]
  %v56 = vld [vmem:[%s1 + $0x40] sm:$0xf]
  %v57 = vld [vmem:[%s1 + $0x44] sm:$0xf]
  %v58 = vld [vmem:[%s1 + $0x48] sm:$0xf]
  %v59 = vld [vmem:[%s1 + $0x4c] sm:$0xf]
  %v60 = vld [vmem:[%s1 + $0x50] sm:$0xf]
  %v61 = vld [vmem:[%s1 + $0x54] sm:$0xf]
  %v62 = vld [vmem:[%s1 + $0x58] sm:$0xf]
  %v63 = vld [vmem:[%s1 + $0x5c] sm:$0xf]
  %v64 = vld [vmem:[%s1 + $0x60] sm:$0xf]
  %v65 = vld [vmem:[%s1 + $0x64] sm:$0xf]
  %v66 = vld [vmem:[%s1 + $0x68] sm:$0xf]
  %v67 = vld [vmem:[%s1 + $0x6c] sm:$0xf]
  %v68 = vld [vmem:[%s1 + $0x70] sm:$0xf]
  %v69 = vld [vmem:[%s1 + $0x74] sm:$0xf]
  %v70 = vld [vmem:[%s1 + $0x78] sm:$0xf]
  %v71 = vld [vmem:[%s1 + $0x7c] sm:$0xf]
  %v72 = vld [vmem:[%s1 + $0x80] sm:$0xf]
  %v73 = vld [vmem:[%s1 + $0x84] sm:$0xf]
  %v74 = vld [vmem:[%s1 + $0x88] sm:$0xf]
  %v75 = vld [vmem:[%s1 + $0x8c] sm:$0xf]
  %v76 = vld [vmem:[%s1 + $0x90] sm:$0xf]
  %v77 = vld [vmem:[%s1 + $0x94] sm:$0xf]
  %v78 = vld [vmem:[%s1 + $0x98] sm:$0xf]
  %v79 = vld [vmem:[%s1 + $0x9c] sm:$0xf]
  %v80 = vld [vmem:[%s1 + $0xa0] sm:$0xf]
  %v81 = vld [vmem:[%s1 + $0xa4] sm:$0xf]
  %v82 = vld [vmem:[%s1 + $0xa8] sm:$0xf]
  %v83 = vld [vmem:[%s1 + $0xac] sm:$0xf]
  %v84 = vld [vmem:[%s1 + $0xb0] sm:$0xf]
  %v85 = vld [vmem:[%s1 + $0xb4] sm:$0xf]
  %v86 = vld [vmem:[%s1 + $0xb8] sm:$0xf]
  %v87 = vld [vmem:[%s1 + $0xbc] sm:$0xf]
  %v88 = vld [vmem:[%s1 + $0xc0] sm:$0xf]
  %v89 = vld [vmem:[%s1 + $0xc4] sm:$0xf]
  %v90 = vld [vmem:[%s1 + $0xc8] sm:$0xf]
  %v91 = vld [vmem:[%s1 + $0xcc] sm:$0xf]
  %v92 = vld [vmem:[%s1 + $0xd0] sm:$0xf]
  %v93 = vld [vmem:[%s1 + $0xd4] sm:$0xf]
  %v94 = vld [vmem:[%s1 + $0xd8] sm:$0xf]
  %v95 = vld [vmem:[%s1 + $0xdc] sm:$0xf]
  %v96 = vld [vmem:[%s1 + $0xe0] sm:$0xf]
  %v97 = vld [vmem:[%s1 + $0xe4] sm:$0xf]
  %v98 = vld [vmem:[%s1 + $0xe8] sm:$0xf]
  %v99 = vld [vmem:[%s1 + $0xec] sm:$0xf]
  %v100 = vld [vmem:[%s1 + $0xf0] sm:$0xf]
  %v101 = vld [vmem:[%s1 + $0xf4] sm:$0xf]
  %v102 = vld [vmem:[%s1 + $0xf8] sm:$0xf]
  %v103 = vld [vmem:[%s1 + $0xfc] sm:$0xf]
  %v104 = vld [vmem:[%s1 + $0x100] sm:$0xf]
  %v105 = vld [vmem:[%s1 + $0x104] sm:$0xf]
  %v106 = vld [vmem:[%s1 + $0x108] sm:$0xf]
  %v107 = vld [vmem:[%s1 + $0x10c] sm:$0xf]
  %v108 = vld [vmem:[%s1 + $0x110] sm:$0xf]
  %v109 = vld [vmem:[%s1 + $0x114] sm:$0xf]
  %v110 = vld [vmem:[%s1 + $0x118] sm:$0xf]
  %v111 = vld [vmem:[%s1 + $0x11c] sm:$0xf]
  %v112 = vld [vmem:[%s1 + $0x120] sm:$0xf]
  %v113 = vld [vmem:[%s1 + $0x124] sm:$0xf]
  %v114 = vld [vmem:[%s1 + $0x128] sm:$0xf]
  %v115 = vld [vmem:[%s1 + $0x12c] sm:$0xf]
  %v116 = vld [vmem:[%s1 + $0x130] sm:$0xf]
  %v117 = vld [vmem:[%s1 + $0x134] sm:$0xf]
  %v118 = vld [vmem:[%s1 + $0x138] sm:$0xf]
  %v119 = vld [vmem:[%s1 + $0x13c] sm:$0xf]
  %v120 = vld [vmem:[%s1 + $0x140] sm:$0xf]
  %v121 = vld [vmem:[%s1 + $0x144] sm:$0xf]
  %v122 = vld [vmem:[%s1 + $0x148] sm:$0xf]
  %v123 = vld [vmem:[%s1 + $0x14c] sm:$0xf]
  %v124 = vld [vmem:[%s1 + $0x150] sm:$0xf]
  %v125 = vld [vmem:[%s1 + $0x154] sm:$0xf]
  %v126 = vld [vmem:[%s1 + $0x158] sm:$0xf]
  %v127 = vld [vmem:[%s1 + $0x15c] sm:$0xf]
  %v128 = vld [vmem:[%s1 + $0x160] sm:$0xf]
  %v129 = vld [vmem:[%s1 + $0x164] sm:$0xf]
  %v130 = vld [vmem:[%s1 + $0x168] sm:$0xf]
  %v131 = vld [vmem:[%s1 + $0x16c] sm:$0xf]
  %v132 = vld [vmem:[%s1 + $0x170] sm:$0xf]
  %v133 = vld [vmem:[%s1 + $0x174] sm:$0xf]
  %v134 = vld [vmem:[%s1 + $0x178] sm:$0xf]
  %v135 = vld [vmem:[%s1 + $0x17c] sm:$0xf]
  %v136 = vld [vmem:[%s1 + $0x180] sm:$0xf]
  %v137 = vld [vmem:[%s1 + $0x184] sm:$0xf]
  %v138 = vld [vmem:[%s1 + $0x188] sm:$0xf]
  %v139 = vld [vmem:[%s1 + $0x18c] sm:$0xf]
  %v140 = vld [vmem:[%s1 + $0x190] sm:$0xf]
  %v141 = vld [vmem:[%s1 + $0x194] sm:$0xf]
  %v142 = vld [vmem:[%s1 + $0x198] sm:$0xf]
  %v143 = vld [vmem:[%s1 + $0x19c] sm:$0xf]
  %v144 = vld [vmem:[%s1 + $0x1a0] sm:$0xf]
  %v145 = vld [vmem:[%s1 + $0x1a4] sm:$0xf]
  %v146 = vld [vmem:[%s1 + $0x1a8] sm:$0xf]
  %v147 = vld [vmem:[%s1 + $0x1ac] sm:$0xf]
  %v148 = vld [vmem:[%s1 + $0x1b0] sm:$0xf]
  %v149 = vld [vmem:[%s1 + $0x1b4] sm:$0xf]
  %v150 = vld [vmem:[%s1 + $0x1b8] sm:$0xf]
  %v151 = vld [vmem:[%s1 + $0x1bc] sm:$0xf]
  %v152 = vld [vmem:[%s1 + $0x1c0] sm:$0xf]
  %v153 = vld [vmem:[%s1 + $0x1c4] sm:$0xf]
  %v154 = vld [vmem:[%s1 + $0x1c8] sm:$0xf]
  %v155 = vld [vmem:[%s1 + $0x1cc] sm:$0xf]
  %v156 = vld [vmem:[%s1 + $0x1d0] sm:$0xf]
  %v157 = vld [vmem:[%s1 + $0x1d4] sm:$0xf]
  %v158 = vld [vmem:[%s1 + $0x1d8] sm:$0xf]
  %v159 = vld [vmem:[%s1 + $0x1dc] sm:$0xf]
  %v160 = vld [vmem:[%s1 + $0x1e0] sm:$0xf]
  %v161 = vld [vmem:[%s1 + $0x1e4] sm:$0xf]
  %v162 = vld [vmem:[%s1 + $0x1e8] sm:$0xf]
  %v163 = vld [vmem:[%s1 + $0x1ec] sm:$0xf]
  %v164 = vld [vmem:[%s1 + $0x1f0] sm:$0xf]
  %v165 = vld [vmem:[%s1 + $0x1f4] sm:$0xf]
  %v166 = vld [vmem:[%s1 + $0x1f8] sm:$0xf]
  %v167 = vld [vmem:[%s1 + $0x1fc] sm:$0xf]
  %v180 = vunpack.c.l.b16 %v28
  %v181 = vunpack.c.h.b16 %v28
  %v182 = vunpack.c.l.b16 %v29
  %v183 = vunpack.c.h.b16 %v29
  %v184 = vunpack.c.l.b16 %v30
  %v185 = vunpack.c.h.b16 %v30
  %v186 = vunpack.c.l.b16 %v31
  %v187 = vunpack.c.h.b16 %v31
  %v188 = vunpack.c.l.b16 %v32
  %v189 = vunpack.c.h.b16 %v32
  %v190 = vunpack.c.l.b16 %v33
  %v191 = vunpack.c.h.b16 %v33
  %v192 = vunpack.c.l.b16 %v34
  %v193 = vunpack.c.h.b16 %v34
  %v194 = vunpack.c.l.b16 %v35
  %v195 = vunpack.c.h.b16 %v35
  %v196 = vunpack.c.l.b16 %v36
  %v197 = vunpack.c.h.b16 %v36
  %v198 = vunpack.c.l.b16 %v37
  %v199 = vunpack.c.h.b16 %v37
  %v200 = vunpack.c.l.b16 %v38
  %v201 = vunpack.c.h.b16 %v38
  %v202 = vunpack.c.l.b16 %v39
  %v203 = vunpack.c.h.b16 %v39
  %v204 = vpack.c.b16 %v188, %v180
  %v205 = vpack.c.b16 %v189, %v181
  %v206 = vpack.c.b16 %v190, %v182
  %v207 = vpack.c.b16 %v191, %v183
  %v208 = vpack.c.b16 %v192, %v184
  %v209 = vpack.c.b16 %v193, %v185
  %v210 = vpack.c.b16 %v194, %v186
  %v211 = vpack.c.b16 %v195, %v187
  %v212 = vpack.c.b16 %v196, %v196
  %v213 = vpack.c.b16 %v197, %v197
  %v214 = vpack.c.b16 %v198, %v198
  %v215 = vpack.c.b16 %v199, %v199
  %v216 = vpack.c.b16 %v200, %v200
  %v217 = vpack.c.b16 %v201, %v201
  %v218 = vpack.c.b16 %v202, %v202
  %v219 = vpack.c.b16 %v203, %v203
  %v364 = vunpack.c.l.b16 %v40
  %v365 = vunpack.c.l.b16 %v41
  %v366 = vunpack.c.l.b16 %v42
  %v367 = vunpack.c.l.b16 %v43
  %v368 = vunpack.c.l.b16 %v44
  %v369 = vunpack.c.l.b16 %v45
  %v370 = vunpack.c.l.b16 %v46
  %v371 = vunpack.c.l.b16 %v47
  %v372 = vunpack.c.l.b16 %v48
  %v373 = vunpack.c.l.b16 %v49
  %v374 = vunpack.c.l.b16 %v50
  %v375 = vunpack.c.l.b16 %v51
  %v376 = vunpack.c.l.b16 %v52
  %v377 = vunpack.c.l.b16 %v53
  %v378 = vunpack.c.l.b16 %v54
  %v379 = vunpack.c.l.b16 %v55
  %v380 = vunpack.c.l.b16 %v56
  %v381 = vunpack.c.l.b16 %v57
  %v382 = vunpack.c.l.b16 %v58
  %v383 = vunpack.c.l.b16 %v59
  %v384 = vunpack.c.l.b16 %v60
  %v385 = vunpack.c.l.b16 %v61
  %v386 = vunpack.c.l.b16 %v62
  %v387 = vunpack.c.l.b16 %v63
  %v388 = vunpack.c.l.b16 %v64
  %v389 = vunpack.c.l.b16 %v65
  %v390 = vunpack.c.l.b16 %v66
  %v391 = vunpack.c.l.b16 %v67
  %v392 = vunpack.c.l.b16 %v68
  %v393 = vunpack.c.l.b16 %v69
  %v394 = vunpack.c.l.b16 %v70
  %v395 = vunpack.c.l.b16 %v71
  %v396 = vunpack.c.l.b16 %v72
  %v397 = vunpack.c.l.b16 %v73
  %v398 = vunpack.c.l.b16 %v74
  %v399 = vunpack.c.l.b16 %v75
  %v400 = vunpack.c.l.b16 %v76
  %v401 = vunpack.c.l.b16 %v77
  %v402 = vunpack.c.l.b16 %v78
  %v403 = vunpack.c.l.b16 %v79
  %v404 = vunpack.c.l.b16 %v80
  %v405 = vunpack.c.l.b16 %v81
  %v406 = vunpack.c.l.b16 %v82
  %v407 = vunpack.c.l.b16 %v83
  %v408 = vunpack.c.l.b16 %v84
  %v409 = vunpack.c.l.b16 %v85
  %v410 = vunpack.c.l.b16 %v86
  %v411 = vunpack.c.l.b16 %v87
  %v412 = vunpack.c.l.b16 %v88
  %v413 = vunpack.c.l.b16 %v89
  %v414 = vunpack.c.l.b16 %v90
  %v415 = vunpack.c.l.b16 %v91
  %v416 = vunpack.c.l.b16 %v92
  %v417 = vunpack.c.l.b16 %v93
  %v418 = vunpack.c.l.b16 %v94
  %v419 = vunpack.c.l.b16 %v95
  %v420 = vunpack.c.l.b16 %v96
  %v421 = vunpack.c.l.b16 %v97
  %v422 = vunpack.c.l.b16 %v98
  %v423 = vunpack.c.l.b16 %v99
  %v424 = vunpack.c.l.b16 %v100
  %v425 = vunpack.c.l.b16 %v101
  %v426 = vunpack.c.l.b16 %v102
  %v427 = vunpack.c.l.b16 %v103
  %v428 = vunpack.c.l.b16 %v104
  %v429 = vunpack.c.l.b16 %v105
  %v430 = vunpack.c.l.b16 %v106
  %v431 = vunpack.c.l.b16 %v107
  %v432 = vunpack.c.l.b16 %v108
  %v433 = vunpack.c.l.b16 %v109
  %v434 = vunpack.c.l.b16 %v110
  %v435 = vunpack.c.l.b16 %v111
  %v436 = vunpack.c.l.b16 %v112
  %v437 = vunpack.c.l.b16 %v113
  %v438 = vunpack.c.l.b16 %v114
  %v439 = vunpack.c.l.b16 %v115
  %v440 = vunpack.c.l.b16 %v116
  %v441 = vunpack.c.l.b16 %v117
  %v442 = vunpack.c.l.b16 %v118
  %v443 = vunpack.c.l.b16 %v119
  %v444 = vunpack.c.l.b16 %v120
  %v445 = vunpack.c.l.b16 %v121
  %v446 = vunpack.c.l.b16 %v122
  %v447 = vunpack.c.l.b16 %v123
  %v448 = vunpack.c.l.b16 %v124
  %v449 = vunpack.c.l.b16 %v125
  %v450 = vunpack.c.l.b16 %v126
  %v451 = vunpack.c.l.b16 %v127
  %v452 = vunpack.c.l.b16 %v128
  %v453 = vunpack.c.l.b16 %v129
  %v454 = vunpack.c.l.b16 %v130
  %v455 = vunpack.c.l.b16 %v131
  %v456 = vunpack.c.l.b16 %v132
  %v457 = vunpack.c.l.b16 %v133
  %v458 = vunpack.c.l.b16 %v134
  %v459 = vunpack.c.l.b16 %v135
  %v460 = vunpack.c.l.b16 %v136
  %v461 = vunpack.c.l.b16 %v137
  %v462 = vunpack.c.l.b16 %v138
  %v463 = vunpack.c.l.b16 %v139
  %v464 = vunpack.c.l.b16 %v140
  %v465 = vunpack.c.l.b16 %v141
  %v466 = vunpack.c.l.b16 %v142
  %v467 = vunpack.c.l.b16 %v143
  %v468 = vunpack.c.l.b16 %v144
  %v469 = vunpack.c.l.b16 %v145
  %v470 = vunpack.c.l.b16 %v146
  %v471 = vunpack.c.l.b16 %v147
  %v472 = vunpack.c.l.b16 %v148
  %v473 = vunpack.c.l.b16 %v149
  %v474 = vunpack.c.l.b16 %v150
  %v475 = vunpack.c.l.b16 %v151
  %v476 = vunpack.c.l.b16 %v152
  %v477 = vunpack.c.l.b16 %v153
  %v478 = vunpack.c.l.b16 %v154
  %v479 = vunpack.c.l.b16 %v155
  %v480 = vunpack.c.l.b16 %v156
  %v481 = vunpack.c.l.b16 %v157
  %v482 = vunpack.c.l.b16 %v158
  %v483 = vunpack.c.l.b16 %v159
  %v484 = vunpack.c.l.b16 %v160
  %v485 = vunpack.c.l.b16 %v161
  %v486 = vunpack.c.l.b16 %v162
  %v487 = vunpack.c.l.b16 %v163
  %v488 = vunpack.c.l.b16 %v164
  %v489 = vunpack.c.l.b16 %v165
  %v490 = vunpack.c.l.b16 %v166
  %v491 = vunpack.c.l.b16 %v167
  %v492 = vpack.c.b16 %v365, %v364
  %v493 = vpack.c.b16 %v367, %v366
  %v494 = vpack.c.b16 %v369, %v368
  %v495 = vpack.c.b16 %v371, %v370
  %v496 = vpack.c.b16 %v373, %v372
  %v497 = vpack.c.b16 %v375, %v374
  %v498 = vpack.c.b16 %v377, %v376
  %v499 = vpack.c.b16 %v379, %v378
  %v500 = vpack.c.b16 %v381, %v380
  %v501 = vpack.c.b16 %v383, %v382
  %v502 = vpack.c.b16 %v385, %v384
  %v503 = vpack.c.b16 %v387, %v386
  %v504 = vpack.c.b16 %v389, %v388
  %v505 = vpack.c.b16 %v391, %v390
  %v506 = vpack.c.b16 %v393, %v392
  %v507 = vpack.c.b16 %v395, %v394
  %v508 = vpack.c.b16 %v397, %v396
  %v509 = vpack.c.b16 %v399, %v398
  %v510 = vpack.c.b16 %v401, %v400
  %v511 = vpack.c.b16 %v403, %v402
  %v512 = vpack.c.b16 %v405, %v404
  %v513 = vpack.c.b16 %v407, %v406
  %v514 = vpack.c.b16 %v409, %v408
  %v515 = vpack.c.b16 %v411, %v410
  %v516 = vpack.c.b16 %v413, %v412
  %v517 = vpack.c.b16 %v415, %v414
  %v518 = vpack.c.b16 %v417, %v416
  %v519 = vpack.c.b16 %v419, %v418
  %v520 = vpack.c.b16 %v421, %v420
  %v521 = vpack.c.b16 %v423, %v422
  %v522 = vpack.c.b16 %v425, %v424
  %v523 = vpack.c.b16 %v427, %v426
  %v524 = vpack.c.b16 %v429, %v428
  %v525 = vpack.c.b16 %v431, %v430
  %v526 = vpack.c.b16 %v433, %v432
  %v527 = vpack.c.b16 %v435, %v434
  %v528 = vpack.c.b16 %v437, %v436
  %v529 = vpack.c.b16 %v439, %v438
  %v530 = vpack.c.b16 %v441, %v440
  %v531 = vpack.c.b16 %v443, %v442
  %v532 = vpack.c.b16 %v445, %v444
  %v533 = vpack.c.b16 %v447, %v446
  %v534 = vpack.c.b16 %v449, %v448
  %v535 = vpack.c.b16 %v451, %v450
  %v536 = vpack.c.b16 %v453, %v452
  %v537 = vpack.c.b16 %v455, %v454
  %v538 = vpack.c.b16 %v457, %v456
  %v539 = vpack.c.b16 %v459, %v458
  %v540 = vpack.c.b16 %v461, %v460
  %v541 = vpack.c.b16 %v463, %v462
  %v542 = vpack.c.b16 %v465, %v464
  %v543 = vpack.c.b16 %v467, %v466
  %v544 = vpack.c.b16 %v469, %v468
  %v545 = vpack.c.b16 %v471, %v470
  %v546 = vpack.c.b16 %v473, %v472
  %v547 = vpack.c.b16 %v475, %v474
  %v548 = vpack.c.b16 %v477, %v476
  %v549 = vpack.c.b16 %v479, %v478
  %v550 = vpack.c.b16 %v481, %v480
  %v551 = vpack.c.b16 %v483, %v482
  %v552 = vpack.c.b16 %v485, %v484
  %v553 = vpack.c.b16 %v487, %v486
  %v554 = vpack.c.b16 %v489, %v488
  %v555 = vpack.c.b16 %v491, %v490
  %620 = vmatprep.subr.bf16.mxu0 0
  %621 = vmatpush1.bf16.msra.mxu0 %v499
  %622 = vmatprep.subr.bf16.mxu0 0
  %623 = vmatpush1.bf16.msra.mxu0 %v498
  %624 = vmatprep.subr.bf16.mxu0 0
  %625 = vmatpush1.bf16.msra.mxu0 %v497
  %626 = vmatprep.subr.bf16.mxu0 0
  %627 = vmatpush1.bf16.msra.mxu0 %v496
  %628 = vmatprep.subr.bf16.mxu0 0
  %629 = vmatpush1.bf16.msra.mxu0 %v495
  %630 = vmatprep.subr.bf16.mxu0 0
  %631 = vmatpush1.bf16.msra.mxu0 %v494
  %632 = vmatprep.subr.bf16.mxu0 0
  %633 = vmatpush1.bf16.msra.mxu0 %v493
  %634 = vmatprep.subr.bf16.mxu0 0
  %635 = vmatpush1.bf16.msra.mxu0 %v492
  %636 = vmatprep.subr.bf16.mxu0 0
  %637 = vmatpush2.bf16.msra.mxu0 %v507
  %638 = vmatprep.subr.bf16.mxu0 0
  %639 = vmatpush2.bf16.msra.mxu0 %v506
  %640 = vmatprep.subr.bf16.mxu0 0
  %641 = vmatpush2.bf16.msra.mxu0 %v505
  %642 = vmatprep.subr.bf16.mxu0 0
  %643 = vmatpush2.bf16.msra.mxu0 %v504
  %644 = vmatprep.subr.bf16.mxu0 0
  %645 = vmatpush2.bf16.msra.mxu0 %v503
  %646 = vmatprep.subr.bf16.mxu0 0
  %647 = vmatpush2.bf16.msra.mxu0 %v502
  %648 = vmatprep.subr.bf16.mxu0 0
  %649 = vmatpush2.bf16.msra.mxu0 %v501
  %650 = vmatprep.subr.bf16.mxu0 0
  %651 = vmatpush2.bf16.msra.mxu0 %v500
  %652 = vmatprep.mubr.bf16.mxu0 %v205
  %653 = vmatmul.mubr.bf16.gmra.mxu0 %v204
  %v654 = vpop.f32.mrf.mxu0
  %v655 = vadd.f32 0.0, %v654
  %v656 = vpop.f32.mrf.mxu0
  %v657 = vpop.f32.mrf.mxu0
  %v658 = vadd.f32 0.0, %v657
  %v659 = vpop.f32.mrf.mxu0
  %660 = vmatprep.mubr.bf16.mxu0 %v213
  %661 = vmatmul.mubr.bf16.gmra.mxu0 %v212
  %v662 = vpop.f32.mrf.mxu0
  %v663 = vadd.f32 0.0, %v662
  %v664 = vpop.f32.mrf.mxu0
  %v665 = vpop.f32.mrf.mxu0
  %v666 = vpop.f32.mrf.mxu0
  %667 = vdwg.mxu0
  %668 = vmatprep.subr.bf16.mxu0 0
  %669 = vmatpush1.bf16.msra.mxu0 %v515
  %670 = vmatprep.subr.bf16.mxu0 0
  %671 = vmatpush1.bf16.msra.mxu0 %v514
  %672 = vmatprep.subr.bf16.mxu0 0
  %673 = vmatpush1.bf16.msra.mxu0 %v513
  %674 = vmatprep.subr.bf16.mxu0 0
  %675 = vmatpush1.bf16.msra.mxu0 %v512
  %676 = vmatprep.subr.bf16.mxu0 0
  %677 = vmatpush1.bf16.msra.mxu0 %v511
  %678 = vmatprep.subr.bf16.mxu0 0
  %679 = vmatpush1.bf16.msra.mxu0 %v510
  %680 = vmatprep.subr.bf16.mxu0 0
  %681 = vmatpush1.bf16.msra.mxu0 %v509
  %682 = vmatprep.subr.bf16.mxu0 0
  %683 = vmatpush1.bf16.msra.mxu0 %v508
  %684 = vmatprep.subr.bf16.mxu0 0
  %685 = vmatpush2.bf16.msra.mxu0 %v523
  %686 = vmatprep.subr.bf16.mxu0 0
  %687 = vmatpush2.bf16.msra.mxu0 %v522
  %688 = vmatprep.subr.bf16.mxu0 0
  %689 = vmatpush2.bf16.msra.mxu0 %v521
  %690 = vmatprep.subr.bf16.mxu0 0
  %691 = vmatpush2.bf16.msra.mxu0 %v520
  %692 = vmatprep.subr.bf16.mxu0 0
  %693 = vmatpush2.bf16.msra.mxu0 %v519
  %694 = vmatprep.subr.bf16.mxu0 0
  %695 = vmatpush2.bf16.msra.mxu0 %v518
  %696 = vmatprep.subr.bf16.mxu0 0
  %697 = vmatpush2.bf16.msra.mxu0 %v517
  %698 = vmatprep.subr.bf16.mxu0 0
  %699 = vmatpush2.bf16.msra.mxu0 %v516
  %700 = vmatprep.mubr.bf16.mxu0 %v207
  %701 = vmatmul.mubr.bf16.gmra.mxu0 %v206
  %v702 = vpop.f32.mrf.mxu0
  %v703 = vadd.f32 %v655, %v702
  %v704 = vpop.f32.mrf.mxu0
  %v705 = vpop.f32.mrf.mxu0
  %v706 = vadd.f32 %v658, %v705
  %v707 = vpop.f32.mrf.mxu0
  %708 = vmatprep.mubr.bf16.mxu0 %v215
  %709 = vmatmul.mubr.bf16.gmra.mxu0 %v214
  %v710 = vpop.f32.mrf.mxu0
  %v711 = vadd.f32 %v663, %v710
  %v712 = vpop.f32.mrf.mxu0
  %v713 = vpop.f32.mrf.mxu0
  %v714 = vpop.f32.mrf.mxu0
  %715 = vdwg.mxu0
  %716 = vmatprep.subr.bf16.mxu0 0
  %717 = vmatpush1.bf16.msra.mxu0 %v531
  %718 = vmatprep.subr.bf16.mxu0 0
  %719 = vmatpush1.bf16.msra.mxu0 %v530
  %720 = vmatprep.subr.bf16.mxu0 0
  %721 = vmatpush1.bf16.msra.mxu0 %v529
  %722 = vmatprep.subr.bf16.mxu0 0
  %723 = vmatpush1.bf16.msra.mxu0 %v528
  %724 = vmatprep.subr.bf16.mxu0 0
  %725 = vmatpush1.bf16.msra.mxu0 %v527
  %726 = vmatprep.subr.bf16.mxu0 0
  %727 = vmatpush1.bf16.msra.mxu0 %v526
  %728 = vmatprep.subr.bf16.mxu0 0
  %729 = vmatpush1.bf16.msra.mxu0 %v525
  %730 = vmatprep.subr.bf16.mxu0 0
  %731 = vmatpush1.bf16.msra.mxu0 %v524
  %732 = vmatprep.subr.bf16.mxu0 0
  %733 = vmatpush2.bf16.msra.mxu0 %v539
  %734 = vmatprep.subr.bf16.mxu0 0
  %735 = vmatpush2.bf16.msra.mxu0 %v538
  %736 = vmatprep.subr.bf16.mxu0 0
  %737 = vmatpush2.bf16.msra.mxu0 %v537
  %738 = vmatprep.subr.bf16.mxu0 0
  %739 = vmatpush2.bf16.msra.mxu0 %v536
  %740 = vmatprep.subr.bf16.mxu0 0
  %741 = vmatpush2.bf16.msra.mxu0 %v535
  %742 = vmatprep.subr.bf16.mxu0 0
  %743 = vmatpush2.bf16.msra.mxu0 %v534
  %744 = vmatprep.subr.bf16.mxu0 0
  %745 = vmatpush2.bf16.msra.mxu0 %v533
  %746 = vmatprep.subr.bf16.mxu0 0
  %747 = vmatpush2.bf16.msra.mxu0 %v532
  %748 = vmatprep.mubr.bf16.mxu0 %v209
  %749 = vmatmul.mubr.bf16.gmra.mxu0 %v208
  %v750 = vpop.f32.mrf.mxu0
  %v751 = vadd.f32 %v703, %v750
  %v752 = vpop.f32.mrf.mxu0
  %v753 = vpop.f32.mrf.mxu0
  %v754 = vadd.f32 %v706, %v753
  %v755 = vpop.f32.mrf.mxu0
  %756 = vmatprep.mubr.bf16.mxu0 %v217
  %757 = vmatmul.mubr.bf16.gmra.mxu0 %v216
  %v758 = vpop.f32.mrf.mxu0
  %v759 = vadd.f32 %v711, %v758
  %v760 = vpop.f32.mrf.mxu0
  %v761 = vpop.f32.mrf.mxu0
  %v762 = vpop.f32.mrf.mxu0
  %763 = vdwg.mxu0
  %764 = vmatprep.subr.bf16.mxu0 0
  %765 = vmatpush1.bf16.msra.mxu0 %v547
  %766 = vmatprep.subr.bf16.mxu0 0
  %767 = vmatpush1.bf16.msra.mxu0 %v546
  %768 = vmatprep.subr.bf16.mxu0 0
  %769 = vmatpush1.bf16.msra.mxu0 %v545
  %770 = vmatprep.subr.bf16.mxu0 0
  %771 = vmatpush1.bf16.msra.mxu0 %v544
  %772 = vmatprep.subr.bf16.mxu0 0
  %773 = vmatpush1.bf16.msra.mxu0 %v543
  %774 = vmatprep.subr.bf16.mxu0 0
  %775 = vmatpush1.bf16.msra.mxu0 %v542
  %776 = vmatprep.subr.bf16.mxu0 0
  %777 = vmatpush1.bf16.msra.mxu0 %v541
  %778 = vmatprep.subr.bf16.mxu0 0
  %779 = vmatpush1.bf16.msra.mxu0 %v540
  %780 = vmatprep.subr.bf16.mxu0 0
  %781 = vmatpush2.bf16.msra.mxu0 %v555
  %782 = vmatprep.subr.bf16.mxu0 0
  %783 = vmatpush2.bf16.msra.mxu0 %v554
  %784 = vmatprep.subr.bf16.mxu0 0
  %785 = vmatpush2.bf16.msra.mxu0 %v553
  %786 = vmatprep.subr.bf16.mxu0 0
  %787 = vmatpush2.bf16.msra.mxu0 %v552
  %788 = vmatprep.subr.bf16.mxu0 0
  %789 = vmatpush2.bf16.msra.mxu0 %v551
  %790 = vmatprep.subr.bf16.mxu0 0
  %791 = vmatpush2.bf16.msra.mxu0 %v550
  %792 = vmatprep.subr.bf16.mxu0 0
  %793 = vmatpush2.bf16.msra.mxu0 %v549
  %794 = vmatprep.subr.bf16.mxu0 0
  %795 = vmatpush2.bf16.msra.mxu0 %v548
  %796 = vmatprep.mubr.bf16.mxu0 %v211
  %797 = vmatmul.mubr.bf16.gmra.mxu0 %v210
  %v798 = vpop.f32.mrf.mxu0
  %v799 = vadd.f32 %v751, %v798
  %v800 = vpop.f32.mrf.mxu0
  %v801 = vpop.f32.mrf.mxu0
  %v802 = vadd.f32 %v754, %v801
  %v803 = vpop.f32.mrf.mxu0
  %804 = vmatprep.mubr.bf16.mxu0 %v219
  %805 = vmatmul.mubr.bf16.gmra.mxu0 %v218
  %v806 = vpop.f32.mrf.mxu0
  %v807 = vadd.f32 %v759, %v806
  %v808 = vpop.f32.mrf.mxu0
  %v809 = vpop.f32.mrf.mxu0
  %v810 = vpop.f32.mrf.mxu0
  %811 = vdwg.mxu0
  %v812 = vadd.f32 %v25, %v799
  %v813 = vadd.f32 %v26, %v802
  %v814 = vadd.f32 %v27, %v807
  %815 = vst [vmem:[#allocation2] sm:$0xff] %v812
  %816 = vst [vmem:[#allocation2 + $0x8] sm:$0xff] %v813
  %817 = vst [vmem:[#allocation2 + $0x10] sm:$0xff] %v814
  // Predicated region
  $region22: #{patch_discriminator_forward.8} parent=0 // pred_check
    %p818 = pneg %p18
  $region23: #{patch_discriminator_forward.8} parent=0 // pred_check_branch
    %820 = sbr.rel (%p818) target = $region25
  $region24: #{patch_discriminator_forward.8} parent=0 // pred_region
    %v821 = vld [vmem:[#allocation2] sm:$0xff]
    %v822 = vld [vmem:[#allocation2 + $0x8] sm:$0xff]
    %v823 = vld [vmem:[#allocation2 + $0x10] sm:$0xff]
    %v824 = vld [vmem:[%s2] sm:$0x1]
    %v826 = vlaneseq
    %v827 = vshrl.u32 %v826, 7
    %v828 = vsub.s32 0, %v827
    %v829 = vrot.slane %v824, %v828
    %v831 = vmul.f32 %v821, %v829
    %v832 = vmul.f32 %v822, %v829
    %v833 = vmul.f32 %v823, %v829
    %v834 = vld [vmem:[%s3] sm:$0x1]
    %v836 = vlaneseq
    %v837 = vshrl.u32 %v836, 7
    %v838 = vsub.s32 0, %v837
    %v839 = vrot.slane %v834, %v838
    %v841 = vadd.f32 %v831, %v839
    %v842 = vadd.f32 %v832, %v839
    %v843 = vadd.f32 %v833, %v839
    %vm844 = vcmp.gt.f32.partialorder %v841, 0.0
    %vm845 = vcmp.gt.f32.partialorder %v842, 0.0
    %vm846 = vcmp.gt.f32.partialorder %v843, 0.0
    %v847 = vmul.f32 %v841, 0.2
    %v848 = vmul.f32 %v842, 0.2
    %v849 = vmul.f32 %v843, 0.2
    %v850 = vsel %vm844, %v841, %v847
    %v851 = vsel %vm845, %v842, %v848
    %v852 = vsel %vm846, %v843, %v849
    %853 = vst [vmem:[%s4] sm:$0xff] %v850
    %854 = vst [vmem:[%s4 + $0x8] sm:$0xff] %v851
    %855 = vst [vmem:[%s4 + $0x10] sm:$0xff] %v852
  $region25: #{patch_discriminator_forward.8} parent=0 // pred_fallthru
    _
  // Predicated region
  $region26: #{patch_discriminator_forward.8} parent=0 // pred_check
    _
  $region27: #{patch_discriminator_forward.8} parent=0 // pred_check_branch
    %857 = sbr.rel (0) target = $region29
  $region28: #{patch_discriminator_forward.8} parent=0 // pred_region
    _
  $region29: #{patch_discriminator_forward.8} parent=0 // pred_fallthru
    _
  // Predicated region
  $region30: #{patch_discriminator_forward.8} parent=0 // pred_check
    _
  $region31: #{patch_discriminator_forward.8} parent=0 // pred_check_branch
    %859 = sbr.rel (0) target = $region33
  $region32: #{patch_discriminator_forward.8} parent=0 // pred_region
    _
  $region33: #{patch_discriminator_forward.8} parent=0 // pred_fallthru
    _

</llo_original>
